<compile_context>
chip_gen: v5e
topology: v5e:2x2
jax: 0.10.0
libtpu: 0.0.40
codegen_flags: <defaults>
</compile_context>

<pallas_src>
import jax
import jax.numpy as jnp
from jax.experimental import pallas as pl
from jax.experimental.pallas import tpu as pltpu


# Below this many bytes per input, a fused XLA elementwise is strictly
# cheaper than the pallas_call fixed cost.
_SMALL_BYPASS_BYTES = 1 << 20          # 1 MiB
# Per-block VMEM byte budget (per array). 3 arrays x 2 buffers x 4 MiB = 24 MiB.
_MAX_BLOCK_BYTES = 4 << 20             # 4 MiB
# Scoped VMEM limit: covers the 24 MiB worst case on v5e's 16 MiB default,
# stays under v7x's 64 MiB physical VMEM.
_VMEM_LIMIT_BYTES = 40 << 20
# Target number of pipelined grid steps for mid-size inputs.
_MIN_GRID_STEPS = 4


def _cdiv(a: int, b: int) -> int:
    return -(-a // b)


def _my_add_kernel(a_ref, b_ref, o_ref):
    # Pure VPU elementwise: out = 2*a + b. (HBM-bandwidth bound; no point in
    # micro-optimizing the expression.)
    o_ref[...] = a_ref[...] * 2 + b_ref[...]


def _choose_tile_rows(rows: int, cols: int, itemsize: int) -> int:
    """Row-block size: multiple of 8, <= _MAX_BLOCK_BYTES, >= ~4 grid steps."""
    if rows <= 8:
        # Full-dim block (legal exception to the (8,128) rule).
        return rows
    max_rows = max(8, (_MAX_BLOCK_BYTES // (cols * itemsize)) // 8 * 8)
    # Aim for at least _MIN_GRID_STEPS blocks so the pipeline can overlap
    # DMA with compute (and v7x can shard across its 2 TCs).
    target = _cdiv(rows, _MIN_GRID_STEPS)
    target = max(8, _cdiv(target, 8) * 8)
    return min(max_rows, target)


def _my_add_pallas_2d(a2: jax.Array, b2: jax.Array) -> jax.Array:
    rows, cols = a2.shape
    itemsize = jnp.dtype(a2.dtype).itemsize
    tile_rows = _choose_tile_rows(rows, cols, itemsize)
    grid_rows = _cdiv(rows, tile_rows)
    n = rows * cols

    return pl.pallas_call(
        _my_add_kernel,
        out_shape=jax.ShapeDtypeStruct((rows, cols), a2.dtype),
        grid_spec=pl.GridSpec(
            grid=(grid_rows,),
            in_specs=[
                pl.BlockSpec((tile_rows, cols), lambda i: (i, 0)),
                pl.BlockSpec((tile_rows, cols), lambda i: (i, 0)),
            ],
            out_specs=pl.BlockSpec((tile_rows, cols), lambda i: (i, 0)),
        ),
        compiler_params=pltpu.CompilerParams(
            # "parallel": lets v7x shard the row loop across its 2 TCs;
            # no-op on single-TC v5e/v6e.
            dimension_semantics=("parallel",),
            vmem_limit_bytes=_VMEM_LIMIT_BYTES,
        ),
        cost_estimate=pl.CostEstimate(
            flops=2 * n,
            transcendentals=0,
            bytes_accessed=3 * n * itemsize,
        ),
    )(a2, b2)


def my_add(a: jax.Array, b: jax.Array) -> jax.Array:
    """out = 2*a + b, matching the ONNX symbolic of MyAddFunction."""
    assert a.shape == b.shape and a.dtype == b.dtype
    orig_shape = a.shape
    n = a.size
    itemsize = jnp.dtype(a.dtype).itemsize

    # Small inputs (incl. the (2,4,16,16) deployment shape): launch-overhead
    # bound -> fused XLA elementwise beats any pallas_call.
    if n * itemsize < _SMALL_BYPASS_BYTES:
        return a * 2 + b

    # Pick a lane-dense column width that divides n exactly (true for
    # virtually all NN tensor sizes) so no padding / slicing is needed.
    cols = None
    for c in (512, 256, 128):
        if n % c == 0:
            cols = c
            break

    if cols is not None:
        rows = n // cols
        out2 = _my_add_pallas_2d(a.reshape(rows, cols), b.reshape(rows, cols))
        return out2.reshape(orig_shape)

    # Rare fallback: element count not 128-aligned -> pad the flat tail.
    cols = 128
    rows = _cdiv(n, cols)
    padded_n = rows * cols
    pad = padded_n - n
    a_flat = jnp.pad(a.reshape(-1), (0, pad))
    b_flat = jnp.pad(b.reshape(-1), (0, pad))
    out2 = _my_add_pallas_2d(a_flat.reshape(rows, cols),
                             b_flat.reshape(rows, cols))
    return out2.reshape(-1)[:n].reshape(orig_shape)


if __name__ == "__main__":
    key = jax.random.PRNGKey(0)
    ka, kb, kc, kd, ke, kf = jax.random.split(key, 6)

    # 1) Deployment-like NCHW shape (2,4,16,16): small-size XLA bypass path.
    a = jax.random.normal(ka, (2, 4, 16, 16), dtype=jnp.float32)
    b = jax.random.normal(kb, (2, 4, 16, 16), dtype=jnp.float32)
    out = my_add(a, b)
    jax.block_until_ready(out)
    assert out.shape == a.shape
    assert jnp.allclose(out, 2.0 * a + b, atol=1e-6), "mismatch (small/bypass)"

    # 2) Large 128-aligned shape: Pallas kernel, zero-copy reshape, 4-step
    #    pipelined grid (rows=4096, tile_rows=1024, cols=512).
    a2 = jax.random.normal(kc, (4, 32, 128, 128), dtype=jnp.float32)
    b2 = jax.random.normal(kd, (4, 32, 128, 128), dtype=jnp.float32)
    out2 = my_add(a2, b2)
    jax.block_until_ready(out2)
    assert jnp.allclose(out2, 2.0 * a2 + b2, atol=1e-6), "mismatch (tiled)"

    # 3) Large non-128-aligned element count: Pallas pad-fallback path with a
    #    partial (masked) last row-block.
    a3 = jax.random.normal(ke, (7, 11, 13, 301), dtype=jnp.float32)
    b3 = jax.random.normal(kf, (7, 11, 13, 301), dtype=jnp.float32)
    out3 = my_add(a3, b3)
    jax.block_until_ready(out3)
    assert jnp.allclose(out3, 2.0 * a3 + b3, atol=1e-6), "mismatch (padded)"

    print("KERNEL_OK")
</pallas_src>

<mosaic_0001>
module attributes {stable_mosaic.version = 11 : i64} {
  func.func @_my_add_kernel(%arg0: i32, %arg1: memref<1024x512xf32, #tpu.memory_space<vmem>>, %arg2: memref<1024x512xf32, #tpu.memory_space<vmem>>, %arg3: memref<1024x512xf32, #tpu.memory_space<vmem>>) attributes {dimension_semantics = [#tpu.dimension_semantics<parallel>], iteration_bounds = array<i64: 4>, scalar_prefetch = 0 : i64, scratch_operands = 0 : i64, tpu.core_type = #tpu.core_type<tc>, window_params = [{transform_indices = @transform_0, window_bounds = array<i64: 1024, 512>}, {transform_indices = @transform_1, window_bounds = array<i64: 1024, 512>}, {transform_indices = @transform_2, window_bounds = array<i64: 1024, 512>}]} {
    %c0 = arith.constant 0 : index
    %c0_0 = arith.constant 0 : index
    %0 = vector.load %arg1[%c0, %c0_0] : memref<1024x512xf32, #tpu.memory_space<vmem>>, vector<1024x512xf32>
    %cst = arith.constant 2.000000e+00 : f32
    %1 = vector.broadcast %cst : f32 to vector<1024x512xf32>
    %2 = arith.mulf %0, %1 : vector<1024x512xf32>
    %c0_1 = arith.constant 0 : index
    %c0_2 = arith.constant 0 : index
    %3 = vector.load %arg2[%c0_1, %c0_2] : memref<1024x512xf32, #tpu.memory_space<vmem>>, vector<1024x512xf32>
    %4 = arith.addf %2, %3 : vector<1024x512xf32>
    %c0_3 = arith.constant 0 : index
    %c0_4 = arith.constant 0 : index
    %5 = vector.load %arg3[%c0_3, %c0_4] : memref<1024x512xf32, #tpu.memory_space<vmem>>, vector<1024x512xf32>
    tpu.vector_store %arg3[%c0_3, %c0_4], %4 {strides = array<i32>} : memref<1024x512xf32, #tpu.memory_space<vmem>>, vector<1024x512xf32>,
    return
  }
  func.func @transform_0(%arg0: i32) -> (i32, i32) {
    %c0_i32 = arith.constant 0 : i32
    %c0_i32_0 = arith.constant 0 : i32
    return %arg0, %c0_i32 : i32, i32
  }
  func.func @transform_1(%arg0: i32) -> (i32, i32) {
    %c0_i32 = arith.constant 0 : i32
    %c0_i32_0 = arith.constant 0 : i32
    return %arg0, %c0_i32 : i32, i32
  }
  func.func @transform_2(%arg0: i32) -> (i32, i32) {
    %c0_i32 = arith.constant 0 : i32
    %c0_i32_0 = arith.constant 0 : i32
    return %arg0, %c0_i32 : i32, i32
  }
}

</mosaic_0001>

<llo_original>
// kernel: tpu_custom_call.1
$region0: #{tpu_custom_call.1}
  #allocation0 [shape = 'u32[]', space=smem, size = 0x4, offset = 0x4, fixed_abs, tag = 'smem constant byte address 0x4 - core index']
  #allocation1 [shape = 'u32[72,128]{1,0:T(1,128)}', space=vmem, size = 0x9000, scoped, tag = 'internal scratch']
  %s0 = inlined_call_operand.hbm [shape: f32[4096,512], index: 0, kind: input, shape index: {}]
  %s1 = inlined_call_operand.hbm [shape: f32[4096,512], index: 1, kind: input, shape index: {}]
  %s2 = inlined_call_operand.hbm [shape: f32[4096,512], index: 2, kind: output, shape index: {}]
  %s3 = sld [smem:[#allocation0]]
  $region49: #{tpu_custom_call.1} parent=0
    _
  %s5 = ssub.s32 1, %s3
  %s6 = scalar_select 0, %s5, %s3
  $region1: #{tpu_custom_call.1} parent=0
    #allocation2 [shape = 'u8[4194304]{0}', space=vmem, size = 0x400000, scoped, tag = 'input window, operand 0']
    #allocation3 [shape = 's32[2]{0}', space=sflag, size = 0x8, scoped, tag = 'scoped memory for tpu_custom_call.1']
    #allocation4 [shape = 's32[2]{0}', space=sflag, size = 0x8, scoped, tag = 'scoped memory for tpu_custom_call.1']
    #allocation5 [shape = 'u8[4194304]{0}', space=vmem, size = 0x400000, scoped, tag = 'input window, operand 1']
    #allocation6 [shape = 's32[2]{0}', space=sflag, size = 0x8, scoped, tag = 'scoped memory for tpu_custom_call.1']
    #allocation7 [shape = 'u8[4194304]{0}', space=vmem, size = 0x400000, scoped, tag = 'output window, operand 0']
    %7 = vsyncpa [#allocation3], 0
    %s8 = scalar_lea.sflag [#allocation3], 1
    %9 = vsyncpa %s8, 0
    %10 = vsyncpa [#allocation6], 0
    %s11 = scalar_lea.sflag [#allocation6], 1
    %12 = vsyncpa %s11, 0
    %13 = vsyncpa [#allocation4], 0
    %s14 = scalar_lea.sflag [#allocation4], 1
    %15 = vsyncpa %s14, 0
    loop: start=0, step=1, limit=6
    $region2: #{tpu_custom_call.1} parent=1 // loop_pre_header
      _
    $region3: #{tpu_custom_call.1} parent=1 // loop_header
      %s17 = sphi 0, %s21
      %p18 = scmp.ge.s32.totalorder %s17, 6
      %s27 = sphi 0, %s29
      %s30 = sphi 0, %s27
      %s31 = sphi 0, %s30
      %s47 = sphi 0, %s31
      %s53 = sphi 0, %s55
      %s56 = sphi 0, %s53
      %s57 = sphi 0, %s56
      %s73 = sphi 0, %s57
      %s79 = sphi 0, %s81
      %s82 = sphi 0, %s79
      %s83 = sphi 0, %s82
      %s99 = sphi 0, %s83
    $region4: #{tpu_custom_call.1} parent=1 // loop_header_branch
      %20 = sbr.rel (%p18) target = $region8
    $region5: #{tpu_custom_call.1} parent=1 // loop_body
      %s22 = ssub.s32 %s17, 1
      %s23 = ssub.s32 %s17, 2
      %s24 = sadd.s32 %s17, 1
      %s25 = ssub.s32 %s17, %s24
      %p26 = scmp.eq.s32.totalorder %s25, 0
      %s28 = sadd.s32 %s27, 1
      %s29 = scalar_select %p26, %s27, %s28
      %p32 = pneg %p26
      %p33 = scmp.eq.s32.totalorder %s17, 3
      %p34 = por %p32, %p33
      %p35 = scmp.ne.s32.totalorder %s27, %s30
      %p36 = scmp.eq.s32.totalorder %s17, 0
      %p37 = por %p35, %p36
      %p38 = scmp.ne.s32.totalorder %s27, %s30
      %p39 = scmp.eq.s32.totalorder %s22, 3
      %p40 = por %p38, %p39
      %p41 = scmp.ne.s32.totalorder %s30, %s31
      %p42 = scmp.eq.s32.totalorder %s22, 0
      %p43 = por %p41, %p42
      %p44 = scmp.ne.s32.totalorder %s30, %s31
      %p45 = scmp.eq.s32.totalorder %s23, 3
      %p46 = por %p44, %p45
      %p48 = scmp.ne.s32.totalorder %s31, %s47
      %p49 = scmp.eq.s32.totalorder %s23, 0
      %p50 = por %p48, %p49
      %s51 = ssub.s32 %s17, %s24
      %p52 = scmp.eq.s32.totalorder %s51, 0
      %s54 = sadd.s32 %s53, 1
      %s55 = scalar_select %p52, %s53, %s54
      %p58 = pneg %p52
      %p59 = scmp.eq.s32.totalorder %s17, 3
      %p60 = por %p58, %p59
      %p61 = scmp.ne.s32.totalorder %s53, %s56
      %p62 = scmp.eq.s32.totalorder %s17, 0
      %p63 = por %p61, %p62
      %p64 = scmp.ne.s32.totalorder %s53, %s56
      %p65 = scmp.eq.s32.totalorder %s22, 3
      %p66 = por %p64, %p65
      %p67 = scmp.ne.s32.totalorder %s56, %s57
      %p68 = scmp.eq.s32.totalorder %s22, 0
      %p69 = por %p67, %p68
      %p70 = scmp.ne.s32.totalorder %s56, %s57
      %p71 = scmp.eq.s32.totalorder %s23, 3
      %p72 = por %p70, %p71
      %p74 = scmp.ne.s32.totalorder %s57, %s73
      %p75 = scmp.eq.s32.totalorder %s23, 0
      %p76 = por %p74, %p75
      %s77 = ssub.s32 %s17, %s24
      %p78 = scmp.eq.s32.totalorder %s77, 0
      %s80 = sadd.s32 %s79, 1
      %s81 = scalar_select %p78, %s79, %s80
      %p84 = pneg %p78
      %p85 = scmp.eq.s32.totalorder %s17, 3
      %p86 = por %p84, %p85
      %p87 = scmp.ne.s32.totalorder %s79, %s82
      %p88 = scmp.eq.s32.totalorder %s17, 0
      %p89 = por %p87, %p88
      %p90 = scmp.ne.s32.totalorder %s79, %s82
      %p91 = scmp.eq.s32.totalorder %s22, 3
      %p92 = por %p90, %p91
      %p93 = scmp.ne.s32.totalorder %s82, %s83
      %p94 = scmp.eq.s32.totalorder %s22, 0
      %p95 = por %p93, %p94
      %p96 = scmp.ne.s32.totalorder %s82, %s83
      %p97 = scmp.eq.s32.totalorder %s23, 3
      %p98 = por %p96, %p97
      %p100 = scmp.ne.s32.totalorder %s83, %s99
      %p101 = scmp.eq.s32.totalorder %s23, 0
      %p102 = por %p100, %p101
      %p103 = scmp.le.s32.totalorder 1, %s17
      %p104 = scmp.lt.s32.totalorder %s17, 5
      %p105 = pnand %p103, %p104
      %p106 = pneg %p105
      // Predicated region
      $region9: #{tpu_custom_call.1} parent=5 // pred_check
        _
      $region10: #{tpu_custom_call.1} parent=5 // pred_check_branch
        %108 = sbr.rel (%p105) target = $region12
      $region11: #{tpu_custom_call.1} parent=5 // pred_region
        %s109 = ssub.s32 %s17, 1
      $region12: #{tpu_custom_call.1} parent=5 // pred_fallthru
        _
      %p110 = scmp.lt.s32.totalorder %s17, 4
      // Predicated region
      $region13: #{tpu_custom_call.1} parent=5 // pred_check
        %p111 = pneg %p110
      $region14: #{tpu_custom_call.1} parent=5 // pred_check_branch
        %113 = sbr.rel (%p111) target = $region16
      $region15: #{tpu_custom_call.1} parent=5 // pred_region
        // Predicated region
        $region17: #{tpu_custom_call.1} parent=15 // pred_check
          %p114 = pneg %p37
        $region18: #{tpu_custom_call.1} parent=15 // pred_check_branch
          %116 = sbr.rel (%p114) target = $region20
        $region19: #{tpu_custom_call.1} parent=15 // pred_region
          %s117 = sand.u32 %s27, 1
          %s118 = scalar_lea.sflag [#allocation3], %s117
          %s119 = sand.u32 %s27, 1
          %s120 = smul.addr %s119, 4096
          %s121 = scalar_lea.vmem [#allocation2], %s120
          %s122 = smul.u32 128, %s17
          %124 = vsyncadd %s118, 0
          %s125 = smul.addr %s122, 4
          %s126 = smul.addr %s125, 8
          %s127 = scalar_lea.hbm %s0, %s126
          %s128 = sshll.u32 %s127, 4
          %s129 = int_to_ptr.hbm [resolvable:$true] %s128
          %s130 = sshll.u32 %s121, 4
          %s131 = int_to_ptr.vmem [resolvable:$true] %s130
          %136 = dma.hbm_to_vmem [thread:$0]  %s129, 65536, %s131, %s118, 512, 512, 32
        $region20: #{tpu_custom_call.1} parent=15 // pred_fallthru
          _
        // Predicated region
        $region21: #{tpu_custom_call.1} parent=15 // pred_check
          %p137 = pneg %p63
        $region22: #{tpu_custom_call.1} parent=15 // pred_check_branch
          %139 = sbr.rel (%p137) target = $region24
        $region23: #{tpu_custom_call.1} parent=15 // pred_region
          %s140 = sand.u32 %s53, 1
          %s141 = scalar_lea.sflag [#allocation6], %s140
          %s142 = sand.u32 %s53, 1
          %s143 = smul.addr %s142, 4096
          %s144 = scalar_lea.vmem [#allocation5], %s143
          %s145 = smul.u32 128, %s17
          %147 = vsyncadd %s141, 0
          %s148 = smul.addr %s145, 4
          %s149 = smul.addr %s148, 8
          %s150 = scalar_lea.hbm %s1, %s149
          %s151 = sshll.u32 %s150, 4
          %s152 = int_to_ptr.hbm [resolvable:$true] %s151
          %s153 = sshll.u32 %s144, 4
          %s154 = int_to_ptr.vmem [resolvable:$true] %s153
          %159 = dma.hbm_to_vmem [thread:$0]  %s152, 65536, %s154, %s141, 512, 512, 32
        $region24: #{tpu_custom_call.1} parent=15 // pred_fallthru
          _
      $region16: #{tpu_custom_call.1} parent=5 // pred_fallthru
        _
      %p160 = scmp.le.s32.totalorder 1, %s17
      %p161 = scmp.lt.s32.totalorder %s17, 5
      %p162 = pnand %p160, %p161
      %p163 = pneg %p162
      // Predicated region
      $region25: #{tpu_custom_call.1} parent=5 // pred_check
        _
      $region26: #{tpu_custom_call.1} parent=5 // pred_check_branch
        %165 = sbr.rel (%p162) target = $region28
      $region27: #{tpu_custom_call.1} parent=5 // pred_region
        %s166 = ssub.s32 %s17, 1
        %s167 = sand.u32 %s30, 1
        %s168 = scalar_lea.sflag [#allocation3], %s167
        %s169 = sand.u32 %s30, 1
        %s170 = smul.addr %s169, 4096
        %s171 = scalar_lea.vmem [#allocation2], %s170
        // Predicated region
        $region29: #{tpu_custom_call.1} parent=27 // pred_check
          %p172 = pneg %p43
        $region30: #{tpu_custom_call.1} parent=27 // pred_check_branch
          %174 = sbr.rel (%p172) target = $region32
        $region31: #{tpu_custom_call.1} parent=27 // pred_region
          %176 = dma.done %s168, 65536
        $region32: #{tpu_custom_call.1} parent=27 // pred_fallthru
          _
        %s177 = sand.u32 %s56, 1
        %s178 = scalar_lea.sflag [#allocation6], %s177
        %s179 = sand.u32 %s56, 1
        %s180 = smul.addr %s179, 4096
        %s181 = scalar_lea.vmem [#allocation5], %s180
        // Predicated region
        $region33: #{tpu_custom_call.1} parent=27 // pred_check
          %p182 = pneg %p69
        $region34: #{tpu_custom_call.1} parent=27 // pred_check_branch
          %184 = sbr.rel (%p182) target = $region36
        $region35: #{tpu_custom_call.1} parent=27 // pred_region
          %186 = dma.done %s178, 65536
        $region36: #{tpu_custom_call.1} parent=27 // pred_fallthru
          _
        %s187 = sand.u32 %s30, 1
        %s188 = scalar_lea.sflag [#allocation3], %s187
        %s189 = sand.u32 %s30, 1
        %s190 = smul.addr %s189, 4096
        %s191 = scalar_lea.vmem [#allocation2], %s190
        %p192 = pneg %p43
        %p193 = pneg %p40
        %s194 = sand.u32 %s56, 1
        %s195 = scalar_lea.sflag [#allocation6], %s194
        %s196 = sand.u32 %s56, 1
        %s197 = smul.addr %s196, 4096
        %s198 = scalar_lea.vmem [#allocation5], %s197
        %p199 = pneg %p69
        %p200 = pneg %p66
        %p201 = pneg %p95
        %p202 = pneg %p92
        %s203 = sand.u32 %s82, 1
        %s204 = scalar_lea.sflag [#allocation4], %s203
        %s205 = sand.u32 %s82, 1
        %s206 = smul.addr %s205, 4096
        %s207 = scalar_lea.vmem [#allocation7], %s206
        %s208 = smul.u32 128, %s22
        %s209 = smul.u32 128, %s22
        %s210 = smul.u32 128, %s22
        %v211 = vld [vmem:[%s171] sm:$0xff]
        %v212 = vld [vmem:[%s171 + $0x8] sm:$0xff]
        %v213 = vld [vmem:[%s171 + $0x10] sm:$0xff]
        %v214 = vld [vmem:[%s171 + $0x18] sm:$0xff]
        %v215 = vld [vmem:[%s171 + $0x20] sm:$0xff]
        %v216 = vld [vmem:[%s171 + $0x28] sm:$0xff]
        %v217 = vld [vmem:[%s171 + $0x30] sm:$0xff]
        %v218 = vld [vmem:[%s171 + $0x38] sm:$0xff]
        %v219 = vld [vmem:[%s171 + $0x40] sm:$0xff]
        %v220 = vld [vmem:[%s171 + $0x48] sm:$0xff]
        %v221 = vld [vmem:[%s171 + $0x50] sm:$0xff]
        %v222 = vld [vmem:[%s171 + $0x58] sm:$0xff]
        %v223 = vld [vmem:[%s171 + $0x60] sm:$0xff]
        %v224 = vld [vmem:[%s171 + $0x68] sm:$0xff]
        %v225 = vld [vmem:[%s171 + $0x70] sm:$0xff]
        %v226 = vld [vmem:[%s171 + $0x78] sm:$0xff]
        %v227 = vld [vmem:[%s171 + $0x80] sm:$0xff]
        %v228 = vld [vmem:[%s171 + $0x88] sm:$0xff]
        %v229 = vld [vmem:[%s171 + $0x90] sm:$0xff]
        %v230 = vld [vmem:[%s171 + $0x98] sm:$0xff]
        %v231 = vld [vmem:[%s171 + $0xa0] sm:$0xff]
        %v232 = vld [vmem:[%s171 + $0xa8] sm:$0xff]
        %v233 = vld [vmem:[%s171 + $0xb0] sm:$0xff]
        %v234 = vld [vmem:[%s171 + $0xb8] sm:$0xff]
        %v235 = vld [vmem:[%s171 + $0xc0] sm:$0xff]
        %v236 = vld [vmem:[%s171 + $0xc8] sm:$0xff]
        %v237 = vld [vmem:[%s171 + $0xd0] sm:$0xff]
        %v238 = vld [vmem:[%s171 + $0xd8] sm:$0xff]
        %v239 = vld [vmem:[%s171 + $0xe0] sm:$0xff]
        %v240 = vld [vmem:[%s171 + $0xe8] sm:$0xff]
        %v241 = vld [vmem:[%s171 + $0xf0] sm:$0xff]
        %v242 = vld [vmem:[%s171 + $0xf8] sm:$0xff]
        %v243 = vld [vmem:[%s171 + $0x100] sm:$0xff]
        %v244 = vld [vmem:[%s171 + $0x108] sm:$0xff]
        %v245 = vld [vmem:[%s171 + $0x110] sm:$0xff]
        %v246 = vld [vmem:[%s171 + $0x118] sm:$0xff]
        %v247 = vld [vmem:[%s171 + $0x120] sm:$0xff]
        %v248 = vld [vmem:[%s171 + $0x128] sm:$0xff]
        %v249 = vld [vmem:[%s171 + $0x130] sm:$0xff]
        %v250 = vld [vmem:[%s171 + $0x138] sm:$0xff]
        %v251 = vld [vmem:[%s171 + $0x140] sm:$0xff]
        %v252 = vld [vmem:[%s171 + $0x148] sm:$0xff]
        %v253 = vld [vmem:[%s171 + $0x150] sm:$0xff]
        %v254 = vld [vmem:[%s171 + $0x158] sm:$0xff]
        %v255 = vld [vmem:[%s171 + $0x160] sm:$0xff]
        %v256 = vld [vmem:[%s171 + $0x168] sm:$0xff]
        %v257 = vld [vmem:[%s171 + $0x170] sm:$0xff]
        %v258 = vld [vmem:[%s171 + $0x178] sm:$0xff]
        %v259 = vld [vmem:[%s171 + $0x180] sm:$0xff]
        %v260 = vld [vmem:[%s171 + $0x188] sm:$0xff]
        %v261 = vld [vmem:[%s171 + $0x190] sm:$0xff]
        %v262 = vld [vmem:[%s171 + $0x198] sm:$0xff]
        %v263 = vld [vmem:[%s171 + $0x1a0] sm:$0xff]
        %v264 = vld [vmem:[%s171 + $0x1a8] sm:$0xff]
        %v265 = vld [vmem:[%s171 + $0x1b0] sm:$0xff]
        %v266 = vld [vmem:[%s171 + $0x1b8] sm:$0xff]
        %v267 = vld [vmem:[%s171 + $0x1c0] sm:$0xff]
        %v268 = vld [vmem:[%s171 + $0x1c8] sm:$0xff]
        %v269 = vld [vmem:[%s171 + $0x1d0] sm:$0xff]
        %v270 = vld [vmem:[%s171 + $0x1d8] sm:$0xff]
        %v271 = vld [vmem:[%s171 + $0x1e0] sm:$0xff]
        %v272 = vld [vmem:[%s171 + $0x1e8] sm:$0xff]
        %v273 = vld [vmem:[%s171 + $0x1f0] sm:$0xff]
        %v274 = vld [vmem:[%s171 + $0x1f8] sm:$0xff]
        %v275 = vld [vmem:[%s171 + $0x200] sm:$0xff]
        %v276 = vld [vmem:[%s171 + $0x208] sm:$0xff]
        %v277 = vld [vmem:[%s171 + $0x210] sm:$0xff]
        %v278 = vld [vmem:[%s171 + $0x218] sm:$0xff]
        %v279 = vld [vmem:[%s171 + $0x220] sm:$0xff]
        %v280 = vld [vmem:[%s171 + $0x228] sm:$0xff]
        %v281 = vld [vmem:[%s171 + $0x230] sm:$0xff]
        %v282 = vld [vmem:[%s171 + $0x238] sm:$0xff]
        %v283 = vld [vmem:[%s171 + $0x240] sm:$0xff]
        %v284 = vld [vmem:[%s171 + $0x248] sm:$0xff]
        %v285 = vld [vmem:[%s171 + $0x250] sm:$0xff]
        %v286 = vld [vmem:[%s171 + $0x258] sm:$0xff]
        %v287 = vld [vmem:[%s171 + $0x260] sm:$0xff]
        %v288 = vld [vmem:[%s171 + $0x268] sm:$0xff]
        %v289 = vld [vmem:[%s171 + $0x270] sm:$0xff]
        %v290 = vld [vmem:[%s171 + $0x278] sm:$0xff]
        %v291 = vld [vmem:[%s171 + $0x280] sm:$0xff]
        %v292 = vld [vmem:[%s171 + $0x288] sm:$0xff]
        %v293 = vld [vmem:[%s171 + $0x290] sm:$0xff]
        %v294 = vld [vmem:[%s171 + $0x298] sm:$0xff]
        %v295 = vld [vmem:[%s171 + $0x2a0] sm:$0xff]
        %v296 = vld [vmem:[%s171 + $0x2a8] sm:$0xff]
        %v297 = vld [vmem:[%s171 + $0x2b0] sm:$0xff]
        %v298 = vld [vmem:[%s171 + $0x2b8] sm:$0xff]
        %v299 = vld [vmem:[%s171 + $0x2c0] sm:$0xff]
        %v300 = vld [vmem:[%s171 + $0x2c8] sm:$0xff]
        %v301 = vld [vmem:[%s171 + $0x2d0] sm:$0xff]
        %v302 = vld [vmem:[%s171 + $0x2d8] sm:$0xff]
        %v303 = vld [vmem:[%s171 + $0x2e0] sm:$0xff]
        %v304 = vld [vmem:[%s171 + $0x2e8] sm:$0xff]
        %v305 = vld [vmem:[%s171 + $0x2f0] sm:$0xff]
        %v306 = vld [vmem:[%s171 + $0x2f8] sm:$0xff]
        %v307 = vld [vmem:[%s171 + $0x300] sm:$0xff]
        %v308 = vld [vmem:[%s171 + $0x308] sm:$0xff]
        %v309 = vld [vmem:[%s171 + $0x310] sm:$0xff]
        %v310 = vld [vmem:[%s171 + $0x318] sm:$0xff]
        %v311 = vld [vmem:[%s171 + $0x320] sm:$0xff]
        %v312 = vld [vmem:[%s171 + $0x328] sm:$0xff]
        %v313 = vld [vmem:[%s171 + $0x330] sm:$0xff]
        %v314 = vld [vmem:[%s171 + $0x338] sm:$0xff]
        %v315 = vld [vmem:[%s171 + $0x340] sm:$0xff]
        %v316 = vld [vmem:[%s171 + $0x348] sm:$0xff]
        %v317 = vld [vmem:[%s171 + $0x350] sm:$0xff]
        %v318 = vld [vmem:[%s171 + $0x358] sm:$0xff]
        %v319 = vld [vmem:[%s171 + $0x360] sm:$0xff]
        %v320 = vld [vmem:[%s171 + $0x368] sm:$0xff]
        %v321 = vld [vmem:[%s171 + $0x370] sm:$0xff]
        %v322 = vld [vmem:[%s171 + $0x378] sm:$0xff]
        %v323 = vld [vmem:[%s171 + $0x380] sm:$0xff]
        %v324 = vld [vmem:[%s171 + $0x388] sm:$0xff]
        %v325 = vld [vmem:[%s171 + $0x390] sm:$0xff]
        %v326 = vld [vmem:[%s171 + $0x398] sm:$0xff]
        %v327 = vld [vmem:[%s171 + $0x3a0] sm:$0xff]
        %v328 = vld [vmem:[%s171 + $0x3a8] sm:$0xff]
        %v329 = vld [vmem:[%s171 + $0x3b0] sm:$0xff]
        %v330 = vld [vmem:[%s171 + $0x3b8] sm:$0xff]
        %v331 = vld [vmem:[%s171 + $0x3c0] sm:$0xff]
        %v332 = vld [vmem:[%s171 + $0x3c8] sm:$0xff]
        %v333 = vld [vmem:[%s171 + $0x3d0] sm:$0xff]
        %v334 = vld [vmem:[%s171 + $0x3d8] sm:$0xff]
        %v335 = vld [vmem:[%s171 + $0x3e0] sm:$0xff]
        %v336 = vld [vmem:[%s171 + $0x3e8] sm:$0xff]
        %v337 = vld [vmem:[%s171 + $0x3f0] sm:$0xff]
        %v338 = vld [vmem:[%s171 + $0x3f8] sm:$0xff]
        %v339 = vld [vmem:[%s171 + $0x400] sm:$0xff]
        %v340 = vld [vmem:[%s171 + $0x408] sm:$0xff]
        %v341 = vld [vmem:[%s171 + $0x410] sm:$0xff]
        %v342 = vld [vmem:[%s171 + $0x418] sm:$0xff]
        %v343 = vld [vmem:[%s171 + $0x420] sm:$0xff]
        %v344 = vld [vmem:[%s171 + $0x428] sm:$0xff]
        %v345 = vld [vmem:[%s171 + $0x430] sm:$0xff]
        %v346 = vld [vmem:[%s171 + $0x438] sm:$0xff]
        %v347 = vld [vmem:[%s171 + $0x440] sm:$0xff]
        %v348 = vld [vmem:[%s171 + $0x448] sm:$0xff]
        %v349 = vld [vmem:[%s171 + $0x450] sm:$0xff]
        %v350 = vld [vmem:[%s171 + $0x458] sm:$0xff]
        %v351 = vld [vmem:[%s171 + $0x460] sm:$0xff]
        %v352 = vld [vmem:[%s171 + $0x468] sm:$0xff]
        %v353 = vld [vmem:[%s171 + $0x470] sm:$0xff]
        %v354 = vld [vmem:[%s171 + $0x478] sm:$0xff]
        %v355 = vld [vmem:[%s171 + $0x480] sm:$0xff]
        %v356 = vld [vmem:[%s171 + $0x488] sm:$0xff]
        %v357 = vld [vmem:[%s171 + $0x490] sm:$0xff]
        %v358 = vld [vmem:[%s171 + $0x498] sm:$0xff]
        %v359 = vld [vmem:[%s171 + $0x4a0] sm:$0xff]
        %v360 = vld [vmem:[%s171 + $0x4a8] sm:$0xff]
        %v361 = vld [vmem:[%s171 + $0x4b0] sm:$0xff]
        %v362 = vld [vmem:[%s171 + $0x4b8] sm:$0xff]
        %v363 = vld [vmem:[%s171 + $0x4c0] sm:$0xff]
        %v364 = vld [vmem:[%s171 + $0x4c8] sm:$0xff]
        %v365 = vld [vmem:[%s171 + $0x4d0] sm:$0xff]
        %v366 = vld [vmem:[%s171 + $0x4d8] sm:$0xff]
        %v367 = vld [vmem:[%s171 + $0x4e0] sm:$0xff]
        %v368 = vld [vmem:[%s171 + $0x4e8] sm:$0xff]
        %v369 = vld [vmem:[%s171 + $0x4f0] sm:$0xff]
        %v370 = vld [vmem:[%s171 + $0x4f8] sm:$0xff]
        %v371 = vld [vmem:[%s171 + $0x500] sm:$0xff]
        %v372 = vld [vmem:[%s171 + $0x508] sm:$0xff]
        %v373 = vld [vmem:[%s171 + $0x510] sm:$0xff]
        %v374 = vld [vmem:[%s171 + $0x518] sm:$0xff]
        %v375 = vld [vmem:[%s171 + $0x520] sm:$0xff]
        %v376 = vld [vmem:[%s171 + $0x528] sm:$0xff]
        %v377 = vld [vmem:[%s171 + $0x530] sm:$0xff]
        %v378 = vld [vmem:[%s171 + $0x538] sm:$0xff]
        %v379 = vld [vmem:[%s171 + $0x540] sm:$0xff]
        %v380 = vld [vmem:[%s171 + $0x548] sm:$0xff]
        %v381 = vld [vmem:[%s171 + $0x550] sm:$0xff]
        %v382 = vld [vmem:[%s171 + $0x558] sm:$0xff]
        %v383 = vld [vmem:[%s171 + $0x560] sm:$0xff]
        %v384 = vld [vmem:[%s171 + $0x568] sm:$0xff]
        %v385 = vld [vmem:[%s171 + $0x570] sm:$0xff]
        %v386 = vld [vmem:[%s171 + $0x578] sm:$0xff]
        %v387 = vld [vmem:[%s171 + $0x580] sm:$0xff]
        %v388 = vld [vmem:[%s171 + $0x588] sm:$0xff]
        %v389 = vld [vmem:[%s171 + $0x590] sm:$0xff]
        %v390 = vld [vmem:[%s171 + $0x598] sm:$0xff]
        %v391 = vld [vmem:[%s171 + $0x5a0] sm:$0xff]
        %v392 = vld [vmem:[%s171 + $0x5a8] sm:$0xff]
        %v393 = vld [vmem:[%s171 + $0x5b0] sm:$0xff]
        %v394 = vld [vmem:[%s171 + $0x5b8] sm:$0xff]
        %v395 = vld [vmem:[%s171 + $0x5c0] sm:$0xff]
        %v396 = vld [vmem:[%s171 + $0x5c8] sm:$0xff]
        %v397 = vld [vmem:[%s171 + $0x5d0] sm:$0xff]
        %v398 = vld [vmem:[%s171 + $0x5d8] sm:$0xff]
        %v399 = vld [vmem:[%s171 + $0x5e0] sm:$0xff]
        %v400 = vld [vmem:[%s171 + $0x5e8] sm:$0xff]
        %v401 = vld [vmem:[%s171 + $0x5f0] sm:$0xff]
        %v402 = vld [vmem:[%s171 + $0x5f8] sm:$0xff]
        %v403 = vld [vmem:[%s171 + $0x600] sm:$0xff]
        %v404 = vld [vmem:[%s171 + $0x608] sm:$0xff]
        %v405 = vld [vmem:[%s171 + $0x610] sm:$0xff]
        %v406 = vld [vmem:[%s171 + $0x618] sm:$0xff]
        %v407 = vld [vmem:[%s171 + $0x620] sm:$0xff]
        %v408 = vld [vmem:[%s171 + $0x628] sm:$0xff]
        %v409 = vld [vmem:[%s171 + $0x630] sm:$0xff]
        %v410 = vld [vmem:[%s171 + $0x638] sm:$0xff]
        %v411 = vld [vmem:[%s171 + $0x640] sm:$0xff]
        %v412 = vld [vmem:[%s171 + $0x648] sm:$0xff]
        %v413 = vld [vmem:[%s171 + $0x650] sm:$0xff]
        %v414 = vld [vmem:[%s171 + $0x658] sm:$0xff]
        %v415 = vld [vmem:[%s171 + $0x660] sm:$0xff]
        %v416 = vld [vmem:[%s171 + $0x668] sm:$0xff]
        %v417 = vld [vmem:[%s171 + $0x670] sm:$0xff]
        %v418 = vld [vmem:[%s171 + $0x678] sm:$0xff]
        %v419 = vld [vmem:[%s171 + $0x680] sm:$0xff]
        %v420 = vld [vmem:[%s171 + $0x688] sm:$0xff]
        %v421 = vld [vmem:[%s171 + $0x690] sm:$0xff]
        %v422 = vld [vmem:[%s171 + $0x698] sm:$0xff]
        %v423 = vld [vmem:[%s171 + $0x6a0] sm:$0xff]
        %v424 = vld [vmem:[%s171 + $0x6a8] sm:$0xff]
        %v425 = vld [vmem:[%s171 + $0x6b0] sm:$0xff]
        %v426 = vld [vmem:[%s171 + $0x6b8] sm:$0xff]
        %v427 = vld [vmem:[%s171 + $0x6c0] sm:$0xff]
        %v428 = vld [vmem:[%s171 + $0x6c8] sm:$0xff]
        %v429 = vld [vmem:[%s171 + $0x6d0] sm:$0xff]
        %v430 = vld [vmem:[%s171 + $0x6d8] sm:$0xff]
        %v431 = vld [vmem:[%s171 + $0x6e0] sm:$0xff]
        %v432 = vld [vmem:[%s171 + $0x6e8] sm:$0xff]
        %v433 = vld [vmem:[%s171 + $0x6f0] sm:$0xff]
        %v434 = vld [vmem:[%s171 + $0x6f8] sm:$0xff]
        %v435 = vld [vmem:[%s171 + $0x700] sm:$0xff]
        %v436 = vld [vmem:[%s171 + $0x708] sm:$0xff]
        %v437 = vld [vmem:[%s171 + $0x710] sm:$0xff]
        %v438 = vld [vmem:[%s171 + $0x718] sm:$0xff]
        %v439 = vld [vmem:[%s171 + $0x720] sm:$0xff]
        %v440 = vld [vmem:[%s171 + $0x728] sm:$0xff]
        %v441 = vld [vmem:[%s171 + $0x730] sm:$0xff]
        %v442 = vld [vmem:[%s171 + $0x738] sm:$0xff]
        %v443 = vld [vmem:[%s171 + $0x740] sm:$0xff]
        %v444 = vld [vmem:[%s171 + $0x748] sm:$0xff]
        %v445 = vld [vmem:[%s171 + $0x750] sm:$0xff]
        %v446 = vld [vmem:[%s171 + $0x758] sm:$0xff]
        %v447 = vld [vmem:[%s171 + $0x760] sm:$0xff]
        %v448 = vld [vmem:[%s171 + $0x768] sm:$0xff]
        %v449 = vld [vmem:[%s171 + $0x770] sm:$0xff]
        %v450 = vld [vmem:[%s171 + $0x778] sm:$0xff]
        %v451 = vld [vmem:[%s171 + $0x780] sm:$0xff]
        %v452 = vld [vmem:[%s171 + $0x788] sm:$0xff]
        %v453 = vld [vmem:[%s171 + $0x790] sm:$0xff]
        %v454 = vld [vmem:[%s171 + $0x798] sm:$0xff]
        %v455 = vld [vmem:[%s171 + $0x7a0] sm:$0xff]
        %v456 = vld [vmem:[%s171 + $0x7a8] sm:$0xff]
        %v457 = vld [vmem:[%s171 + $0x7b0] sm:$0xff]
        %v458 = vld [vmem:[%s171 + $0x7b8] sm:$0xff]
        %v459 = vld [vmem:[%s171 + $0x7c0] sm:$0xff]
        %v460 = vld [vmem:[%s171 + $0x7c8] sm:$0xff]
        %v461 = vld [vmem:[%s171 + $0x7d0] sm:$0xff]
        %v462 = vld [vmem:[%s171 + $0x7d8] sm:$0xff]
        %v463 = vld [vmem:[%s171 + $0x7e0] sm:$0xff]
        %v464 = vld [vmem:[%s171 + $0x7e8] sm:$0xff]
        %v465 = vld [vmem:[%s171 + $0x7f0] sm:$0xff]
        %v466 = vld [vmem:[%s171 + $0x7f8] sm:$0xff]
        %v467 = vld [vmem:[%s171 + $0x800] sm:$0xff]
        %v468 = vld [vmem:[%s171 + $0x808] sm:$0xff]
        %v469 = vld [vmem:[%s171 + $0x810] sm:$0xff]
        %v470 = vld [vmem:[%s171 + $0x818] sm:$0xff]
        %v471 = vld [vmem:[%s171 + $0x820] sm:$0xff]
        %v472 = vld [vmem:[%s171 + $0x828] sm:$0xff]
        %v473 = vld [vmem:[%s171 + $0x830] sm:$0xff]
        %v474 = vld [vmem:[%s171 + $0x838] sm:$0xff]
        %v475 = vld [vmem:[%s171 + $0x840] sm:$0xff]
        %v476 = vld [vmem:[%s171 + $0x848] sm:$0xff]
        %v477 = vld [vmem:[%s171 + $0x850] sm:$0xff]
        %v478 = vld [vmem:[%s171 + $0x858] sm:$0xff]
        %v479 = vld [vmem:[%s171 + $0x860] sm:$0xff]
        %v480 = vld [vmem:[%s171 + $0x868] sm:$0xff]
        %v481 = vld [vmem:[%s171 + $0x870] sm:$0xff]
        %v482 = vld [vmem:[%s171 + $0x878] sm:$0xff]
        %v483 = vld [vmem:[%s171 + $0x880] sm:$0xff]
        %v484 = vld [vmem:[%s171 + $0x888] sm:$0xff]
        %v485 = vld [vmem:[%s171 + $0x890] sm:$0xff]
        %v486 = vld [vmem:[%s171 + $0x898] sm:$0xff]
        %v487 = vld [vmem:[%s171 + $0x8a0] sm:$0xff]
        %v488 = vld [vmem:[%s171 + $0x8a8] sm:$0xff]
        %v489 = vld [vmem:[%s171 + $0x8b0] sm:$0xff]
        %v490 = vld [vmem:[%s171 + $0x8b8] sm:$0xff]
        %v491 = vld [vmem:[%s171 + $0x8c0] sm:$0xff]
        %v492 = vld [vmem:[%s171 + $0x8c8] sm:$0xff]
        %v493 = vld [vmem:[%s171 + $0x8d0] sm:$0xff]
        %v494 = vld [vmem:[%s171 + $0x8d8] sm:$0xff]
        %v495 = vld [vmem:[%s171 + $0x8e0] sm:$0xff]
        %v496 = vld [vmem:[%s171 + $0x8e8] sm:$0xff]
        %v497 = vld [vmem:[%s171 + $0x8f0] sm:$0xff]
        %v498 = vld [vmem:[%s171 + $0x8f8] sm:$0xff]
        %v499 = vld [vmem:[%s171 + $0x900] sm:$0xff]
        %v500 = vld [vmem:[%s171 + $0x908] sm:$0xff]
        %v501 = vld [vmem:[%s171 + $0x910] sm:$0xff]
        %v502 = vld [vmem:[%s171 + $0x918] sm:$0xff]
        %v503 = vld [vmem:[%s171 + $0x920] sm:$0xff]
        %v504 = vld [vmem:[%s171 + $0x928] sm:$0xff]
        %v505 = vld [vmem:[%s171 + $0x930] sm:$0xff]
        %v506 = vld [vmem:[%s171 + $0x938] sm:$0xff]
        %v507 = vld [vmem:[%s171 + $0x940] sm:$0xff]
        %v508 = vld [vmem:[%s171 + $0x948] sm:$0xff]
        %v509 = vld [vmem:[%s171 + $0x950] sm:$0xff]
        %v510 = vld [vmem:[%s171 + $0x958] sm:$0xff]
        %v511 = vld [vmem:[%s171 + $0x960] sm:$0xff]
        %v512 = vld [vmem:[%s171 + $0x968] sm:$0xff]
        %v513 = vld [vmem:[%s171 + $0x970] sm:$0xff]
        %v514 = vld [vmem:[%s171 + $0x978] sm:$0xff]
        %v515 = vld [vmem:[%s171 + $0x980] sm:$0xff]
        %v516 = vld [vmem:[%s171 + $0x988] sm:$0xff]
        %v517 = vld [vmem:[%s171 + $0x990] sm:$0xff]
        %v518 = vld [vmem:[%s171 + $0x998] sm:$0xff]
        %v519 = vld [vmem:[%s171 + $0x9a0] sm:$0xff]
        %v520 = vld [vmem:[%s171 + $0x9a8] sm:$0xff]
        %v521 = vld [vmem:[%s171 + $0x9b0] sm:$0xff]
        %v522 = vld [vmem:[%s171 + $0x9b8] sm:$0xff]
        %v523 = vld [vmem:[%s171 + $0x9c0] sm:$0xff]
        %v524 = vld [vmem:[%s171 + $0x9c8] sm:$0xff]
        %v525 = vld [vmem:[%s171 + $0x9d0] sm:$0xff]
        %v526 = vld [vmem:[%s171 + $0x9d8] sm:$0xff]
        %v527 = vld [vmem:[%s171 + $0x9e0] sm:$0xff]
        %v528 = vld [vmem:[%s171 + $0x9e8] sm:$0xff]
        %v529 = vld [vmem:[%s171 + $0x9f0] sm:$0xff]
        %v530 = vld [vmem:[%s171 + $0x9f8] sm:$0xff]
        %v531 = vld [vmem:[%s171 + $0xa00] sm:$0xff]
        %v532 = vld [vmem:[%s171 + $0xa08] sm:$0xff]
        %v533 = vld [vmem:[%s171 + $0xa10] sm:$0xff]
        %v534 = vld [vmem:[%s171 + $0xa18] sm:$0xff]
        %v535 = vld [vmem:[%s171 + $0xa20] sm:$0xff]
        %v536 = vld [vmem:[%s171 + $0xa28] sm:$0xff]
        %v537 = vld [vmem:[%s171 + $0xa30] sm:$0xff]
        %v538 = vld [vmem:[%s171 + $0xa38] sm:$0xff]
        %v539 = vld [vmem:[%s171 + $0xa40] sm:$0xff]
        %v540 = vld [vmem:[%s171 + $0xa48] sm:$0xff]
        %v541 = vld [vmem:[%s171 + $0xa50] sm:$0xff]
        %v542 = vld [vmem:[%s171 + $0xa58] sm:$0xff]
        %v543 = vld [vmem:[%s171 + $0xa60] sm:$0xff]
        %v544 = vld [vmem:[%s171 + $0xa68] sm:$0xff]
        %v545 = vld [vmem:[%s171 + $0xa70] sm:$0xff]
        %v546 = vld [vmem:[%s171 + $0xa78] sm:$0xff]
        %v547 = vld [vmem:[%s171 + $0xa80] sm:$0xff]
        %v548 = vld [vmem:[%s171 + $0xa88] sm:$0xff]
        %v549 = vld [vmem:[%s171 + $0xa90] sm:$0xff]
        %v550 = vld [vmem:[%s171 + $0xa98] sm:$0xff]
        %v551 = vld [vmem:[%s171 + $0xaa0] sm:$0xff]
        %v552 = vld [vmem:[%s171 + $0xaa8] sm:$0xff]
        %v553 = vld [vmem:[%s171 + $0xab0] sm:$0xff]
        %v554 = vld [vmem:[%s171 + $0xab8] sm:$0xff]
        %v555 = vld [vmem:[%s171 + $0xac0] sm:$0xff]
        %v556 = vld [vmem:[%s171 + $0xac8] sm:$0xff]
        %v557 = vld [vmem:[%s171 + $0xad0] sm:$0xff]
        %v558 = vld [vmem:[%s171 + $0xad8] sm:$0xff]
        %v559 = vld [vmem:[%s171 + $0xae0] sm:$0xff]
        %v560 = vld [vmem:[%s171 + $0xae8] sm:$0xff]
        %v561 = vld [vmem:[%s171 + $0xaf0] sm:$0xff]
        %v562 = vld [vmem:[%s171 + $0xaf8] sm:$0xff]
        %v563 = vld [vmem:[%s171 + $0xb00] sm:$0xff]
        %v564 = vld [vmem:[%s171 + $0xb08] sm:$0xff]
        %v565 = vld [vmem:[%s171 + $0xb10] sm:$0xff]
        %v566 = vld [vmem:[%s171 + $0xb18] sm:$0xff]
        %v567 = vld [vmem:[%s171 + $0xb20] sm:$0xff]
        %v568 = vld [vmem:[%s171 + $0xb28] sm:$0xff]
        %v569 = vld [vmem:[%s171 + $0xb30] sm:$0xff]
        %v570 = vld [vmem:[%s171 + $0xb38] sm:$0xff]
        %v571 = vld [vmem:[%s171 + $0xb40] sm:$0xff]
        %v572 = vld [vmem:[%s171 + $0xb48] sm:$0xff]
        %v573 = vld [vmem:[%s171 + $0xb50] sm:$0xff]
        %v574 = vld [vmem:[%s171 + $0xb58] sm:$0xff]
        %v575 = vld [vmem:[%s171 + $0xb60] sm:$0xff]
        %v576 = vld [vmem:[%s171 + $0xb68] sm:$0xff]
        %v577 = vld [vmem:[%s171 + $0xb70] sm:$0xff]
        %v578 = vld [vmem:[%s171 + $0xb78] sm:$0xff]
        %v579 = vld [vmem:[%s171 + $0xb80] sm:$0xff]
        %v580 = vld [vmem:[%s171 + $0xb88] sm:$0xff]
        %v581 = vld [vmem:[%s171 + $0xb90] sm:$0xff]
        %v582 = vld [vmem:[%s171 + $0xb98] sm:$0xff]
        %v583 = vld [vmem:[%s171 + $0xba0] sm:$0xff]
        %v584 = vld [vmem:[%s171 + $0xba8] sm:$0xff]
        %v585 = vld [vmem:[%s171 + $0xbb0] sm:$0xff]
        %v586 = vld [vmem:[%s171 + $0xbb8] sm:$0xff]
        %v587 = vld [vmem:[%s171 + $0xbc0] sm:$0xff]
        %v588 = vld [vmem:[%s171 + $0xbc8] sm:$0xff]
        %v589 = vld [vmem:[%s171 + $0xbd0] sm:$0xff]
        %v590 = vld [vmem:[%s171 + $0xbd8] sm:$0xff]
        %v591 = vld [vmem:[%s171 + $0xbe0] sm:$0xff]
        %v592 = vld [vmem:[%s171 + $0xbe8] sm:$0xff]
        %v593 = vld [vmem:[%s171 + $0xbf0] sm:$0xff]
        %v594 = vld [vmem:[%s171 + $0xbf8] sm:$0xff]
        %v595 = vld [vmem:[%s171 + $0xc00] sm:$0xff]
        %v596 = vld [vmem:[%s171 + $0xc08] sm:$0xff]
        %v597 = vld [vmem:[%s171 + $0xc10] sm:$0xff]
        %v598 = vld [vmem:[%s171 + $0xc18] sm:$0xff]
        %v599 = vld [vmem:[%s171 + $0xc20] sm:$0xff]
        %v600 = vld [vmem:[%s171 + $0xc28] sm:$0xff]
        %v601 = vld [vmem:[%s171 + $0xc30] sm:$0xff]
        %v602 = vld [vmem:[%s171 + $0xc38] sm:$0xff]
        %v603 = vld [vmem:[%s171 + $0xc40] sm:$0xff]
        %v604 = vld [vmem:[%s171 + $0xc48] sm:$0xff]
        %v605 = vld [vmem:[%s171 + $0xc50] sm:$0xff]
        %v606 = vld [vmem:[%s171 + $0xc58] sm:$0xff]
        %v607 = vld [vmem:[%s171 + $0xc60] sm:$0xff]
        %v608 = vld [vmem:[%s171 + $0xc68] sm:$0xff]
        %v609 = vld [vmem:[%s171 + $0xc70] sm:$0xff]
        %v610 = vld [vmem:[%s171 + $0xc78] sm:$0xff]
        %v611 = vld [vmem:[%s171 + $0xc80] sm:$0xff]
        %v612 = vld [vmem:[%s171 + $0xc88] sm:$0xff]
        %v613 = vld [vmem:[%s171 + $0xc90] sm:$0xff]
        %v614 = vld [vmem:[%s171 + $0xc98] sm:$0xff]
        %v615 = vld [vmem:[%s171 + $0xca0] sm:$0xff]
        %v616 = vld [vmem:[%s171 + $0xca8] sm:$0xff]
        %v617 = vld [vmem:[%s171 + $0xcb0] sm:$0xff]
        %v618 = vld [vmem:[%s171 + $0xcb8] sm:$0xff]
        %v619 = vld [vmem:[%s171 + $0xcc0] sm:$0xff]
        %v620 = vld [vmem:[%s171 + $0xcc8] sm:$0xff]
        %v621 = vld [vmem:[%s171 + $0xcd0] sm:$0xff]
        %v622 = vld [vmem:[%s171 + $0xcd8] sm:$0xff]
        %v623 = vld [vmem:[%s171 + $0xce0] sm:$0xff]
        %v624 = vld [vmem:[%s171 + $0xce8] sm:$0xff]
        %v625 = vld [vmem:[%s171 + $0xcf0] sm:$0xff]
        %v626 = vld [vmem:[%s171 + $0xcf8] sm:$0xff]
        %v627 = vld [vmem:[%s171 + $0xd00] sm:$0xff]
        %v628 = vld [vmem:[%s171 + $0xd08] sm:$0xff]
        %v629 = vld [vmem:[%s171 + $0xd10] sm:$0xff]
        %v630 = vld [vmem:[%s171 + $0xd18] sm:$0xff]
        %v631 = vld [vmem:[%s171 + $0xd20] sm:$0xff]
        %v632 = vld [vmem:[%s171 + $0xd28] sm:$0xff]
        %v633 = vld [vmem:[%s171 + $0xd30] sm:$0xff]
        %v634 = vld [vmem:[%s171 + $0xd38] sm:$0xff]
        %v635 = vld [vmem:[%s171 + $0xd40] sm:$0xff]
        %v636 = vld [vmem:[%s171 + $0xd48] sm:$0xff]
        %v637 = vld [vmem:[%s171 + $0xd50] sm:$0xff]
        %v638 = vld [vmem:[%s171 + $0xd58] sm:$0xff]
        %v639 = vld [vmem:[%s171 + $0xd60] sm:$0xff]
        %v640 = vld [vmem:[%s171 + $0xd68] sm:$0xff]
        %v641 = vld [vmem:[%s171 + $0xd70] sm:$0xff]
        %v642 = vld [vmem:[%s171 + $0xd78] sm:$0xff]
        %v643 = vld [vmem:[%s171 + $0xd80] sm:$0xff]
        %v644 = vld [vmem:[%s171 + $0xd88] sm:$0xff]
        %v645 = vld [vmem:[%s171 + $0xd90] sm:$0xff]
        %v646 = vld [vmem:[%s171 + $0xd98] sm:$0xff]
        %v647 = vld [vmem:[%s171 + $0xda0] sm:$0xff]
        %v648 = vld [vmem:[%s171 + $0xda8] sm:$0xff]
        %v649 = vld [vmem:[%s171 + $0xdb0] sm:$0xff]
        %v650 = vld [vmem:[%s171 + $0xdb8] sm:$0xff]
        %v651 = vld [vmem:[%s171 + $0xdc0] sm:$0xff]
        %v652 = vld [vmem:[%s171 + $0xdc8] sm:$0xff]
        %v653 = vld [vmem:[%s171 + $0xdd0] sm:$0xff]
        %v654 = vld [vmem:[%s171 + $0xdd8] sm:$0xff]
        %v655 = vld [vmem:[%s171 + $0xde0] sm:$0xff]
        %v656 = vld [vmem:[%s171 + $0xde8] sm:$0xff]
        %v657 = vld [vmem:[%s171 + $0xdf0] sm:$0xff]
        %v658 = vld [vmem:[%s171 + $0xdf8] sm:$0xff]
        %v659 = vld [vmem:[%s171 + $0xe00] sm:$0xff]
        %v660 = vld [vmem:[%s171 + $0xe08] sm:$0xff]
        %v661 = vld [vmem:[%s171 + $0xe10] sm:$0xff]
        %v662 = vld [vmem:[%s171 + $0xe18] sm:$0xff]
        %v663 = vld [vmem:[%s171 + $0xe20] sm:$0xff]
        %v664 = vld [vmem:[%s171 + $0xe28] sm:$0xff]
        %v665 = vld [vmem:[%s171 + $0xe30] sm:$0xff]
        %v666 = vld [vmem:[%s171 + $0xe38] sm:$0xff]
        %v667 = vld [vmem:[%s171 + $0xe40] sm:$0xff]
        %v668 = vld [vmem:[%s171 + $0xe48] sm:$0xff]
        %v669 = vld [vmem:[%s171 + $0xe50] sm:$0xff]
        %v670 = vld [vmem:[%s171 + $0xe58] sm:$0xff]
        %v671 = vld [vmem:[%s171 + $0xe60] sm:$0xff]
        %v672 = vld [vmem:[%s171 + $0xe68] sm:$0xff]
        %v673 = vld [vmem:[%s171 + $0xe70] sm:$0xff]
        %v674 = vld [vmem:[%s171 + $0xe78] sm:$0xff]
        %v675 = vld [vmem:[%s171 + $0xe80] sm:$0xff]
        %v676 = vld [vmem:[%s171 + $0xe88] sm:$0xff]
        %v677 = vld [vmem:[%s171 + $0xe90] sm:$0xff]
        %v678 = vld [vmem:[%s171 + $0xe98] sm:$0xff]
        %v679 = vld [vmem:[%s171 + $0xea0] sm:$0xff]
        %v680 = vld [vmem:[%s171 + $0xea8] sm:$0xff]
        %v681 = vld [vmem:[%s171 + $0xeb0] sm:$0xff]
        %v682 = vld [vmem:[%s171 + $0xeb8] sm:$0xff]
        %v683 = vld [vmem:[%s171 + $0xec0] sm:$0xff]
        %v684 = vld [vmem:[%s171 + $0xec8] sm:$0xff]
        %v685 = vld [vmem:[%s171 + $0xed0] sm:$0xff]
        %v686 = vld [vmem:[%s171 + $0xed8] sm:$0xff]
        %v687 = vld [vmem:[%s171 + $0xee0] sm:$0xff]
        %v688 = vld [vmem:[%s171 + $0xee8] sm:$0xff]
        %v689 = vld [vmem:[%s171 + $0xef0] sm:$0xff]
        %v690 = vld [vmem:[%s171 + $0xef8] sm:$0xff]
        %v691 = vld [vmem:[%s171 + $0xf00] sm:$0xff]
        %v692 = vld [vmem:[%s171 + $0xf08] sm:$0xff]
        %v693 = vld [vmem:[%s171 + $0xf10] sm:$0xff]
        %v694 = vld [vmem:[%s171 + $0xf18] sm:$0xff]
        %v695 = vld [vmem:[%s171 + $0xf20] sm:$0xff]
        %v696 = vld [vmem:[%s171 + $0xf28] sm:$0xff]
        %v697 = vld [vmem:[%s171 + $0xf30] sm:$0xff]
        %v698 = vld [vmem:[%s171 + $0xf38] sm:$0xff]
        %v699 = vld [vmem:[%s171 + $0xf40] sm:$0xff]
        %v700 = vld [vmem:[%s171 + $0xf48] sm:$0xff]
        %v701 = vld [vmem:[%s171 + $0xf50] sm:$0xff]
        %v702 = vld [vmem:[%s171 + $0xf58] sm:$0xff]
        %v703 = vld [vmem:[%s171 + $0xf60] sm:$0xff]
        %v704 = vld [vmem:[%s171 + $0xf68] sm:$0xff]
        %v705 = vld [vmem:[%s171 + $0xf70] sm:$0xff]
        %v706 = vld [vmem:[%s171 + $0xf78] sm:$0xff]
        %v707 = vld [vmem:[%s171 + $0xf80] sm:$0xff]
        %v708 = vld [vmem:[%s171 + $0xf88] sm:$0xff]
        %v709 = vld [vmem:[%s171 + $0xf90] sm:$0xff]
        %v710 = vld [vmem:[%s171 + $0xf98] sm:$0xff]
        %v711 = vld [vmem:[%s171 + $0xfa0] sm:$0xff]
        %v712 = vld [vmem:[%s171 + $0xfa8] sm:$0xff]
        %v713 = vld [vmem:[%s171 + $0xfb0] sm:$0xff]
        %v714 = vld [vmem:[%s171 + $0xfb8] sm:$0xff]
        %v715 = vld [vmem:[%s171 + $0xfc0] sm:$0xff]
        %v716 = vld [vmem:[%s171 + $0xfc8] sm:$0xff]
        %v717 = vld [vmem:[%s171 + $0xfd0] sm:$0xff]
        %v718 = vld [vmem:[%s171 + $0xfd8] sm:$0xff]
        %v719 = vld [vmem:[%s171 + $0xfe0] sm:$0xff]
        %v720 = vld [vmem:[%s171 + $0xfe8] sm:$0xff]
        %v721 = vld [vmem:[%s171 + $0xff0] sm:$0xff]
        %v722 = vld [vmem:[%s171 + $0xff8] sm:$0xff]
        %v723 = vmul.f32 %v211, 2.0
        %v724 = vmul.f32 %v212, 2.0
        %v725 = vmul.f32 %v213, 2.0
        %v726 = vmul.f32 %v214, 2.0
        %v727 = vmul.f32 %v215, 2.0
        %v728 = vmul.f32 %v216, 2.0
        %v729 = vmul.f32 %v217, 2.0
        %v730 = vmul.f32 %v218, 2.0
        %v731 = vmul.f32 %v219, 2.0
        %v732 = vmul.f32 %v220, 2.0
        %v733 = vmul.f32 %v221, 2.0
        %v734 = vmul.f32 %v222, 2.0
        %v735 = vmul.f32 %v223, 2.0
        %v736 = vmul.f32 %v224, 2.0
        %v737 = vmul.f32 %v225, 2.0
        %v738 = vmul.f32 %v226, 2.0
        %v739 = vmul.f32 %v227, 2.0
        %v740 = vmul.f32 %v228, 2.0
        %v741 = vmul.f32 %v229, 2.0
        %v742 = vmul.f32 %v230, 2.0
        %v743 = vmul.f32 %v231, 2.0
        %v744 = vmul.f32 %v232, 2.0
        %v745 = vmul.f32 %v233, 2.0
        %v746 = vmul.f32 %v234, 2.0
        %v747 = vmul.f32 %v235, 2.0
        %v748 = vmul.f32 %v236, 2.0
        %v749 = vmul.f32 %v237, 2.0
        %v750 = vmul.f32 %v238, 2.0
        %v751 = vmul.f32 %v239, 2.0
        %v752 = vmul.f32 %v240, 2.0
        %v753 = vmul.f32 %v241, 2.0
        %v754 = vmul.f32 %v242, 2.0
        %v755 = vmul.f32 %v243, 2.0
        %v756 = vmul.f32 %v244, 2.0
        %v757 = vmul.f32 %v245, 2.0
        %v758 = vmul.f32 %v246, 2.0
        %v759 = vmul.f32 %v247, 2.0
        %v760 = vmul.f32 %v248, 2.0
        %v761 = vmul.f32 %v249, 2.0
        %v762 = vmul.f32 %v250, 2.0
        %v763 = vmul.f32 %v251, 2.0
        %v764 = vmul.f32 %v252, 2.0
        %v765 = vmul.f32 %v253, 2.0
        %v766 = vmul.f32 %v254, 2.0
        %v767 = vmul.f32 %v255, 2.0
        %v768 = vmul.f32 %v256, 2.0
        %v769 = vmul.f32 %v257, 2.0
        %v770 = vmul.f32 %v258, 2.0
        %v771 = vmul.f32 %v259, 2.0
        %v772 = vmul.f32 %v260, 2.0
        %v773 = vmul.f32 %v261, 2.0
        %v774 = vmul.f32 %v262, 2.0
        %v775 = vmul.f32 %v263, 2.0
        %v776 = vmul.f32 %v264, 2.0
        %v777 = vmul.f32 %v265, 2.0
        %v778 = vmul.f32 %v266, 2.0
        %v779 = vmul.f32 %v267, 2.0
        %v780 = vmul.f32 %v268, 2.0
        %v781 = vmul.f32 %v269, 2.0
        %v782 = vmul.f32 %v270, 2.0
        %v783 = vmul.f32 %v271, 2.0
        %v784 = vmul.f32 %v272, 2.0
        %v785 = vmul.f32 %v273, 2.0
        %v786 = vmul.f32 %v274, 2.0
        %v787 = vmul.f32 %v275, 2.0
        %v788 = vmul.f32 %v276, 2.0
        %v789 = vmul.f32 %v277, 2.0
        %v790 = vmul.f32 %v278, 2.0
        %v791 = vmul.f32 %v279, 2.0
        %v792 = vmul.f32 %v280, 2.0
        %v793 = vmul.f32 %v281, 2.0
        %v794 = vmul.f32 %v282, 2.0
        %v795 = vmul.f32 %v283, 2.0
        %v796 = vmul.f32 %v284, 2.0
        %v797 = vmul.f32 %v285, 2.0
        %v798 = vmul.f32 %v286, 2.0
        %v799 = vmul.f32 %v287, 2.0
        %v800 = vmul.f32 %v288, 2.0
        %v801 = vmul.f32 %v289, 2.0
        %v802 = vmul.f32 %v290, 2.0
        %v803 = vmul.f32 %v291, 2.0
        %v804 = vmul.f32 %v292, 2.0
        %v805 = vmul.f32 %v293, 2.0
        %v806 = vmul.f32 %v294, 2.0
        %v807 = vmul.f32 %v295, 2.0
        %v808 = vmul.f32 %v296, 2.0
        %v809 = vmul.f32 %v297, 2.0
        %v810 = vmul.f32 %v298, 2.0
        %v811 = vmul.f32 %v299, 2.0
        %v812 = vmul.f32 %v300, 2.0
        %v813 = vmul.f32 %v301, 2.0
        %v814 = vmul.f32 %v302, 2.0
        %v815 = vmul.f32 %v303, 2.0
        %v816 = vmul.f32 %v304, 2.0
        %v817 = vmul.f32 %v305, 2.0
        %v818 = vmul.f32 %v306, 2.0
        %v819 = vmul.f32 %v307, 2.0
        %v820 = vmul.f32 %v308, 2.0
        %v821 = vmul.f32 %v309, 2.0
        %v822 = vmul.f32 %v310, 2.0
        %v823 = vmul.f32 %v311, 2.0
        %v824 = vmul.f32 %v312, 2.0
        %v825 = vmul.f32 %v313, 2.0
        %v826 = vmul.f32 %v314, 2.0
        %v827 = vmul.f32 %v315, 2.0
        %v828 = vmul.f32 %v316, 2.0
        %v829 = vmul.f32 %v317, 2.0
        %v830 = vmul.f32 %v318, 2.0
        %v831 = vmul.f32 %v319, 2.0
        %v832 = vmul.f32 %v320, 2.0
        %v833 = vmul.f32 %v321, 2.0
        %v834 = vmul.f32 %v322, 2.0
        %v835 = vmul.f32 %v323, 2.0
        %v836 = vmul.f32 %v324, 2.0
        %v837 = vmul.f32 %v325, 2.0
        %v838 = vmul.f32 %v326, 2.0
        %v839 = vmul.f32 %v327, 2.0
        %v840 = vmul.f32 %v328, 2.0
        %v841 = vmul.f32 %v329, 2.0
        %v842 = vmul.f32 %v330, 2.0
        %v843 = vmul.f32 %v331, 2.0
        %v844 = vmul.f32 %v332, 2.0
        %v845 = vmul.f32 %v333, 2.0
        %v846 = vmul.f32 %v334, 2.0
        %v847 = vmul.f32 %v335, 2.0
        %v848 = vmul.f32 %v336, 2.0
        %v849 = vmul.f32 %v337, 2.0
        %v850 = vmul.f32 %v338, 2.0
        %v851 = vmul.f32 %v339, 2.0
        %v852 = vmul.f32 %v340, 2.0
        %v853 = vmul.f32 %v341, 2.0
        %v854 = vmul.f32 %v342, 2.0
        %v855 = vmul.f32 %v343, 2.0
        %v856 = vmul.f32 %v344, 2.0
        %v857 = vmul.f32 %v345, 2.0
        %v858 = vmul.f32 %v346, 2.0
        %v859 = vmul.f32 %v347, 2.0
        %v860 = vmul.f32 %v348, 2.0
        %v861 = vmul.f32 %v349, 2.0
        %v862 = vmul.f32 %v350, 2.0
        %v863 = vmul.f32 %v351, 2.0
        %v864 = vmul.f32 %v352, 2.0
        %v865 = vmul.f32 %v353, 2.0
        %v866 = vmul.f32 %v354, 2.0
        %v867 = vmul.f32 %v355, 2.0
        %v868 = vmul.f32 %v356, 2.0
        %v869 = vmul.f32 %v357, 2.0
        %v870 = vmul.f32 %v358, 2.0
        %v871 = vmul.f32 %v359, 2.0
        %v872 = vmul.f32 %v360, 2.0
        %v873 = vmul.f32 %v361, 2.0
        %v874 = vmul.f32 %v362, 2.0
        %v875 = vmul.f32 %v363, 2.0
        %v876 = vmul.f32 %v364, 2.0
        %v877 = vmul.f32 %v365, 2.0
        %v878 = vmul.f32 %v366, 2.0
        %v879 = vmul.f32 %v367, 2.0
        %v880 = vmul.f32 %v368, 2.0
        %v881 = vmul.f32 %v369, 2.0
        %v882 = vmul.f32 %v370, 2.0
        %v883 = vmul.f32 %v371, 2.0
        %v884 = vmul.f32 %v372, 2.0
        %v885 = vmul.f32 %v373, 2.0
        %v886 = vmul.f32 %v374, 2.0
        %v887 = vmul.f32 %v375, 2.0
        %v888 = vmul.f32 %v376, 2.0
        %v889 = vmul.f32 %v377, 2.0
        %v890 = vmul.f32 %v378, 2.0
        %v891 = vmul.f32 %v379, 2.0
        %v892 = vmul.f32 %v380, 2.0
        %v893 = vmul.f32 %v381, 2.0
        %v894 = vmul.f32 %v382, 2.0
        %v895 = vmul.f32 %v383, 2.0
        %v896 = vmul.f32 %v384, 2.0
        %v897 = vmul.f32 %v385, 2.0
        %v898 = vmul.f32 %v386, 2.0
        %v899 = vmul.f32 %v387, 2.0
        %v900 = vmul.f32 %v388, 2.0
        %v901 = vmul.f32 %v389, 2.0
        %v902 = vmul.f32 %v390, 2.0
        %v903 = vmul.f32 %v391, 2.0
        %v904 = vmul.f32 %v392, 2.0
        %v905 = vmul.f32 %v393, 2.0
        %v906 = vmul.f32 %v394, 2.0
        %v907 = vmul.f32 %v395, 2.0
        %v908 = vmul.f32 %v396, 2.0
        %v909 = vmul.f32 %v397, 2.0
        %v910 = vmul.f32 %v398, 2.0
        %v911 = vmul.f32 %v399, 2.0
        %v912 = vmul.f32 %v400, 2.0
        %v913 = vmul.f32 %v401, 2.0
        %v914 = vmul.f32 %v402, 2.0
        %v915 = vmul.f32 %v403, 2.0
        %v916 = vmul.f32 %v404, 2.0
        %v917 = vmul.f32 %v405, 2.0
        %v918 = vmul.f32 %v406, 2.0
        %v919 = vmul.f32 %v407, 2.0
        %v920 = vmul.f32 %v408, 2.0
        %v921 = vmul.f32 %v409, 2.0
        %v922 = vmul.f32 %v410, 2.0
        %v923 = vmul.f32 %v411, 2.0
        %v924 = vmul.f32 %v412, 2.0
        %v925 = vmul.f32 %v413, 2.0
        %v926 = vmul.f32 %v414, 2.0
        %v927 = vmul.f32 %v415, 2.0
        %v928 = vmul.f32 %v416, 2.0
        %v929 = vmul.f32 %v417, 2.0
        %v930 = vmul.f32 %v418, 2.0
        %v931 = vmul.f32 %v419, 2.0
        %v932 = vmul.f32 %v420, 2.0
        %v933 = vmul.f32 %v421, 2.0
        %v934 = vmul.f32 %v422, 2.0
        %v935 = vmul.f32 %v423, 2.0
        %v936 = vmul.f32 %v424, 2.0
        %v937 = vmul.f32 %v425, 2.0
        %v938 = vmul.f32 %v426, 2.0
        %v939 = vmul.f32 %v427, 2.0
        %v940 = vmul.f32 %v428, 2.0
        %v941 = vmul.f32 %v429, 2.0
        %v942 = vmul.f32 %v430, 2.0
        %v943 = vmul.f32 %v431, 2.0
        %v944 = vmul.f32 %v432, 2.0
        %v945 = vmul.f32 %v433, 2.0
        %v946 = vmul.f32 %v434, 2.0
        %v947 = vmul.f32 %v435, 2.0
        %v948 = vmul.f32 %v436, 2.0
        %v949 = vmul.f32 %v437, 2.0
        %v950 = vmul.f32 %v438, 2.0
        %v951 = vmul.f32 %v439, 2.0
        %v952 = vmul.f32 %v440, 2.0
        %v953 = vmul.f32 %v441, 2.0
        %v954 = vmul.f32 %v442, 2.0
        %v955 = vmul.f32 %v443, 2.0
        %v956 = vmul.f32 %v444, 2.0
        %v957 = vmul.f32 %v445, 2.0
        %v958 = vmul.f32 %v446, 2.0
        %v959 = vmul.f32 %v447, 2.0
        %v960 = vmul.f32 %v448, 2.0
        %v961 = vmul.f32 %v449, 2.0
        %v962 = vmul.f32 %v450, 2.0
        %v963 = vmul.f32 %v451, 2.0
        %v964 = vmul.f32 %v452, 2.0
        %v965 = vmul.f32 %v453, 2.0
        %v966 = vmul.f32 %v454, 2.0
        %v967 = vmul.f32 %v455, 2.0
        %v968 = vmul.f32 %v456, 2.0
        %v969 = vmul.f32 %v457, 2.0
        %v970 = vmul.f32 %v458, 2.0
        %v971 = vmul.f32 %v459, 2.0
        %v972 = vmul.f32 %v460, 2.0
        %v973 = vmul.f32 %v461, 2.0
        %v974 = vmul.f32 %v462, 2.0
        %v975 = vmul.f32 %v463, 2.0
        %v976 = vmul.f32 %v464, 2.0
        %v977 = vmul.f32 %v465, 2.0
        %v978 = vmul.f32 %v466, 2.0
        %v979 = vmul.f32 %v467, 2.0
        %v980 = vmul.f32 %v468, 2.0
        %v981 = vmul.f32 %v469, 2.0
        %v982 = vmul.f32 %v470, 2.0
        %v983 = vmul.f32 %v471, 2.0
        %v984 = vmul.f32 %v472, 2.0
        %v985 = vmul.f32 %v473, 2.0
        %v986 = vmul.f32 %v474, 2.0
        %v987 = vmul.f32 %v475, 2.0
        %v988 = vmul.f32 %v476, 2.0
        %v989 = vmul.f32 %v477, 2.0
        %v990 = vmul.f32 %v478, 2.0
        %v991 = vmul.f32 %v479, 2.0
        %v992 = vmul.f32 %v480, 2.0
        %v993 = vmul.f32 %v481, 2.0
        %v994 = vmul.f32 %v482, 2.0
        %v995 = vmul.f32 %v483, 2.0
        %v996 = vmul.f32 %v484, 2.0
        %v997 = vmul.f32 %v485, 2.0
        %v998 = vmul.f32 %v486, 2.0
        %v999 = vmul.f32 %v487, 2.0
        %v1000 = vmul.f32 %v488, 2.0
        %v1001 = vmul.f32 %v489, 2.0
        %v1002 = vmul.f32 %v490, 2.0
        %v1003 = vmul.f32 %v491, 2.0
        %v1004 = vmul.f32 %v492, 2.0
        %v1005 = vmul.f32 %v493, 2.0
        %v1006 = vmul.f32 %v494, 2.0
        %v1007 = vmul.f32 %v495, 2.0
        %v1008 = vmul.f32 %v496, 2.0
        %v1009 = vmul.f32 %v497, 2.0
        %v1010 = vmul.f32 %v498, 2.0
        %v1011 = vmul.f32 %v499, 2.0
        %v1012 = vmul.f32 %v500, 2.0
        %v1013 = vmul.f32 %v501, 2.0
        %v1014 = vmul.f32 %v502, 2.0
        %v1015 = vmul.f32 %v503, 2.0
        %v1016 = vmul.f32 %v504, 2.0
        %v1017 = vmul.f32 %v505, 2.0
        %v1018 = vmul.f32 %v506, 2.0
        %v1019 = vmul.f32 %v507, 2.0
        %v1020 = vmul.f32 %v508, 2.0
        %v1021 = vmul.f32 %v509, 2.0
        %v1022 = vmul.f32 %v510, 2.0
        %v1023 = vmul.f32 %v511, 2.0
        %v1024 = vmul.f32 %v512, 2.0
        %v1025 = vmul.f32 %v513, 2.0
        %v1026 = vmul.f32 %v514, 2.0
        %v1027 = vmul.f32 %v515, 2.0
        %v1028 = vmul.f32 %v516, 2.0
        %v1029 = vmul.f32 %v517, 2.0
        %v1030 = vmul.f32 %v518, 2.0
        %v1031 = vmul.f32 %v519, 2.0
        %v1032 = vmul.f32 %v520, 2.0
        %v1033 = vmul.f32 %v521, 2.0
        %v1034 = vmul.f32 %v522, 2.0
        %v1035 = vmul.f32 %v523, 2.0
        %v1036 = vmul.f32 %v524, 2.0
        %v1037 = vmul.f32 %v525, 2.0
        %v1038 = vmul.f32 %v526, 2.0
        %v1039 = vmul.f32 %v527, 2.0
        %v1040 = vmul.f32 %v528, 2.0
        %v1041 = vmul.f32 %v529, 2.0
        %v1042 = vmul.f32 %v530, 2.0
        %v1043 = vmul.f32 %v531, 2.0
        %v1044 = vmul.f32 %v532, 2.0
        %v1045 = vmul.f32 %v533, 2.0
        %v1046 = vmul.f32 %v534, 2.0
        %v1047 = vmul.f32 %v535, 2.0
        %v1048 = vmul.f32 %v536, 2.0
        %v1049 = vmul.f32 %v537, 2.0
        %v1050 = vmul.f32 %v538, 2.0
        %v1051 = vmul.f32 %v539, 2.0
        %v1052 = vmul.f32 %v540, 2.0
        %v1053 = vmul.f32 %v541, 2.0
        %v1054 = vmul.f32 %v542, 2.0
        %v1055 = vmul.f32 %v543, 2.0
        %v1056 = vmul.f32 %v544, 2.0
        %v1057 = vmul.f32 %v545, 2.0
        %v1058 = vmul.f32 %v546, 2.0
        %v1059 = vmul.f32 %v547, 2.0
        %v1060 = vmul.f32 %v548, 2.0
        %v1061 = vmul.f32 %v549, 2.0
        %v1062 = vmul.f32 %v550, 2.0
        %v1063 = vmul.f32 %v551, 2.0
        %v1064 = vmul.f32 %v552, 2.0
        %v1065 = vmul.f32 %v553, 2.0
        %v1066 = vmul.f32 %v554, 2.0
        %v1067 = vmul.f32 %v555, 2.0
        %v1068 = vmul.f32 %v556, 2.0
        %v1069 = vmul.f32 %v557, 2.0
        %v1070 = vmul.f32 %v558, 2.0
        %v1071 = vmul.f32 %v559, 2.0
        %v1072 = vmul.f32 %v560, 2.0
        %v1073 = vmul.f32 %v561, 2.0
        %v1074 = vmul.f32 %v562, 2.0
        %v1075 = vmul.f32 %v563, 2.0
        %v1076 = vmul.f32 %v564, 2.0
        %v1077 = vmul.f32 %v565, 2.0
        %v1078 = vmul.f32 %v566, 2.0
        %v1079 = vmul.f32 %v567, 2.0
        %v1080 = vmul.f32 %v568, 2.0
        %v1081 = vmul.f32 %v569, 2.0
        %v1082 = vmul.f32 %v570, 2.0
        %v1083 = vmul.f32 %v571, 2.0
        %v1084 = vmul.f32 %v572, 2.0
        %v1085 = vmul.f32 %v573, 2.0
        %v1086 = vmul.f32 %v574, 2.0
        %v1087 = vmul.f32 %v575, 2.0
        %v1088 = vmul.f32 %v576, 2.0
        %v1089 = vmul.f32 %v577, 2.0
        %v1090 = vmul.f32 %v578, 2.0
        %v1091 = vmul.f32 %v579, 2.0
        %v1092 = vmul.f32 %v580, 2.0
        %v1093 = vmul.f32 %v581, 2.0
        %v1094 = vmul.f32 %v582, 2.0
        %v1095 = vmul.f32 %v583, 2.0
        %v1096 = vmul.f32 %v584, 2.0
        %v1097 = vmul.f32 %v585, 2.0
        %v1098 = vmul.f32 %v586, 2.0
        %v1099 = vmul.f32 %v587, 2.0
        %v1100 = vmul.f32 %v588, 2.0
        %v1101 = vmul.f32 %v589, 2.0
        %v1102 = vmul.f32 %v590, 2.0
        %v1103 = vmul.f32 %v591, 2.0
        %v1104 = vmul.f32 %v592, 2.0
        %v1105 = vmul.f32 %v593, 2.0
        %v1106 = vmul.f32 %v594, 2.0
        %v1107 = vmul.f32 %v595, 2.0
        %v1108 = vmul.f32 %v596, 2.0
        %v1109 = vmul.f32 %v597, 2.0
        %v1110 = vmul.f32 %v598, 2.0
        %v1111 = vmul.f32 %v599, 2.0
        %v1112 = vmul.f32 %v600, 2.0
        %v1113 = vmul.f32 %v601, 2.0
        %v1114 = vmul.f32 %v602, 2.0
        %v1115 = vmul.f32 %v603, 2.0
        %v1116 = vmul.f32 %v604, 2.0
        %v1117 = vmul.f32 %v605, 2.0
        %v1118 = vmul.f32 %v606, 2.0
        %v1119 = vmul.f32 %v607, 2.0
        %v1120 = vmul.f32 %v608, 2.0
        %v1121 = vmul.f32 %v609, 2.0
        %v1122 = vmul.f32 %v610, 2.0
        %v1123 = vmul.f32 %v611, 2.0
        %v1124 = vmul.f32 %v612, 2.0
        %v1125 = vmul.f32 %v613, 2.0
        %v1126 = vmul.f32 %v614, 2.0
        %v1127 = vmul.f32 %v615, 2.0
        %v1128 = vmul.f32 %v616, 2.0
        %v1129 = vmul.f32 %v617, 2.0
        %v1130 = vmul.f32 %v618, 2.0
        %v1131 = vmul.f32 %v619, 2.0
        %v1132 = vmul.f32 %v620, 2.0
        %v1133 = vmul.f32 %v621, 2.0
        %v1134 = vmul.f32 %v622, 2.0
        %v1135 = vmul.f32 %v623, 2.0
        %v1136 = vmul.f32 %v624, 2.0
        %v1137 = vmul.f32 %v625, 2.0
        %v1138 = vmul.f32 %v626, 2.0
        %v1139 = vmul.f32 %v627, 2.0
        %v1140 = vmul.f32 %v628, 2.0
        %v1141 = vmul.f32 %v629, 2.0
        %v1142 = vmul.f32 %v630, 2.0
        %v1143 = vmul.f32 %v631, 2.0
        %v1144 = vmul.f32 %v632, 2.0
        %v1145 = vmul.f32 %v633, 2.0
        %v1146 = vmul.f32 %v634, 2.0
        %v1147 = vmul.f32 %v635, 2.0
        %v1148 = vmul.f32 %v636, 2.0
        %v1149 = vmul.f32 %v637, 2.0
        %v1150 = vmul.f32 %v638, 2.0
        %v1151 = vmul.f32 %v639, 2.0
        %v1152 = vmul.f32 %v640, 2.0
        %v1153 = vmul.f32 %v641, 2.0
        %v1154 = vmul.f32 %v642, 2.0
        %v1155 = vmul.f32 %v643, 2.0
        %v1156 = vmul.f32 %v644, 2.0
        %v1157 = vmul.f32 %v645, 2.0
        %v1158 = vmul.f32 %v646, 2.0
        %v1159 = vmul.f32 %v647, 2.0
        %v1160 = vmul.f32 %v648, 2.0
        %v1161 = vmul.f32 %v649, 2.0
        %v1162 = vmul.f32 %v650, 2.0
        %v1163 = vmul.f32 %v651, 2.0
        %v1164 = vmul.f32 %v652, 2.0
        %v1165 = vmul.f32 %v653, 2.0
        %v1166 = vmul.f32 %v654, 2.0
        %v1167 = vmul.f32 %v655, 2.0
        %v1168 = vmul.f32 %v656, 2.0
        %v1169 = vmul.f32 %v657, 2.0
        %v1170 = vmul.f32 %v658, 2.0
        %v1171 = vmul.f32 %v659, 2.0
        %v1172 = vmul.f32 %v660, 2.0
        %v1173 = vmul.f32 %v661, 2.0
        %v1174 = vmul.f32 %v662, 2.0
        %v1175 = vmul.f32 %v663, 2.0
        %v1176 = vmul.f32 %v664, 2.0
        %v1177 = vmul.f32 %v665, 2.0
        %v1178 = vmul.f32 %v666, 2.0
        %v1179 = vmul.f32 %v667, 2.0
        %v1180 = vmul.f32 %v668, 2.0
        %v1181 = vmul.f32 %v669, 2.0
        %v1182 = vmul.f32 %v670, 2.0
        %v1183 = vmul.f32 %v671, 2.0
        %v1184 = vmul.f32 %v672, 2.0
        %v1185 = vmul.f32 %v673, 2.0
        %v1186 = vmul.f32 %v674, 2.0
        %v1187 = vmul.f32 %v675, 2.0
        %v1188 = vmul.f32 %v676, 2.0
        %v1189 = vmul.f32 %v677, 2.0
        %v1190 = vmul.f32 %v678, 2.0
        %v1191 = vmul.f32 %v679, 2.0
        %v1192 = vmul.f32 %v680, 2.0
        %v1193 = vmul.f32 %v681, 2.0
        %v1194 = vmul.f32 %v682, 2.0
        %v1195 = vmul.f32 %v683, 2.0
        %v1196 = vmul.f32 %v684, 2.0
        %v1197 = vmul.f32 %v685, 2.0
        %v1198 = vmul.f32 %v686, 2.0
        %v1199 = vmul.f32 %v687, 2.0
        %v1200 = vmul.f32 %v688, 2.0
        %v1201 = vmul.f32 %v689, 2.0
        %v1202 = vmul.f32 %v690, 2.0
        %v1203 = vmul.f32 %v691, 2.0
        %v1204 = vmul.f32 %v692, 2.0
        %v1205 = vmul.f32 %v693, 2.0
        %v1206 = vmul.f32 %v694, 2.0
        %v1207 = vmul.f32 %v695, 2.0
        %v1208 = vmul.f32 %v696, 2.0
        %v1209 = vmul.f32 %v697, 2.0
        %v1210 = vmul.f32 %v698, 2.0
        %v1211 = vmul.f32 %v699, 2.0
        %v1212 = vmul.f32 %v700, 2.0
        %v1213 = vmul.f32 %v701, 2.0
        %v1214 = vmul.f32 %v702, 2.0
        %v1215 = vmul.f32 %v703, 2.0
        %v1216 = vmul.f32 %v704, 2.0
        %v1217 = vmul.f32 %v705, 2.0
        %v1218 = vmul.f32 %v706, 2.0
        %v1219 = vmul.f32 %v707, 2.0
        %v1220 = vmul.f32 %v708, 2.0
        %v1221 = vmul.f32 %v709, 2.0
        %v1222 = vmul.f32 %v710, 2.0
        %v1223 = vmul.f32 %v711, 2.0
        %v1224 = vmul.f32 %v712, 2.0
        %v1225 = vmul.f32 %v713, 2.0
        %v1226 = vmul.f32 %v714, 2.0
        %v1227 = vmul.f32 %v715, 2.0
        %v1228 = vmul.f32 %v716, 2.0
        %v1229 = vmul.f32 %v717, 2.0
        %v1230 = vmul.f32 %v718, 2.0
        %v1231 = vmul.f32 %v719, 2.0
        %v1232 = vmul.f32 %v720, 2.0
        %v1233 = vmul.f32 %v721, 2.0
        %v1234 = vmul.f32 %v722, 2.0
        %v1235 = vld [vmem:[%s181] sm:$0xff]
        %v1236 = vld [vmem:[%s181 + $0x8] sm:$0xff]
        %v1237 = vld [vmem:[%s181 + $0x10] sm:$0xff]
        %v1238 = vld [vmem:[%s181 + $0x18] sm:$0xff]
        %v1239 = vld [vmem:[%s181 + $0x20] sm:$0xff]
        %v1240 = vld [vmem:[%s181 + $0x28] sm:$0xff]
        %v1241 = vld [vmem:[%s181 + $0x30] sm:$0xff]
        %v1242 = vld [vmem:[%s181 + $0x38] sm:$0xff]
        %v1243 = vld [vmem:[%s181 + $0x40] sm:$0xff]
        %v1244 = vld [vmem:[%s181 + $0x48] sm:$0xff]
        %v1245 = vld [vmem:[%s181 + $0x50] sm:$0xff]
        %v1246 = vld [vmem:[%s181 + $0x58] sm:$0xff]
        %v1247 = vld [vmem:[%s181 + $0x60] sm:$0xff]
        %v1248 = vld [vmem:[%s181 + $0x68] sm:$0xff]
        %v1249 = vld [vmem:[%s181 + $0x70] sm:$0xff]
        %v1250 = vld [vmem:[%s181 + $0x78] sm:$0xff]
        %v1251 = vld [vmem:[%s181 + $0x80] sm:$0xff]
        %v1252 = vld [vmem:[%s181 + $0x88] sm:$0xff]
        %v1253 = vld [vmem:[%s181 + $0x90] sm:$0xff]
        %v1254 = vld [vmem:[%s181 + $0x98] sm:$0xff]
        %v1255 = vld [vmem:[%s181 + $0xa0] sm:$0xff]
        %v1256 = vld [vmem:[%s181 + $0xa8] sm:$0xff]
        %v1257 = vld [vmem:[%s181 + $0xb0] sm:$0xff]
        %v1258 = vld [vmem:[%s181 + $0xb8] sm:$0xff]
        %v1259 = vld [vmem:[%s181 + $0xc0] sm:$0xff]
        %v1260 = vld [vmem:[%s181 + $0xc8] sm:$0xff]
        %v1261 = vld [vmem:[%s181 + $0xd0] sm:$0xff]
        %v1262 = vld [vmem:[%s181 + $0xd8] sm:$0xff]
        %v1263 = vld [vmem:[%s181 + $0xe0] sm:$0xff]
        %v1264 = vld [vmem:[%s181 + $0xe8] sm:$0xff]
        %v1265 = vld [vmem:[%s181 + $0xf0] sm:$0xff]
        %v1266 = vld [vmem:[%s181 + $0xf8] sm:$0xff]
        %v1267 = vld [vmem:[%s181 + $0x100] sm:$0xff]
        %v1268 = vld [vmem:[%s181 + $0x108] sm:$0xff]
        %v1269 = vld [vmem:[%s181 + $0x110] sm:$0xff]
        %v1270 = vld [vmem:[%s181 + $0x118] sm:$0xff]
        %v1271 = vld [vmem:[%s181 + $0x120] sm:$0xff]
        %v1272 = vld [vmem:[%s181 + $0x128] sm:$0xff]
        %v1273 = vld [vmem:[%s181 + $0x130] sm:$0xff]
        %v1274 = vld [vmem:[%s181 + $0x138] sm:$0xff]
        %v1275 = vld [vmem:[%s181 + $0x140] sm:$0xff]
        %v1276 = vld [vmem:[%s181 + $0x148] sm:$0xff]
        %v1277 = vld [vmem:[%s181 + $0x150] sm:$0xff]
        %v1278 = vld [vmem:[%s181 + $0x158] sm:$0xff]
        %v1279 = vld [vmem:[%s181 + $0x160] sm:$0xff]
        %v1280 = vld [vmem:[%s181 + $0x168] sm:$0xff]
        %v1281 = vld [vmem:[%s181 + $0x170] sm:$0xff]
        %v1282 = vld [vmem:[%s181 + $0x178] sm:$0xff]
        %v1283 = vld [vmem:[%s181 + $0x180] sm:$0xff]
        %v1284 = vld [vmem:[%s181 + $0x188] sm:$0xff]
        %v1285 = vld [vmem:[%s181 + $0x190] sm:$0xff]
        %v1286 = vld [vmem:[%s181 + $0x198] sm:$0xff]
        %v1287 = vld [vmem:[%s181 + $0x1a0] sm:$0xff]
        %v1288 = vld [vmem:[%s181 + $0x1a8] sm:$0xff]
        %v1289 = vld [vmem:[%s181 + $0x1b0] sm:$0xff]
        %v1290 = vld [vmem:[%s181 + $0x1b8] sm:$0xff]
        %v1291 = vld [vmem:[%s181 + $0x1c0] sm:$0xff]
        %v1292 = vld [vmem:[%s181 + $0x1c8] sm:$0xff]
        %v1293 = vld [vmem:[%s181 + $0x1d0] sm:$0xff]
        %v1294 = vld [vmem:[%s181 + $0x1d8] sm:$0xff]
        %v1295 = vld [vmem:[%s181 + $0x1e0] sm:$0xff]
        %v1296 = vld [vmem:[%s181 + $0x1e8] sm:$0xff]
        %v1297 = vld [vmem:[%s181 + $0x1f0] sm:$0xff]
        %v1298 = vld [vmem:[%s181 + $0x1f8] sm:$0xff]
        %v1299 = vld [vmem:[%s181 + $0x200] sm:$0xff]
        %v1300 = vld [vmem:[%s181 + $0x208] sm:$0xff]
        %v1301 = vld [vmem:[%s181 + $0x210] sm:$0xff]
        %v1302 = vld [vmem:[%s181 + $0x218] sm:$0xff]
        %v1303 = vld [vmem:[%s181 + $0x220] sm:$0xff]
        %v1304 = vld [vmem:[%s181 + $0x228] sm:$0xff]
        %v1305 = vld [vmem:[%s181 + $0x230] sm:$0xff]
        %v1306 = vld [vmem:[%s181 + $0x238] sm:$0xff]
        %v1307 = vld [vmem:[%s181 + $0x240] sm:$0xff]
        %v1308 = vld [vmem:[%s181 + $0x248] sm:$0xff]
        %v1309 = vld [vmem:[%s181 + $0x250] sm:$0xff]
        %v1310 = vld [vmem:[%s181 + $0x258] sm:$0xff]
        %v1311 = vld [vmem:[%s181 + $0x260] sm:$0xff]
        %v1312 = vld [vmem:[%s181 + $0x268] sm:$0xff]
        %v1313 = vld [vmem:[%s181 + $0x270] sm:$0xff]
        %v1314 = vld [vmem:[%s181 + $0x278] sm:$0xff]
        %v1315 = vld [vmem:[%s181 + $0x280] sm:$0xff]
        %v1316 = vld [vmem:[%s181 + $0x288] sm:$0xff]
        %v1317 = vld [vmem:[%s181 + $0x290] sm:$0xff]
        %v1318 = vld [vmem:[%s181 + $0x298] sm:$0xff]
        %v1319 = vld [vmem:[%s181 + $0x2a0] sm:$0xff]
        %v1320 = vld [vmem:[%s181 + $0x2a8] sm:$0xff]
        %v1321 = vld [vmem:[%s181 + $0x2b0] sm:$0xff]
        %v1322 = vld [vmem:[%s181 + $0x2b8] sm:$0xff]
        %v1323 = vld [vmem:[%s181 + $0x2c0] sm:$0xff]
        %v1324 = vld [vmem:[%s181 + $0x2c8] sm:$0xff]
        %v1325 = vld [vmem:[%s181 + $0x2d0] sm:$0xff]
        %v1326 = vld [vmem:[%s181 + $0x2d8] sm:$0xff]
        %v1327 = vld [vmem:[%s181 + $0x2e0] sm:$0xff]
        %v1328 = vld [vmem:[%s181 + $0x2e8] sm:$0xff]
        %v1329 = vld [vmem:[%s181 + $0x2f0] sm:$0xff]
        %v1330 = vld [vmem:[%s181 + $0x2f8] sm:$0xff]
        %v1331 = vld [vmem:[%s181 + $0x300] sm:$0xff]
        %v1332 = vld [vmem:[%s181 + $0x308] sm:$0xff]
        %v1333 = vld [vmem:[%s181 + $0x310] sm:$0xff]
        %v1334 = vld [vmem:[%s181 + $0x318] sm:$0xff]
        %v1335 = vld [vmem:[%s181 + $0x320] sm:$0xff]
        %v1336 = vld [vmem:[%s181 + $0x328] sm:$0xff]
        %v1337 = vld [vmem:[%s181 + $0x330] sm:$0xff]
        %v1338 = vld [vmem:[%s181 + $0x338] sm:$0xff]
        %v1339 = vld [vmem:[%s181 + $0x340] sm:$0xff]
        %v1340 = vld [vmem:[%s181 + $0x348] sm:$0xff]
        %v1341 = vld [vmem:[%s181 + $0x350] sm:$0xff]
        %v1342 = vld [vmem:[%s181 + $0x358] sm:$0xff]
        %v1343 = vld [vmem:[%s181 + $0x360] sm:$0xff]
        %v1344 = vld [vmem:[%s181 + $0x368] sm:$0xff]
        %v1345 = vld [vmem:[%s181 + $0x370] sm:$0xff]
        %v1346 = vld [vmem:[%s181 + $0x378] sm:$0xff]
        %v1347 = vld [vmem:[%s181 + $0x380] sm:$0xff]
        %v1348 = vld [vmem:[%s181 + $0x388] sm:$0xff]
        %v1349 = vld [vmem:[%s181 + $0x390] sm:$0xff]
        %v1350 = vld [vmem:[%s181 + $0x398] sm:$0xff]
        %v1351 = vld [vmem:[%s181 + $0x3a0] sm:$0xff]
        %v1352 = vld [vmem:[%s181 + $0x3a8] sm:$0xff]
        %v1353 = vld [vmem:[%s181 + $0x3b0] sm:$0xff]
        %v1354 = vld [vmem:[%s181 + $0x3b8] sm:$0xff]
        %v1355 = vld [vmem:[%s181 + $0x3c0] sm:$0xff]
        %v1356 = vld [vmem:[%s181 + $0x3c8] sm:$0xff]
        %v1357 = vld [vmem:[%s181 + $0x3d0] sm:$0xff]
        %v1358 = vld [vmem:[%s181 + $0x3d8] sm:$0xff]
        %v1359 = vld [vmem:[%s181 + $0x3e0] sm:$0xff]
        %v1360 = vld [vmem:[%s181 + $0x3e8] sm:$0xff]
        %v1361 = vld [vmem:[%s181 + $0x3f0] sm:$0xff]
        %v1362 = vld [vmem:[%s181 + $0x3f8] sm:$0xff]
        %v1363 = vld [vmem:[%s181 + $0x400] sm:$0xff]
        %v1364 = vld [vmem:[%s181 + $0x408] sm:$0xff]
        %v1365 = vld [vmem:[%s181 + $0x410] sm:$0xff]
        %v1366 = vld [vmem:[%s181 + $0x418] sm:$0xff]
        %v1367 = vld [vmem:[%s181 + $0x420] sm:$0xff]
        %v1368 = vld [vmem:[%s181 + $0x428] sm:$0xff]
        %v1369 = vld [vmem:[%s181 + $0x430] sm:$0xff]
        %v1370 = vld [vmem:[%s181 + $0x438] sm:$0xff]
        %v1371 = vld [vmem:[%s181 + $0x440] sm:$0xff]
        %v1372 = vld [vmem:[%s181 + $0x448] sm:$0xff]
        %v1373 = vld [vmem:[%s181 + $0x450] sm:$0xff]
        %v1374 = vld [vmem:[%s181 + $0x458] sm:$0xff]
        %v1375 = vld [vmem:[%s181 + $0x460] sm:$0xff]
        %v1376 = vld [vmem:[%s181 + $0x468] sm:$0xff]
        %v1377 = vld [vmem:[%s181 + $0x470] sm:$0xff]
        %v1378 = vld [vmem:[%s181 + $0x478] sm:$0xff]
        %v1379 = vld [vmem:[%s181 + $0x480] sm:$0xff]
        %v1380 = vld [vmem:[%s181 + $0x488] sm:$0xff]
        %v1381 = vld [vmem:[%s181 + $0x490] sm:$0xff]
        %v1382 = vld [vmem:[%s181 + $0x498] sm:$0xff]
        %v1383 = vld [vmem:[%s181 + $0x4a0] sm:$0xff]
        %v1384 = vld [vmem:[%s181 + $0x4a8] sm:$0xff]
        %v1385 = vld [vmem:[%s181 + $0x4b0] sm:$0xff]
        %v1386 = vld [vmem:[%s181 + $0x4b8] sm:$0xff]
        %v1387 = vld [vmem:[%s181 + $0x4c0] sm:$0xff]
        %v1388 = vld [vmem:[%s181 + $0x4c8] sm:$0xff]
        %v1389 = vld [vmem:[%s181 + $0x4d0] sm:$0xff]
        %v1390 = vld [vmem:[%s181 + $0x4d8] sm:$0xff]
        %v1391 = vld [vmem:[%s181 + $0x4e0] sm:$0xff]
        %v1392 = vld [vmem:[%s181 + $0x4e8] sm:$0xff]
        %v1393 = vld [vmem:[%s181 + $0x4f0] sm:$0xff]
        %v1394 = vld [vmem:[%s181 + $0x4f8] sm:$0xff]
        %v1395 = vld [vmem:[%s181 + $0x500] sm:$0xff]
        %v1396 = vld [vmem:[%s181 + $0x508] sm:$0xff]
        %v1397 = vld [vmem:[%s181 + $0x510] sm:$0xff]
        %v1398 = vld [vmem:[%s181 + $0x518] sm:$0xff]
        %v1399 = vld [vmem:[%s181 + $0x520] sm:$0xff]
        %v1400 = vld [vmem:[%s181 + $0x528] sm:$0xff]
        %v1401 = vld [vmem:[%s181 + $0x530] sm:$0xff]
        %v1402 = vld [vmem:[%s181 + $0x538] sm:$0xff]
        %v1403 = vld [vmem:[%s181 + $0x540] sm:$0xff]
        %v1404 = vld [vmem:[%s181 + $0x548] sm:$0xff]
        %v1405 = vld [vmem:[%s181 + $0x550] sm:$0xff]
        %v1406 = vld [vmem:[%s181 + $0x558] sm:$0xff]
        %v1407 = vld [vmem:[%s181 + $0x560] sm:$0xff]
        %v1408 = vld [vmem:[%s181 + $0x568] sm:$0xff]
        %v1409 = vld [vmem:[%s181 + $0x570] sm:$0xff]
        %v1410 = vld [vmem:[%s181 + $0x578] sm:$0xff]
        %v1411 = vld [vmem:[%s181 + $0x580] sm:$0xff]
        %v1412 = vld [vmem:[%s181 + $0x588] sm:$0xff]
        %v1413 = vld [vmem:[%s181 + $0x590] sm:$0xff]
        %v1414 = vld [vmem:[%s181 + $0x598] sm:$0xff]
        %v1415 = vld [vmem:[%s181 + $0x5a0] sm:$0xff]
        %v1416 = vld [vmem:[%s181 + $0x5a8] sm:$0xff]
        %v1417 = vld [vmem:[%s181 + $0x5b0] sm:$0xff]
        %v1418 = vld [vmem:[%s181 + $0x5b8] sm:$0xff]
        %v1419 = vld [vmem:[%s181 + $0x5c0] sm:$0xff]
        %v1420 = vld [vmem:[%s181 + $0x5c8] sm:$0xff]
        %v1421 = vld [vmem:[%s181 + $0x5d0] sm:$0xff]
        %v1422 = vld [vmem:[%s181 + $0x5d8] sm:$0xff]
        %v1423 = vld [vmem:[%s181 + $0x5e0] sm:$0xff]
        %v1424 = vld [vmem:[%s181 + $0x5e8] sm:$0xff]
        %v1425 = vld [vmem:[%s181 + $0x5f0] sm:$0xff]
        %v1426 = vld [vmem:[%s181 + $0x5f8] sm:$0xff]
        %v1427 = vld [vmem:[%s181 + $0x600] sm:$0xff]
        %v1428 = vld [vmem:[%s181 + $0x608] sm:$0xff]
        %v1429 = vld [vmem:[%s181 + $0x610] sm:$0xff]
        %v1430 = vld [vmem:[%s181 + $0x618] sm:$0xff]
        %v1431 = vld [vmem:[%s181 + $0x620] sm:$0xff]
        %v1432 = vld [vmem:[%s181 + $0x628] sm:$0xff]
        %v1433 = vld [vmem:[%s181 + $0x630] sm:$0xff]
        %v1434 = vld [vmem:[%s181 + $0x638] sm:$0xff]
        %v1435 = vld [vmem:[%s181 + $0x640] sm:$0xff]
        %v1436 = vld [vmem:[%s181 + $0x648] sm:$0xff]
        %v1437 = vld [vmem:[%s181 + $0x650] sm:$0xff]
        %v1438 = vld [vmem:[%s181 + $0x658] sm:$0xff]
        %v1439 = vld [vmem:[%s181 + $0x660] sm:$0xff]
        %v1440 = vld [vmem:[%s181 + $0x668] sm:$0xff]
        %v1441 = vld [vmem:[%s181 + $0x670] sm:$0xff]
        %v1442 = vld [vmem:[%s181 + $0x678] sm:$0xff]
        %v1443 = vld [vmem:[%s181 + $0x680] sm:$0xff]
        %v1444 = vld [vmem:[%s181 + $0x688] sm:$0xff]
        %v1445 = vld [vmem:[%s181 + $0x690] sm:$0xff]
        %v1446 = vld [vmem:[%s181 + $0x698] sm:$0xff]
        %v1447 = vld [vmem:[%s181 + $0x6a0] sm:$0xff]
        %v1448 = vld [vmem:[%s181 + $0x6a8] sm:$0xff]
        %v1449 = vld [vmem:[%s181 + $0x6b0] sm:$0xff]
        %v1450 = vld [vmem:[%s181 + $0x6b8] sm:$0xff]
        %v1451 = vld [vmem:[%s181 + $0x6c0] sm:$0xff]
        %v1452 = vld [vmem:[%s181 + $0x6c8] sm:$0xff]
        %v1453 = vld [vmem:[%s181 + $0x6d0] sm:$0xff]
        %v1454 = vld [vmem:[%s181 + $0x6d8] sm:$0xff]
        %v1455 = vld [vmem:[%s181 + $0x6e0] sm:$0xff]
        %v1456 = vld [vmem:[%s181 + $0x6e8] sm:$0xff]
        %v1457 = vld [vmem:[%s181 + $0x6f0] sm:$0xff]
        %v1458 = vld [vmem:[%s181 + $0x6f8] sm:$0xff]
        %v1459 = vld [vmem:[%s181 + $0x700] sm:$0xff]
        %v1460 = vld [vmem:[%s181 + $0x708] sm:$0xff]
        %v1461 = vld [vmem:[%s181 + $0x710] sm:$0xff]
        %v1462 = vld [vmem:[%s181 + $0x718] sm:$0xff]
        %v1463 = vld [vmem:[%s181 + $0x720] sm:$0xff]
        %v1464 = vld [vmem:[%s181 + $0x728] sm:$0xff]
        %v1465 = vld [vmem:[%s181 + $0x730] sm:$0xff]
        %v1466 = vld [vmem:[%s181 + $0x738] sm:$0xff]
        %v1467 = vld [vmem:[%s181 + $0x740] sm:$0xff]
        %v1468 = vld [vmem:[%s181 + $0x748] sm:$0xff]
        %v1469 = vld [vmem:[%s181 + $0x750] sm:$0xff]
        %v1470 = vld [vmem:[%s181 + $0x758] sm:$0xff]
        %v1471 = vld [vmem:[%s181 + $0x760] sm:$0xff]
        %v1472 = vld [vmem:[%s181 + $0x768] sm:$0xff]
        %v1473 = vld [vmem:[%s181 + $0x770] sm:$0xff]
        %v1474 = vld [vmem:[%s181 + $0x778] sm:$0xff]
        %v1475 = vld [vmem:[%s181 + $0x780] sm:$0xff]
        %v1476 = vld [vmem:[%s181 + $0x788] sm:$0xff]
        %v1477 = vld [vmem:[%s181 + $0x790] sm:$0xff]
        %v1478 = vld [vmem:[%s181 + $0x798] sm:$0xff]
        %v1479 = vld [vmem:[%s181 + $0x7a0] sm:$0xff]
        %v1480 = vld [vmem:[%s181 + $0x7a8] sm:$0xff]
        %v1481 = vld [vmem:[%s181 + $0x7b0] sm:$0xff]
        %v1482 = vld [vmem:[%s181 + $0x7b8] sm:$0xff]
        %v1483 = vld [vmem:[%s181 + $0x7c0] sm:$0xff]
        %v1484 = vld [vmem:[%s181 + $0x7c8] sm:$0xff]
        %v1485 = vld [vmem:[%s181 + $0x7d0] sm:$0xff]
        %v1486 = vld [vmem:[%s181 + $0x7d8] sm:$0xff]
        %v1487 = vld [vmem:[%s181 + $0x7e0] sm:$0xff]
        %v1488 = vld [vmem:[%s181 + $0x7e8] sm:$0xff]
        %v1489 = vld [vmem:[%s181 + $0x7f0] sm:$0xff]
        %v1490 = vld [vmem:[%s181 + $0x7f8] sm:$0xff]
        %v1491 = vld [vmem:[%s181 + $0x800] sm:$0xff]
        %v1492 = vld [vmem:[%s181 + $0x808] sm:$0xff]
        %v1493 = vld [vmem:[%s181 + $0x810] sm:$0xff]
        %v1494 = vld [vmem:[%s181 + $0x818] sm:$0xff]
        %v1495 = vld [vmem:[%s181 + $0x820] sm:$0xff]
        %v1496 = vld [vmem:[%s181 + $0x828] sm:$0xff]
        %v1497 = vld [vmem:[%s181 + $0x830] sm:$0xff]
        %v1498 = vld [vmem:[%s181 + $0x838] sm:$0xff]
        %v1499 = vld [vmem:[%s181 + $0x840] sm:$0xff]
        %v1500 = vld [vmem:[%s181 + $0x848] sm:$0xff]
        %v1501 = vld [vmem:[%s181 + $0x850] sm:$0xff]
        %v1502 = vld [vmem:[%s181 + $0x858] sm:$0xff]
        %v1503 = vld [vmem:[%s181 + $0x860] sm:$0xff]
        %v1504 = vld [vmem:[%s181 + $0x868] sm:$0xff]
        %v1505 = vld [vmem:[%s181 + $0x870] sm:$0xff]
        %v1506 = vld [vmem:[%s181 + $0x878] sm:$0xff]
        %v1507 = vld [vmem:[%s181 + $0x880] sm:$0xff]
        %v1508 = vld [vmem:[%s181 + $0x888] sm:$0xff]
        %v1509 = vld [vmem:[%s181 + $0x890] sm:$0xff]
        %v1510 = vld [vmem:[%s181 + $0x898] sm:$0xff]
        %v1511 = vld [vmem:[%s181 + $0x8a0] sm:$0xff]
        %v1512 = vld [vmem:[%s181 + $0x8a8] sm:$0xff]
        %v1513 = vld [vmem:[%s181 + $0x8b0] sm:$0xff]
        %v1514 = vld [vmem:[%s181 + $0x8b8] sm:$0xff]
        %v1515 = vld [vmem:[%s181 + $0x8c0] sm:$0xff]
        %v1516 = vld [vmem:[%s181 + $0x8c8] sm:$0xff]
        %v1517 = vld [vmem:[%s181 + $0x8d0] sm:$0xff]
        %v1518 = vld [vmem:[%s181 + $0x8d8] sm:$0xff]
        %v1519 = vld [vmem:[%s181 + $0x8e0] sm:$0xff]
        %v1520 = vld [vmem:[%s181 + $0x8e8] sm:$0xff]
        %v1521 = vld [vmem:[%s181 + $0x8f0] sm:$0xff]
        %v1522 = vld [vmem:[%s181 + $0x8f8] sm:$0xff]
        %v1523 = vld [vmem:[%s181 + $0x900] sm:$0xff]
        %v1524 = vld [vmem:[%s181 + $0x908] sm:$0xff]
        %v1525 = vld [vmem:[%s181 + $0x910] sm:$0xff]
        %v1526 = vld [vmem:[%s181 + $0x918] sm:$0xff]
        %v1527 = vld [vmem:[%s181 + $0x920] sm:$0xff]
        %v1528 = vld [vmem:[%s181 + $0x928] sm:$0xff]
        %v1529 = vld [vmem:[%s181 + $0x930] sm:$0xff]
        %v1530 = vld [vmem:[%s181 + $0x938] sm:$0xff]
        %v1531 = vld [vmem:[%s181 + $0x940] sm:$0xff]
        %v1532 = vld [vmem:[%s181 + $0x948] sm:$0xff]
        %v1533 = vld [vmem:[%s181 + $0x950] sm:$0xff]
        %v1534 = vld [vmem:[%s181 + $0x958] sm:$0xff]
        %v1535 = vld [vmem:[%s181 + $0x960] sm:$0xff]
        %v1536 = vld [vmem:[%s181 + $0x968] sm:$0xff]
        %v1537 = vld [vmem:[%s181 + $0x970] sm:$0xff]
        %v1538 = vld [vmem:[%s181 + $0x978] sm:$0xff]
        %v1539 = vld [vmem:[%s181 + $0x980] sm:$0xff]
        %v1540 = vld [vmem:[%s181 + $0x988] sm:$0xff]
        %v1541 = vld [vmem:[%s181 + $0x990] sm:$0xff]
        %v1542 = vld [vmem:[%s181 + $0x998] sm:$0xff]
        %v1543 = vld [vmem:[%s181 + $0x9a0] sm:$0xff]
        %v1544 = vld [vmem:[%s181 + $0x9a8] sm:$0xff]
        %v1545 = vld [vmem:[%s181 + $0x9b0] sm:$0xff]
        %v1546 = vld [vmem:[%s181 + $0x9b8] sm:$0xff]
        %v1547 = vld [vmem:[%s181 + $0x9c0] sm:$0xff]
        %v1548 = vld [vmem:[%s181 + $0x9c8] sm:$0xff]
        %v1549 = vld [vmem:[%s181 + $0x9d0] sm:$0xff]
        %v1550 = vld [vmem:[%s181 + $0x9d8] sm:$0xff]
        %v1551 = vld [vmem:[%s181 + $0x9e0] sm:$0xff]
        %v1552 = vld [vmem:[%s181 + $0x9e8] sm:$0xff]
        %v1553 = vld [vmem:[%s181 + $0x9f0] sm:$0xff]
        %v1554 = vld [vmem:[%s181 + $0x9f8] sm:$0xff]
        %v1555 = vld [vmem:[%s181 + $0xa00] sm:$0xff]
        %v1556 = vld [vmem:[%s181 + $0xa08] sm:$0xff]
        %v1557 = vld [vmem:[%s181 + $0xa10] sm:$0xff]
        %v1558 = vld [vmem:[%s181 + $0xa18] sm:$0xff]
        %v1559 = vld [vmem:[%s181 + $0xa20] sm:$0xff]
        %v1560 = vld [vmem:[%s181 + $0xa28] sm:$0xff]
        %v1561 = vld [vmem:[%s181 + $0xa30] sm:$0xff]
        %v1562 = vld [vmem:[%s181 + $0xa38] sm:$0xff]
        %v1563 = vld [vmem:[%s181 + $0xa40] sm:$0xff]
        %v1564 = vld [vmem:[%s181 + $0xa48] sm:$0xff]
        %v1565 = vld [vmem:[%s181 + $0xa50] sm:$0xff]
        %v1566 = vld [vmem:[%s181 + $0xa58] sm:$0xff]
        %v1567 = vld [vmem:[%s181 + $0xa60] sm:$0xff]
        %v1568 = vld [vmem:[%s181 + $0xa68] sm:$0xff]
        %v1569 = vld [vmem:[%s181 + $0xa70] sm:$0xff]
        %v1570 = vld [vmem:[%s181 + $0xa78] sm:$0xff]
        %v1571 = vld [vmem:[%s181 + $0xa80] sm:$0xff]
        %v1572 = vld [vmem:[%s181 + $0xa88] sm:$0xff]
        %v1573 = vld [vmem:[%s181 + $0xa90] sm:$0xff]
        %v1574 = vld [vmem:[%s181 + $0xa98] sm:$0xff]
        %v1575 = vld [vmem:[%s181 + $0xaa0] sm:$0xff]
        %v1576 = vld [vmem:[%s181 + $0xaa8] sm:$0xff]
        %v1577 = vld [vmem:[%s181 + $0xab0] sm:$0xff]
        %v1578 = vld [vmem:[%s181 + $0xab8] sm:$0xff]
        %v1579 = vld [vmem:[%s181 + $0xac0] sm:$0xff]
        %v1580 = vld [vmem:[%s181 + $0xac8] sm:$0xff]
        %v1581 = vld [vmem:[%s181 + $0xad0] sm:$0xff]
        %v1582 = vld [vmem:[%s181 + $0xad8] sm:$0xff]
        %v1583 = vld [vmem:[%s181 + $0xae0] sm:$0xff]
        %v1584 = vld [vmem:[%s181 + $0xae8] sm:$0xff]
        %v1585 = vld [vmem:[%s181 + $0xaf0] sm:$0xff]
        %v1586 = vld [vmem:[%s181 + $0xaf8] sm:$0xff]
        %v1587 = vld [vmem:[%s181 + $0xb00] sm:$0xff]
        %v1588 = vld [vmem:[%s181 + $0xb08] sm:$0xff]
        %v1589 = vld [vmem:[%s181 + $0xb10] sm:$0xff]
        %v1590 = vld [vmem:[%s181 + $0xb18] sm:$0xff]
        %v1591 = vld [vmem:[%s181 + $0xb20] sm:$0xff]
        %v1592 = vld [vmem:[%s181 + $0xb28] sm:$0xff]
        %v1593 = vld [vmem:[%s181 + $0xb30] sm:$0xff]
        %v1594 = vld [vmem:[%s181 + $0xb38] sm:$0xff]
        %v1595 = vld [vmem:[%s181 + $0xb40] sm:$0xff]
        %v1596 = vld [vmem:[%s181 + $0xb48] sm:$0xff]
        %v1597 = vld [vmem:[%s181 + $0xb50] sm:$0xff]
        %v1598 = vld [vmem:[%s181 + $0xb58] sm:$0xff]
        %v1599 = vld [vmem:[%s181 + $0xb60] sm:$0xff]
        %v1600 = vld [vmem:[%s181 + $0xb68] sm:$0xff]
        %v1601 = vld [vmem:[%s181 + $0xb70] sm:$0xff]
        %v1602 = vld [vmem:[%s181 + $0xb78] sm:$0xff]
        %v1603 = vld [vmem:[%s181 + $0xb80] sm:$0xff]
        %v1604 = vld [vmem:[%s181 + $0xb88] sm:$0xff]
        %v1605 = vld [vmem:[%s181 + $0xb90] sm:$0xff]
        %v1606 = vld [vmem:[%s181 + $0xb98] sm:$0xff]
        %v1607 = vld [vmem:[%s181 + $0xba0] sm:$0xff]
        %v1608 = vld [vmem:[%s181 + $0xba8] sm:$0xff]
        %v1609 = vld [vmem:[%s181 + $0xbb0] sm:$0xff]
        %v1610 = vld [vmem:[%s181 + $0xbb8] sm:$0xff]
        %v1611 = vld [vmem:[%s181 + $0xbc0] sm:$0xff]
        %v1612 = vld [vmem:[%s181 + $0xbc8] sm:$0xff]
        %v1613 = vld [vmem:[%s181 + $0xbd0] sm:$0xff]
        %v1614 = vld [vmem:[%s181 + $0xbd8] sm:$0xff]
        %v1615 = vld [vmem:[%s181 + $0xbe0] sm:$0xff]
        %v1616 = vld [vmem:[%s181 + $0xbe8] sm:$0xff]
        %v1617 = vld [vmem:[%s181 + $0xbf0] sm:$0xff]
        %v1618 = vld [vmem:[%s181 + $0xbf8] sm:$0xff]
        %v1619 = vld [vmem:[%s181 + $0xc00] sm:$0xff]
        %v1620 = vld [vmem:[%s181 + $0xc08] sm:$0xff]
        %v1621 = vld [vmem:[%s181 + $0xc10] sm:$0xff]
        %v1622 = vld [vmem:[%s181 + $0xc18] sm:$0xff]
        %v1623 = vld [vmem:[%s181 + $0xc20] sm:$0xff]
        %v1624 = vld [vmem:[%s181 + $0xc28] sm:$0xff]
        %v1625 = vld [vmem:[%s181 + $0xc30] sm:$0xff]
        %v1626 = vld [vmem:[%s181 + $0xc38] sm:$0xff]
        %v1627 = vld [vmem:[%s181 + $0xc40] sm:$0xff]
        %v1628 = vld [vmem:[%s181 + $0xc48] sm:$0xff]
        %v1629 = vld [vmem:[%s181 + $0xc50] sm:$0xff]
        %v1630 = vld [vmem:[%s181 + $0xc58] sm:$0xff]
        %v1631 = vld [vmem:[%s181 + $0xc60] sm:$0xff]
        %v1632 = vld [vmem:[%s181 + $0xc68] sm:$0xff]
        %v1633 = vld [vmem:[%s181 + $0xc70] sm:$0xff]
        %v1634 = vld [vmem:[%s181 + $0xc78] sm:$0xff]
        %v1635 = vld [vmem:[%s181 + $0xc80] sm:$0xff]
        %v1636 = vld [vmem:[%s181 + $0xc88] sm:$0xff]
        %v1637 = vld [vmem:[%s181 + $0xc90] sm:$0xff]
        %v1638 = vld [vmem:[%s181 + $0xc98] sm:$0xff]
        %v1639 = vld [vmem:[%s181 + $0xca0] sm:$0xff]
        %v1640 = vld [vmem:[%s181 + $0xca8] sm:$0xff]
        %v1641 = vld [vmem:[%s181 + $0xcb0] sm:$0xff]
        %v1642 = vld [vmem:[%s181 + $0xcb8] sm:$0xff]
        %v1643 = vld [vmem:[%s181 + $0xcc0] sm:$0xff]
        %v1644 = vld [vmem:[%s181 + $0xcc8] sm:$0xff]
        %v1645 = vld [vmem:[%s181 + $0xcd0] sm:$0xff]
        %v1646 = vld [vmem:[%s181 + $0xcd8] sm:$0xff]
        %v1647 = vld [vmem:[%s181 + $0xce0] sm:$0xff]
        %v1648 = vld [vmem:[%s181 + $0xce8] sm:$0xff]
        %v1649 = vld [vmem:[%s181 + $0xcf0] sm:$0xff]
        %v1650 = vld [vmem:[%s181 + $0xcf8] sm:$0xff]
        %v1651 = vld [vmem:[%s181 + $0xd00] sm:$0xff]
        %v1652 = vld [vmem:[%s181 + $0xd08] sm:$0xff]
        %v1653 = vld [vmem:[%s181 + $0xd10] sm:$0xff]
        %v1654 = vld [vmem:[%s181 + $0xd18] sm:$0xff]
        %v1655 = vld [vmem:[%s181 + $0xd20] sm:$0xff]
        %v1656 = vld [vmem:[%s181 + $0xd28] sm:$0xff]
        %v1657 = vld [vmem:[%s181 + $0xd30] sm:$0xff]
        %v1658 = vld [vmem:[%s181 + $0xd38] sm:$0xff]
        %v1659 = vld [vmem:[%s181 + $0xd40] sm:$0xff]
        %v1660 = vld [vmem:[%s181 + $0xd48] sm:$0xff]
        %v1661 = vld [vmem:[%s181 + $0xd50] sm:$0xff]
        %v1662 = vld [vmem:[%s181 + $0xd58] sm:$0xff]
        %v1663 = vld [vmem:[%s181 + $0xd60] sm:$0xff]
        %v1664 = vld [vmem:[%s181 + $0xd68] sm:$0xff]
        %v1665 = vld [vmem:[%s181 + $0xd70] sm:$0xff]
        %v1666 = vld [vmem:[%s181 + $0xd78] sm:$0xff]
        %v1667 = vld [vmem:[%s181 + $0xd80] sm:$0xff]
        %v1668 = vld [vmem:[%s181 + $0xd88] sm:$0xff]
        %v1669 = vld [vmem:[%s181 + $0xd90] sm:$0xff]
        %v1670 = vld [vmem:[%s181 + $0xd98] sm:$0xff]
        %v1671 = vld [vmem:[%s181 + $0xda0] sm:$0xff]
        %v1672 = vld [vmem:[%s181 + $0xda8] sm:$0xff]
        %v1673 = vld [vmem:[%s181 + $0xdb0] sm:$0xff]
        %v1674 = vld [vmem:[%s181 + $0xdb8] sm:$0xff]
        %v1675 = vld [vmem:[%s181 + $0xdc0] sm:$0xff]
        %v1676 = vld [vmem:[%s181 + $0xdc8] sm:$0xff]
        %v1677 = vld [vmem:[%s181 + $0xdd0] sm:$0xff]
        %v1678 = vld [vmem:[%s181 + $0xdd8] sm:$0xff]
        %v1679 = vld [vmem:[%s181 + $0xde0] sm:$0xff]
        %v1680 = vld [vmem:[%s181 + $0xde8] sm:$0xff]
        %v1681 = vld [vmem:[%s181 + $0xdf0] sm:$0xff]
        %v1682 = vld [vmem:[%s181 + $0xdf8] sm:$0xff]
        %v1683 = vld [vmem:[%s181 + $0xe00] sm:$0xff]
        %v1684 = vld [vmem:[%s181 + $0xe08] sm:$0xff]
        %v1685 = vld [vmem:[%s181 + $0xe10] sm:$0xff]
        %v1686 = vld [vmem:[%s181 + $0xe18] sm:$0xff]
        %v1687 = vld [vmem:[%s181 + $0xe20] sm:$0xff]
        %v1688 = vld [vmem:[%s181 + $0xe28] sm:$0xff]
        %v1689 = vld [vmem:[%s181 + $0xe30] sm:$0xff]
        %v1690 = vld [vmem:[%s181 + $0xe38] sm:$0xff]
        %v1691 = vld [vmem:[%s181 + $0xe40] sm:$0xff]
        %v1692 = vld [vmem:[%s181 + $0xe48] sm:$0xff]
        %v1693 = vld [vmem:[%s181 + $0xe50] sm:$0xff]
        %v1694 = vld [vmem:[%s181 + $0xe58] sm:$0xff]
        %v1695 = vld [vmem:[%s181 + $0xe60] sm:$0xff]
        %v1696 = vld [vmem:[%s181 + $0xe68] sm:$0xff]
        %v1697 = vld [vmem:[%s181 + $0xe70] sm:$0xff]
        %v1698 = vld [vmem:[%s181 + $0xe78] sm:$0xff]
        %v1699 = vld [vmem:[%s181 + $0xe80] sm:$0xff]
        %v1700 = vld [vmem:[%s181 + $0xe88] sm:$0xff]
        %v1701 = vld [vmem:[%s181 + $0xe90] sm:$0xff]
        %v1702 = vld [vmem:[%s181 + $0xe98] sm:$0xff]
        %v1703 = vld [vmem:[%s181 + $0xea0] sm:$0xff]
        %v1704 = vld [vmem:[%s181 + $0xea8] sm:$0xff]
        %v1705 = vld [vmem:[%s181 + $0xeb0] sm:$0xff]
        %v1706 = vld [vmem:[%s181 + $0xeb8] sm:$0xff]
        %v1707 = vld [vmem:[%s181 + $0xec0] sm:$0xff]
        %v1708 = vld [vmem:[%s181 + $0xec8] sm:$0xff]
        %v1709 = vld [vmem:[%s181 + $0xed0] sm:$0xff]
        %v1710 = vld [vmem:[%s181 + $0xed8] sm:$0xff]
        %v1711 = vld [vmem:[%s181 + $0xee0] sm:$0xff]
        %v1712 = vld [vmem:[%s181 + $0xee8] sm:$0xff]
        %v1713 = vld [vmem:[%s181 + $0xef0] sm:$0xff]
        %v1714 = vld [vmem:[%s181 + $0xef8] sm:$0xff]
        %v1715 = vld [vmem:[%s181 + $0xf00] sm:$0xff]
        %v1716 = vld [vmem:[%s181 + $0xf08] sm:$0xff]
        %v1717 = vld [vmem:[%s181 + $0xf10] sm:$0xff]
        %v1718 = vld [vmem:[%s181 + $0xf18] sm:$0xff]
        %v1719 = vld [vmem:[%s181 + $0xf20] sm:$0xff]
        %v1720 = vld [vmem:[%s181 + $0xf28] sm:$0xff]
        %v1721 = vld [vmem:[%s181 + $0xf30] sm:$0xff]
        %v1722 = vld [vmem:[%s181 + $0xf38] sm:$0xff]
        %v1723 = vld [vmem:[%s181 + $0xf40] sm:$0xff]
        %v1724 = vld [vmem:[%s181 + $0xf48] sm:$0xff]
        %v1725 = vld [vmem:[%s181 + $0xf50] sm:$0xff]
        %v1726 = vld [vmem:[%s181 + $0xf58] sm:$0xff]
        %v1727 = vld [vmem:[%s181 + $0xf60] sm:$0xff]
        %v1728 = vld [vmem:[%s181 + $0xf68] sm:$0xff]
        %v1729 = vld [vmem:[%s181 + $0xf70] sm:$0xff]
        %v1730 = vld [vmem:[%s181 + $0xf78] sm:$0xff]
        %v1731 = vld [vmem:[%s181 + $0xf80] sm:$0xff]
        %v1732 = vld [vmem:[%s181 + $0xf88] sm:$0xff]
        %v1733 = vld [vmem:[%s181 + $0xf90] sm:$0xff]
        %v1734 = vld [vmem:[%s181 + $0xf98] sm:$0xff]
        %v1735 = vld [vmem:[%s181 + $0xfa0] sm:$0xff]
        %v1736 = vld [vmem:[%s181 + $0xfa8] sm:$0xff]
        %v1737 = vld [vmem:[%s181 + $0xfb0] sm:$0xff]
        %v1738 = vld [vmem:[%s181 + $0xfb8] sm:$0xff]
        %v1739 = vld [vmem:[%s181 + $0xfc0] sm:$0xff]
        %v1740 = vld [vmem:[%s181 + $0xfc8] sm:$0xff]
        %v1741 = vld [vmem:[%s181 + $0xfd0] sm:$0xff]
        %v1742 = vld [vmem:[%s181 + $0xfd8] sm:$0xff]
        %v1743 = vld [vmem:[%s181 + $0xfe0] sm:$0xff]
        %v1744 = vld [vmem:[%s181 + $0xfe8] sm:$0xff]
        %v1745 = vld [vmem:[%s181 + $0xff0] sm:$0xff]
        %v1746 = vld [vmem:[%s181 + $0xff8] sm:$0xff]
        %v1747 = vadd.f32 %v723, %v1235
        %v1748 = vadd.f32 %v724, %v1236
        %v1749 = vadd.f32 %v725, %v1237
        %v1750 = vadd.f32 %v726, %v1238
        %v1751 = vadd.f32 %v727, %v1239
        %v1752 = vadd.f32 %v728, %v1240
        %v1753 = vadd.f32 %v729, %v1241
        %v1754 = vadd.f32 %v730, %v1242
        %v1755 = vadd.f32 %v731, %v1243
        %v1756 = vadd.f32 %v732, %v1244
        %v1757 = vadd.f32 %v733, %v1245
        %v1758 = vadd.f32 %v734, %v1246
        %v1759 = vadd.f32 %v735, %v1247
        %v1760 = vadd.f32 %v736, %v1248
        %v1761 = vadd.f32 %v737, %v1249
        %v1762 = vadd.f32 %v738, %v1250
        %v1763 = vadd.f32 %v739, %v1251
        %v1764 = vadd.f32 %v740, %v1252
        %v1765 = vadd.f32 %v741, %v1253
        %v1766 = vadd.f32 %v742, %v1254
        %v1767 = vadd.f32 %v743, %v1255
        %v1768 = vadd.f32 %v744, %v1256
        %v1769 = vadd.f32 %v745, %v1257
        %v1770 = vadd.f32 %v746, %v1258
        %v1771 = vadd.f32 %v747, %v1259
        %v1772 = vadd.f32 %v748, %v1260
        %v1773 = vadd.f32 %v749, %v1261
        %v1774 = vadd.f32 %v750, %v1262
        %v1775 = vadd.f32 %v751, %v1263
        %v1776 = vadd.f32 %v752, %v1264
        %v1777 = vadd.f32 %v753, %v1265
        %v1778 = vadd.f32 %v754, %v1266
        %v1779 = vadd.f32 %v755, %v1267
        %v1780 = vadd.f32 %v756, %v1268
        %v1781 = vadd.f32 %v757, %v1269
        %v1782 = vadd.f32 %v758, %v1270
        %v1783 = vadd.f32 %v759, %v1271
        %v1784 = vadd.f32 %v760, %v1272
        %v1785 = vadd.f32 %v761, %v1273
        %v1786 = vadd.f32 %v762, %v1274
        %v1787 = vadd.f32 %v763, %v1275
        %v1788 = vadd.f32 %v764, %v1276
        %v1789 = vadd.f32 %v765, %v1277
        %v1790 = vadd.f32 %v766, %v1278
        %v1791 = vadd.f32 %v767, %v1279
        %v1792 = vadd.f32 %v768, %v1280
        %v1793 = vadd.f32 %v769, %v1281
        %v1794 = vadd.f32 %v770, %v1282
        %v1795 = vadd.f32 %v771, %v1283
        %v1796 = vadd.f32 %v772, %v1284
        %v1797 = vadd.f32 %v773, %v1285
        %v1798 = vadd.f32 %v774, %v1286
        %v1799 = vadd.f32 %v775, %v1287
        %v1800 = vadd.f32 %v776, %v1288
        %v1801 = vadd.f32 %v777, %v1289
        %v1802 = vadd.f32 %v778, %v1290
        %v1803 = vadd.f32 %v779, %v1291
        %v1804 = vadd.f32 %v780, %v1292
        %v1805 = vadd.f32 %v781, %v1293
        %v1806 = vadd.f32 %v782, %v1294
        %v1807 = vadd.f32 %v783, %v1295
        %v1808 = vadd.f32 %v784, %v1296
        %v1809 = vadd.f32 %v785, %v1297
        %v1810 = vadd.f32 %v786, %v1298
        %v1811 = vadd.f32 %v787, %v1299
        %v1812 = vadd.f32 %v788, %v1300
        %v1813 = vadd.f32 %v789, %v1301
        %v1814 = vadd.f32 %v790, %v1302
        %v1815 = vadd.f32 %v791, %v1303
        %v1816 = vadd.f32 %v792, %v1304
        %v1817 = vadd.f32 %v793, %v1305
        %v1818 = vadd.f32 %v794, %v1306
        %v1819 = vadd.f32 %v795, %v1307
        %v1820 = vadd.f32 %v796, %v1308
        %v1821 = vadd.f32 %v797, %v1309
        %v1822 = vadd.f32 %v798, %v1310
        %v1823 = vadd.f32 %v799, %v1311
        %v1824 = vadd.f32 %v800, %v1312
        %v1825 = vadd.f32 %v801, %v1313
        %v1826 = vadd.f32 %v802, %v1314
        %v1827 = vadd.f32 %v803, %v1315
        %v1828 = vadd.f32 %v804, %v1316
        %v1829 = vadd.f32 %v805, %v1317
        %v1830 = vadd.f32 %v806, %v1318
        %v1831 = vadd.f32 %v807, %v1319
        %v1832 = vadd.f32 %v808, %v1320
        %v1833 = vadd.f32 %v809, %v1321
        %v1834 = vadd.f32 %v810, %v1322
        %v1835 = vadd.f32 %v811, %v1323
        %v1836 = vadd.f32 %v812, %v1324
        %v1837 = vadd.f32 %v813, %v1325
        %v1838 = vadd.f32 %v814, %v1326
        %v1839 = vadd.f32 %v815, %v1327
        %v1840 = vadd.f32 %v816, %v1328
        %v1841 = vadd.f32 %v817, %v1329
        %v1842 = vadd.f32 %v818, %v1330
        %v1843 = vadd.f32 %v819, %v1331
        %v1844 = vadd.f32 %v820, %v1332
        %v1845 = vadd.f32 %v821, %v1333
        %v1846 = vadd.f32 %v822, %v1334
        %v1847 = vadd.f32 %v823, %v1335
        %v1848 = vadd.f32 %v824, %v1336
        %v1849 = vadd.f32 %v825, %v1337
        %v1850 = vadd.f32 %v826, %v1338
        %v1851 = vadd.f32 %v827, %v1339
        %v1852 = vadd.f32 %v828, %v1340
        %v1853 = vadd.f32 %v829, %v1341
        %v1854 = vadd.f32 %v830, %v1342
        %v1855 = vadd.f32 %v831, %v1343
        %v1856 = vadd.f32 %v832, %v1344
        %v1857 = vadd.f32 %v833, %v1345
        %v1858 = vadd.f32 %v834, %v1346
        %v1859 = vadd.f32 %v835, %v1347
        %v1860 = vadd.f32 %v836, %v1348
        %v1861 = vadd.f32 %v837, %v1349
        %v1862 = vadd.f32 %v838, %v1350
        %v1863 = vadd.f32 %v839, %v1351
        %v1864 = vadd.f32 %v840, %v1352
        %v1865 = vadd.f32 %v841, %v1353
        %v1866 = vadd.f32 %v842, %v1354
        %v1867 = vadd.f32 %v843, %v1355
        %v1868 = vadd.f32 %v844, %v1356
        %v1869 = vadd.f32 %v845, %v1357
        %v1870 = vadd.f32 %v846, %v1358
        %v1871 = vadd.f32 %v847, %v1359
        %v1872 = vadd.f32 %v848, %v1360
        %v1873 = vadd.f32 %v849, %v1361
        %v1874 = vadd.f32 %v850, %v1362
        %v1875 = vadd.f32 %v851, %v1363
        %v1876 = vadd.f32 %v852, %v1364
        %v1877 = vadd.f32 %v853, %v1365
        %v1878 = vadd.f32 %v854, %v1366
        %v1879 = vadd.f32 %v855, %v1367
        %v1880 = vadd.f32 %v856, %v1368
        %v1881 = vadd.f32 %v857, %v1369
        %v1882 = vadd.f32 %v858, %v1370
        %v1883 = vadd.f32 %v859, %v1371
        %v1884 = vadd.f32 %v860, %v1372
        %v1885 = vadd.f32 %v861, %v1373
        %v1886 = vadd.f32 %v862, %v1374
        %v1887 = vadd.f32 %v863, %v1375
        %v1888 = vadd.f32 %v864, %v1376
        %v1889 = vadd.f32 %v865, %v1377
        %v1890 = vadd.f32 %v866, %v1378
        %v1891 = vadd.f32 %v867, %v1379
        %v1892 = vadd.f32 %v868, %v1380
        %v1893 = vadd.f32 %v869, %v1381
        %v1894 = vadd.f32 %v870, %v1382
        %v1895 = vadd.f32 %v871, %v1383
        %v1896 = vadd.f32 %v872, %v1384
        %v1897 = vadd.f32 %v873, %v1385
        %v1898 = vadd.f32 %v874, %v1386
        %v1899 = vadd.f32 %v875, %v1387
        %v1900 = vadd.f32 %v876, %v1388
        %v1901 = vadd.f32 %v877, %v1389
        %v1902 = vadd.f32 %v878, %v1390
        %v1903 = vadd.f32 %v879, %v1391
        %v1904 = vadd.f32 %v880, %v1392
        %v1905 = vadd.f32 %v881, %v1393
        %v1906 = vadd.f32 %v882, %v1394
        %v1907 = vadd.f32 %v883, %v1395
        %v1908 = vadd.f32 %v884, %v1396
        %v1909 = vadd.f32 %v885, %v1397
        %v1910 = vadd.f32 %v886, %v1398
        %v1911 = vadd.f32 %v887, %v1399
        %v1912 = vadd.f32 %v888, %v1400
        %v1913 = vadd.f32 %v889, %v1401
        %v1914 = vadd.f32 %v890, %v1402
        %v1915 = vadd.f32 %v891, %v1403
        %v1916 = vadd.f32 %v892, %v1404
        %v1917 = vadd.f32 %v893, %v1405
        %v1918 = vadd.f32 %v894, %v1406
        %v1919 = vadd.f32 %v895, %v1407
        %v1920 = vadd.f32 %v896, %v1408
        %v1921 = vadd.f32 %v897, %v1409
        %v1922 = vadd.f32 %v898, %v1410
        %v1923 = vadd.f32 %v899, %v1411
        %v1924 = vadd.f32 %v900, %v1412
        %v1925 = vadd.f32 %v901, %v1413
        %v1926 = vadd.f32 %v902, %v1414
        %v1927 = vadd.f32 %v903, %v1415
        %v1928 = vadd.f32 %v904, %v1416
        %v1929 = vadd.f32 %v905, %v1417
        %v1930 = vadd.f32 %v906, %v1418
        %v1931 = vadd.f32 %v907, %v1419
        %v1932 = vadd.f32 %v908, %v1420
        %v1933 = vadd.f32 %v909, %v1421
        %v1934 = vadd.f32 %v910, %v1422
        %v1935 = vadd.f32 %v911, %v1423
        %v1936 = vadd.f32 %v912, %v1424
        %v1937 = vadd.f32 %v913, %v1425
        %v1938 = vadd.f32 %v914, %v1426
        %v1939 = vadd.f32 %v915, %v1427
        %v1940 = vadd.f32 %v916, %v1428
        %v1941 = vadd.f32 %v917, %v1429
        %v1942 = vadd.f32 %v918, %v1430
        %v1943 = vadd.f32 %v919, %v1431
        %v1944 = vadd.f32 %v920, %v1432
        %v1945 = vadd.f32 %v921, %v1433
        %v1946 = vadd.f32 %v922, %v1434
        %v1947 = vadd.f32 %v923, %v1435
        %v1948 = vadd.f32 %v924, %v1436
        %v1949 = vadd.f32 %v925, %v1437
        %v1950 = vadd.f32 %v926, %v1438
        %v1951 = vadd.f32 %v927, %v1439
        %v1952 = vadd.f32 %v928, %v1440
        %v1953 = vadd.f32 %v929, %v1441
        %v1954 = vadd.f32 %v930, %v1442
        %v1955 = vadd.f32 %v931, %v1443
        %v1956 = vadd.f32 %v932, %v1444
        %v1957 = vadd.f32 %v933, %v1445
        %v1958 = vadd.f32 %v934, %v1446
        %v1959 = vadd.f32 %v935, %v1447
        %v1960 = vadd.f32 %v936, %v1448
        %v1961 = vadd.f32 %v937, %v1449
        %v1962 = vadd.f32 %v938, %v1450
        %v1963 = vadd.f32 %v939, %v1451
        %v1964 = vadd.f32 %v940, %v1452
        %v1965 = vadd.f32 %v941, %v1453
        %v1966 = vadd.f32 %v942, %v1454
        %v1967 = vadd.f32 %v943, %v1455
        %v1968 = vadd.f32 %v944, %v1456
        %v1969 = vadd.f32 %v945, %v1457
        %v1970 = vadd.f32 %v946, %v1458
        %v1971 = vadd.f32 %v947, %v1459
        %v1972 = vadd.f32 %v948, %v1460
        %v1973 = vadd.f32 %v949, %v1461
        %v1974 = vadd.f32 %v950, %v1462
        %v1975 = vadd.f32 %v951, %v1463
        %v1976 = vadd.f32 %v952, %v1464
        %v1977 = vadd.f32 %v953, %v1465
        %v1978 = vadd.f32 %v954, %v1466
        %v1979 = vadd.f32 %v955, %v1467
        %v1980 = vadd.f32 %v956, %v1468
        %v1981 = vadd.f32 %v957, %v1469
        %v1982 = vadd.f32 %v958, %v1470
        %v1983 = vadd.f32 %v959, %v1471
        %v1984 = vadd.f32 %v960, %v1472
        %v1985 = vadd.f32 %v961, %v1473
        %v1986 = vadd.f32 %v962, %v1474
        %v1987 = vadd.f32 %v963, %v1475
        %v1988 = vadd.f32 %v964, %v1476
        %v1989 = vadd.f32 %v965, %v1477
        %v1990 = vadd.f32 %v966, %v1478
        %v1991 = vadd.f32 %v967, %v1479
        %v1992 = vadd.f32 %v968, %v1480
        %v1993 = vadd.f32 %v969, %v1481
        %v1994 = vadd.f32 %v970, %v1482
        %v1995 = vadd.f32 %v971, %v1483
        %v1996 = vadd.f32 %v972, %v1484
        %v1997 = vadd.f32 %v973, %v1485
        %v1998 = vadd.f32 %v974, %v1486
        %v1999 = vadd.f32 %v975, %v1487
        %v2000 = vadd.f32 %v976, %v1488
        %v2001 = vadd.f32 %v977, %v1489
        %v2002 = vadd.f32 %v978, %v1490
        %v2003 = vadd.f32 %v979, %v1491
        %v2004 = vadd.f32 %v980, %v1492
        %v2005 = vadd.f32 %v981, %v1493
        %v2006 = vadd.f32 %v982, %v1494
        %v2007 = vadd.f32 %v983, %v1495
        %v2008 = vadd.f32 %v984, %v1496
        %v2009 = vadd.f32 %v985, %v1497
        %v2010 = vadd.f32 %v986, %v1498
        %v2011 = vadd.f32 %v987, %v1499
        %v2012 = vadd.f32 %v988, %v1500
        %v2013 = vadd.f32 %v989, %v1501
        %v2014 = vadd.f32 %v990, %v1502
        %v2015 = vadd.f32 %v991, %v1503
        %v2016 = vadd.f32 %v992, %v1504
        %v2017 = vadd.f32 %v993, %v1505
        %v2018 = vadd.f32 %v994, %v1506
        %v2019 = vadd.f32 %v995, %v1507
        %v2020 = vadd.f32 %v996, %v1508
        %v2021 = vadd.f32 %v997, %v1509
        %v2022 = vadd.f32 %v998, %v1510
        %v2023 = vadd.f32 %v999, %v1511
        %v2024 = vadd.f32 %v1000, %v1512
        %v2025 = vadd.f32 %v1001, %v1513
        %v2026 = vadd.f32 %v1002, %v1514
        %v2027 = vadd.f32 %v1003, %v1515
        %v2028 = vadd.f32 %v1004, %v1516
        %v2029 = vadd.f32 %v1005, %v1517
        %v2030 = vadd.f32 %v1006, %v1518
        %v2031 = vadd.f32 %v1007, %v1519
        %v2032 = vadd.f32 %v1008, %v1520
        %v2033 = vadd.f32 %v1009, %v1521
        %v2034 = vadd.f32 %v1010, %v1522
        %v2035 = vadd.f32 %v1011, %v1523
        %v2036 = vadd.f32 %v1012, %v1524
        %v2037 = vadd.f32 %v1013, %v1525
        %v2038 = vadd.f32 %v1014, %v1526
        %v2039 = vadd.f32 %v1015, %v1527
        %v2040 = vadd.f32 %v1016, %v1528
        %v2041 = vadd.f32 %v1017, %v1529
        %v2042 = vadd.f32 %v1018, %v1530
        %v2043 = vadd.f32 %v1019, %v1531
        %v2044 = vadd.f32 %v1020, %v1532
        %v2045 = vadd.f32 %v1021, %v1533
        %v2046 = vadd.f32 %v1022, %v1534
        %v2047 = vadd.f32 %v1023, %v1535
        %v2048 = vadd.f32 %v1024, %v1536
        %v2049 = vadd.f32 %v1025, %v1537
        %v2050 = vadd.f32 %v1026, %v1538
        %v2051 = vadd.f32 %v1027, %v1539
        %v2052 = vadd.f32 %v1028, %v1540
        %v2053 = vadd.f32 %v1029, %v1541
        %v2054 = vadd.f32 %v1030, %v1542
        %v2055 = vadd.f32 %v1031, %v1543
        %v2056 = vadd.f32 %v1032, %v1544
        %v2057 = vadd.f32 %v1033, %v1545
        %v2058 = vadd.f32 %v1034, %v1546
        %v2059 = vadd.f32 %v1035, %v1547
        %v2060 = vadd.f32 %v1036, %v1548
        %v2061 = vadd.f32 %v1037, %v1549
        %v2062 = vadd.f32 %v1038, %v1550
        %v2063 = vadd.f32 %v1039, %v1551
        %v2064 = vadd.f32 %v1040, %v1552
        %v2065 = vadd.f32 %v1041, %v1553
        %v2066 = vadd.f32 %v1042, %v1554
        %v2067 = vadd.f32 %v1043, %v1555
        %v2068 = vadd.f32 %v1044, %v1556
        %v2069 = vadd.f32 %v1045, %v1557
        %v2070 = vadd.f32 %v1046, %v1558
        %v2071 = vadd.f32 %v1047, %v1559
        %v2072 = vadd.f32 %v1048, %v1560
        %v2073 = vadd.f32 %v1049, %v1561
        %v2074 = vadd.f32 %v1050, %v1562
        %v2075 = vadd.f32 %v1051, %v1563
        %v2076 = vadd.f32 %v1052, %v1564
        %v2077 = vadd.f32 %v1053, %v1565
        %v2078 = vadd.f32 %v1054, %v1566
        %v2079 = vadd.f32 %v1055, %v1567
        %v2080 = vadd.f32 %v1056, %v1568
        %v2081 = vadd.f32 %v1057, %v1569
        %v2082 = vadd.f32 %v1058, %v1570
        %v2083 = vadd.f32 %v1059, %v1571
        %v2084 = vadd.f32 %v1060, %v1572
        %v2085 = vadd.f32 %v1061, %v1573
        %v2086 = vadd.f32 %v1062, %v1574
        %v2087 = vadd.f32 %v1063, %v1575
        %v2088 = vadd.f32 %v1064, %v1576
        %v2089 = vadd.f32 %v1065, %v1577
        %v2090 = vadd.f32 %v1066, %v1578
        %v2091 = vadd.f32 %v1067, %v1579
        %v2092 = vadd.f32 %v1068, %v1580
        %v2093 = vadd.f32 %v1069, %v1581
        %v2094 = vadd.f32 %v1070, %v1582
        %v2095 = vadd.f32 %v1071, %v1583
        %v2096 = vadd.f32 %v1072, %v1584
        %v2097 = vadd.f32 %v1073, %v1585
        %v2098 = vadd.f32 %v1074, %v1586
        %v2099 = vadd.f32 %v1075, %v1587
        %v2100 = vadd.f32 %v1076, %v1588
        %v2101 = vadd.f32 %v1077, %v1589
        %v2102 = vadd.f32 %v1078, %v1590
        %v2103 = vadd.f32 %v1079, %v1591
        %v2104 = vadd.f32 %v1080, %v1592
        %v2105 = vadd.f32 %v1081, %v1593
        %v2106 = vadd.f32 %v1082, %v1594
        %v2107 = vadd.f32 %v1083, %v1595
        %v2108 = vadd.f32 %v1084, %v1596
        %v2109 = vadd.f32 %v1085, %v1597
        %v2110 = vadd.f32 %v1086, %v1598
        %v2111 = vadd.f32 %v1087, %v1599
        %v2112 = vadd.f32 %v1088, %v1600
        %v2113 = vadd.f32 %v1089, %v1601
        %v2114 = vadd.f32 %v1090, %v1602
        %v2115 = vadd.f32 %v1091, %v1603
        %v2116 = vadd.f32 %v1092, %v1604
        %v2117 = vadd.f32 %v1093, %v1605
        %v2118 = vadd.f32 %v1094, %v1606
        %v2119 = vadd.f32 %v1095, %v1607
        %v2120 = vadd.f32 %v1096, %v1608
        %v2121 = vadd.f32 %v1097, %v1609
        %v2122 = vadd.f32 %v1098, %v1610
        %v2123 = vadd.f32 %v1099, %v1611
        %v2124 = vadd.f32 %v1100, %v1612
        %v2125 = vadd.f32 %v1101, %v1613
        %v2126 = vadd.f32 %v1102, %v1614
        %v2127 = vadd.f32 %v1103, %v1615
        %v2128 = vadd.f32 %v1104, %v1616
        %v2129 = vadd.f32 %v1105, %v1617
        %v2130 = vadd.f32 %v1106, %v1618
        %v2131 = vadd.f32 %v1107, %v1619
        %v2132 = vadd.f32 %v1108, %v1620
        %v2133 = vadd.f32 %v1109, %v1621
        %v2134 = vadd.f32 %v1110, %v1622
        %v2135 = vadd.f32 %v1111, %v1623
        %v2136 = vadd.f32 %v1112, %v1624
        %v2137 = vadd.f32 %v1113, %v1625
        %v2138 = vadd.f32 %v1114, %v1626
        %v2139 = vadd.f32 %v1115, %v1627
        %v2140 = vadd.f32 %v1116, %v1628
        %v2141 = vadd.f32 %v1117, %v1629
        %v2142 = vadd.f32 %v1118, %v1630
        %v2143 = vadd.f32 %v1119, %v1631
        %v2144 = vadd.f32 %v1120, %v1632
        %v2145 = vadd.f32 %v1121, %v1633
        %v2146 = vadd.f32 %v1122, %v1634
        %v2147 = vadd.f32 %v1123, %v1635
        %v2148 = vadd.f32 %v1124, %v1636
        %v2149 = vadd.f32 %v1125, %v1637
        %v2150 = vadd.f32 %v1126, %v1638
        %v2151 = vadd.f32 %v1127, %v1639
        %v2152 = vadd.f32 %v1128, %v1640
        %v2153 = vadd.f32 %v1129, %v1641
        %v2154 = vadd.f32 %v1130, %v1642
        %v2155 = vadd.f32 %v1131, %v1643
        %v2156 = vadd.f32 %v1132, %v1644
        %v2157 = vadd.f32 %v1133, %v1645
        %v2158 = vadd.f32 %v1134, %v1646
        %v2159 = vadd.f32 %v1135, %v1647
        %v2160 = vadd.f32 %v1136, %v1648
        %v2161 = vadd.f32 %v1137, %v1649
        %v2162 = vadd.f32 %v1138, %v1650
        %v2163 = vadd.f32 %v1139, %v1651
        %v2164 = vadd.f32 %v1140, %v1652
        %v2165 = vadd.f32 %v1141, %v1653
        %v2166 = vadd.f32 %v1142, %v1654
        %v2167 = vadd.f32 %v1143, %v1655
        %v2168 = vadd.f32 %v1144, %v1656
        %v2169 = vadd.f32 %v1145, %v1657
        %v2170 = vadd.f32 %v1146, %v1658
        %v2171 = vadd.f32 %v1147, %v1659
        %v2172 = vadd.f32 %v1148, %v1660
        %v2173 = vadd.f32 %v1149, %v1661
        %v2174 = vadd.f32 %v1150, %v1662
        %v2175 = vadd.f32 %v1151, %v1663
        %v2176 = vadd.f32 %v1152, %v1664
        %v2177 = vadd.f32 %v1153, %v1665
        %v2178 = vadd.f32 %v1154, %v1666
        %v2179 = vadd.f32 %v1155, %v1667
        %v2180 = vadd.f32 %v1156, %v1668
        %v2181 = vadd.f32 %v1157, %v1669
        %v2182 = vadd.f32 %v1158, %v1670
        %v2183 = vadd.f32 %v1159, %v1671
        %v2184 = vadd.f32 %v1160, %v1672
        %v2185 = vadd.f32 %v1161, %v1673
        %v2186 = vadd.f32 %v1162, %v1674
        %v2187 = vadd.f32 %v1163, %v1675
        %v2188 = vadd.f32 %v1164, %v1676
        %v2189 = vadd.f32 %v1165, %v1677
        %v2190 = vadd.f32 %v1166, %v1678
        %v2191 = vadd.f32 %v1167, %v1679
        %v2192 = vadd.f32 %v1168, %v1680
        %v2193 = vadd.f32 %v1169, %v1681
        %v2194 = vadd.f32 %v1170, %v1682
        %v2195 = vadd.f32 %v1171, %v1683
        %v2196 = vadd.f32 %v1172, %v1684
        %v2197 = vadd.f32 %v1173, %v1685
        %v2198 = vadd.f32 %v1174, %v1686
        %v2199 = vadd.f32 %v1175, %v1687
        %v2200 = vadd.f32 %v1176, %v1688
        %v2201 = vadd.f32 %v1177, %v1689
        %v2202 = vadd.f32 %v1178, %v1690
        %v2203 = vadd.f32 %v1179, %v1691
        %v2204 = vadd.f32 %v1180, %v1692
        %v2205 = vadd.f32 %v1181, %v1693
        %v2206 = vadd.f32 %v1182, %v1694
        %v2207 = vadd.f32 %v1183, %v1695
        %v2208 = vadd.f32 %v1184, %v1696
        %v2209 = vadd.f32 %v1185, %v1697
        %v2210 = vadd.f32 %v1186, %v1698
        %v2211 = vadd.f32 %v1187, %v1699
        %v2212 = vadd.f32 %v1188, %v1700
        %v2213 = vadd.f32 %v1189, %v1701
        %v2214 = vadd.f32 %v1190, %v1702
        %v2215 = vadd.f32 %v1191, %v1703
        %v2216 = vadd.f32 %v1192, %v1704
        %v2217 = vadd.f32 %v1193, %v1705
        %v2218 = vadd.f32 %v1194, %v1706
        %v2219 = vadd.f32 %v1195, %v1707
        %v2220 = vadd.f32 %v1196, %v1708
        %v2221 = vadd.f32 %v1197, %v1709
        %v2222 = vadd.f32 %v1198, %v1710
        %v2223 = vadd.f32 %v1199, %v1711
        %v2224 = vadd.f32 %v1200, %v1712
        %v2225 = vadd.f32 %v1201, %v1713
        %v2226 = vadd.f32 %v1202, %v1714
        %v2227 = vadd.f32 %v1203, %v1715
        %v2228 = vadd.f32 %v1204, %v1716
        %v2229 = vadd.f32 %v1205, %v1717
        %v2230 = vadd.f32 %v1206, %v1718
        %v2231 = vadd.f32 %v1207, %v1719
        %v2232 = vadd.f32 %v1208, %v1720
        %v2233 = vadd.f32 %v1209, %v1721
        %v2234 = vadd.f32 %v1210, %v1722
        %v2235 = vadd.f32 %v1211, %v1723
        %v2236 = vadd.f32 %v1212, %v1724
        %v2237 = vadd.f32 %v1213, %v1725
        %v2238 = vadd.f32 %v1214, %v1726
        %v2239 = vadd.f32 %v1215, %v1727
        %v2240 = vadd.f32 %v1216, %v1728
        %v2241 = vadd.f32 %v1217, %v1729
        %v2242 = vadd.f32 %v1218, %v1730
        %v2243 = vadd.f32 %v1219, %v1731
        %v2244 = vadd.f32 %v1220, %v1732
        %v2245 = vadd.f32 %v1221, %v1733
        %v2246 = vadd.f32 %v1222, %v1734
        %v2247 = vadd.f32 %v1223, %v1735
        %v2248 = vadd.f32 %v1224, %v1736
        %v2249 = vadd.f32 %v1225, %v1737
        %v2250 = vadd.f32 %v1226, %v1738
        %v2251 = vadd.f32 %v1227, %v1739
        %v2252 = vadd.f32 %v1228, %v1740
        %v2253 = vadd.f32 %v1229, %v1741
        %v2254 = vadd.f32 %v1230, %v1742
        %v2255 = vadd.f32 %v1231, %v1743
        %v2256 = vadd.f32 %v1232, %v1744
        %v2257 = vadd.f32 %v1233, %v1745
        %v2258 = vadd.f32 %v1234, %v1746
        %2259 = vst [vmem:[%s207] sm:$0xff] %v1747
        %2260 = vst [vmem:[%s207 + $0x8] sm:$0xff] %v1748
        %2261 = vst [vmem:[%s207 + $0x10] sm:$0xff] %v1749
        %2262 = vst [vmem:[%s207 + $0x18] sm:$0xff] %v1750
        %2263 = vst [vmem:[%s207 + $0x20] sm:$0xff] %v1751
        %2264 = vst [vmem:[%s207 + $0x28] sm:$0xff] %v1752
        %2265 = vst [vmem:[%s207 + $0x30] sm:$0xff] %v1753
        %2266 = vst [vmem:[%s207 + $0x38] sm:$0xff] %v1754
        %2267 = vst [vmem:[%s207 + $0x40] sm:$0xff] %v1755
        %2268 = vst [vmem:[%s207 + $0x48] sm:$0xff] %v1756
        %2269 = vst [vmem:[%s207 + $0x50] sm:$0xff] %v1757
        %2270 = vst [vmem:[%s207 + $0x58] sm:$0xff] %v1758
        %2271 = vst [vmem:[%s207 + $0x60] sm:$0xff] %v1759
        %2272 = vst [vmem:[%s207 + $0x68] sm:$0xff] %v1760
        %2273 = vst [vmem:[%s207 + $0x70] sm:$0xff] %v1761
        %2274 = vst [vmem:[%s207 + $0x78] sm:$0xff] %v1762
        %2275 = vst [vmem:[%s207 + $0x80] sm:$0xff] %v1763
        %2276 = vst [vmem:[%s207 + $0x88] sm:$0xff] %v1764
        %2277 = vst [vmem:[%s207 + $0x90] sm:$0xff] %v1765
        %2278 = vst [vmem:[%s207 + $0x98] sm:$0xff] %v1766
        %2279 = vst [vmem:[%s207 + $0xa0] sm:$0xff] %v1767
        %2280 = vst [vmem:[%s207 + $0xa8] sm:$0xff] %v1768
        %2281 = vst [vmem:[%s207 + $0xb0] sm:$0xff] %v1769
        %2282 = vst [vmem:[%s207 + $0xb8] sm:$0xff] %v1770
        %2283 = vst [vmem:[%s207 + $0xc0] sm:$0xff] %v1771
        %2284 = vst [vmem:[%s207 + $0xc8] sm:$0xff] %v1772
        %2285 = vst [vmem:[%s207 + $0xd0] sm:$0xff] %v1773
        %2286 = vst [vmem:[%s207 + $0xd8] sm:$0xff] %v1774
        %2287 = vst [vmem:[%s207 + $0xe0] sm:$0xff] %v1775
        %2288 = vst [vmem:[%s207 + $0xe8] sm:$0xff] %v1776
        %2289 = vst [vmem:[%s207 + $0xf0] sm:$0xff] %v1777
        %2290 = vst [vmem:[%s207 + $0xf8] sm:$0xff] %v1778
        %2291 = vst [vmem:[%s207 + $0x100] sm:$0xff] %v1779
        %2292 = vst [vmem:[%s207 + $0x108] sm:$0xff] %v1780
        %2293 = vst [vmem:[%s207 + $0x110] sm:$0xff] %v1781
        %2294 = vst [vmem:[%s207 + $0x118] sm:$0xff] %v1782
        %2295 = vst [vmem:[%s207 + $0x120] sm:$0xff] %v1783
        %2296 = vst [vmem:[%s207 + $0x128] sm:$0xff] %v1784
        %2297 = vst [vmem:[%s207 + $0x130] sm:$0xff] %v1785
        %2298 = vst [vmem:[%s207 + $0x138] sm:$0xff] %v1786
        %2299 = vst [vmem:[%s207 + $0x140] sm:$0xff] %v1787
        %2300 = vst [vmem:[%s207 + $0x148] sm:$0xff] %v1788
        %2301 = vst [vmem:[%s207 + $0x150] sm:$0xff] %v1789
        %2302 = vst [vmem:[%s207 + $0x158] sm:$0xff] %v1790
        %2303 = vst [vmem:[%s207 + $0x160] sm:$0xff] %v1791
        %2304 = vst [vmem:[%s207 + $0x168] sm:$0xff] %v1792
        %2305 = vst [vmem:[%s207 + $0x170] sm:$0xff] %v1793
        %2306 = vst [vmem:[%s207 + $0x178] sm:$0xff] %v1794
        %2307 = vst [vmem:[%s207 + $0x180] sm:$0xff] %v1795
        %2308 = vst [vmem:[%s207 + $0x188] sm:$0xff] %v1796
        %2309 = vst [vmem:[%s207 + $0x190] sm:$0xff] %v1797
        %2310 = vst [vmem:[%s207 + $0x198] sm:$0xff] %v1798
        %2311 = vst [vmem:[%s207 + $0x1a0] sm:$0xff] %v1799
        %2312 = vst [vmem:[%s207 + $0x1a8] sm:$0xff] %v1800
        %2313 = vst [vmem:[%s207 + $0x1b0] sm:$0xff] %v1801
        %2314 = vst [vmem:[%s207 + $0x1b8] sm:$0xff] %v1802
        %2315 = vst [vmem:[%s207 + $0x1c0] sm:$0xff] %v1803
        %2316 = vst [vmem:[%s207 + $0x1c8] sm:$0xff] %v1804
        %2317 = vst [vmem:[%s207 + $0x1d0] sm:$0xff] %v1805
        %2318 = vst [vmem:[%s207 + $0x1d8] sm:$0xff] %v1806
        %2319 = vst [vmem:[%s207 + $0x1e0] sm:$0xff] %v1807
        %2320 = vst [vmem:[%s207 + $0x1e8] sm:$0xff] %v1808
        %2321 = vst [vmem:[%s207 + $0x1f0] sm:$0xff] %v1809
        %2322 = vst [vmem:[%s207 + $0x1f8] sm:$0xff] %v1810
        %2323 = vst [vmem:[%s207 + $0x200] sm:$0xff] %v1811
        %2324 = vst [vmem:[%s207 + $0x208] sm:$0xff] %v1812
        %2325 = vst [vmem:[%s207 + $0x210] sm:$0xff] %v1813
        %2326 = vst [vmem:[%s207 + $0x218] sm:$0xff] %v1814
        %2327 = vst [vmem:[%s207 + $0x220] sm:$0xff] %v1815
        %2328 = vst [vmem:[%s207 + $0x228] sm:$0xff] %v1816
        %2329 = vst [vmem:[%s207 + $0x230] sm:$0xff] %v1817
        %2330 = vst [vmem:[%s207 + $0x238] sm:$0xff] %v1818
        %2331 = vst [vmem:[%s207 + $0x240] sm:$0xff] %v1819
        %2332 = vst [vmem:[%s207 + $0x248] sm:$0xff] %v1820
        %2333 = vst [vmem:[%s207 + $0x250] sm:$0xff] %v1821
        %2334 = vst [vmem:[%s207 + $0x258] sm:$0xff] %v1822
        %2335 = vst [vmem:[%s207 + $0x260] sm:$0xff] %v1823
        %2336 = vst [vmem:[%s207 + $0x268] sm:$0xff] %v1824
        %2337 = vst [vmem:[%s207 + $0x270] sm:$0xff] %v1825
        %2338 = vst [vmem:[%s207 + $0x278] sm:$0xff] %v1826
        %2339 = vst [vmem:[%s207 + $0x280] sm:$0xff] %v1827
        %2340 = vst [vmem:[%s207 + $0x288] sm:$0xff] %v1828
        %2341 = vst [vmem:[%s207 + $0x290] sm:$0xff] %v1829
        %2342 = vst [vmem:[%s207 + $0x298] sm:$0xff] %v1830
        %2343 = vst [vmem:[%s207 + $0x2a0] sm:$0xff] %v1831
        %2344 = vst [vmem:[%s207 + $0x2a8] sm:$0xff] %v1832
        %2345 = vst [vmem:[%s207 + $0x2b0] sm:$0xff] %v1833
        %2346 = vst [vmem:[%s207 + $0x2b8] sm:$0xff] %v1834
        %2347 = vst [vmem:[%s207 + $0x2c0] sm:$0xff] %v1835
        %2348 = vst [vmem:[%s207 + $0x2c8] sm:$0xff] %v1836
        %2349 = vst [vmem:[%s207 + $0x2d0] sm:$0xff] %v1837
        %2350 = vst [vmem:[%s207 + $0x2d8] sm:$0xff] %v1838
        %2351 = vst [vmem:[%s207 + $0x2e0] sm:$0xff] %v1839
        %2352 = vst [vmem:[%s207 + $0x2e8] sm:$0xff] %v1840
        %2353 = vst [vmem:[%s207 + $0x2f0] sm:$0xff] %v1841
        %2354 = vst [vmem:[%s207 + $0x2f8] sm:$0xff] %v1842
        %2355 = vst [vmem:[%s207 + $0x300] sm:$0xff] %v1843
        %2356 = vst [vmem:[%s207 + $0x308] sm:$0xff] %v1844
        %2357 = vst [vmem:[%s207 + $0x310] sm:$0xff] %v1845
        %2358 = vst [vmem:[%s207 + $0x318] sm:$0xff] %v1846
        %2359 = vst [vmem:[%s207 + $0x320] sm:$0xff] %v1847
        %2360 = vst [vmem:[%s207 + $0x328] sm:$0xff] %v1848
        %2361 = vst [vmem:[%s207 + $0x330] sm:$0xff] %v1849
        %2362 = vst [vmem:[%s207 + $0x338] sm:$0xff] %v1850
        %2363 = vst [vmem:[%s207 + $0x340] sm:$0xff] %v1851
        %2364 = vst [vmem:[%s207 + $0x348] sm:$0xff] %v1852
        %2365 = vst [vmem:[%s207 + $0x350] sm:$0xff] %v1853
        %2366 = vst [vmem:[%s207 + $0x358] sm:$0xff] %v1854
        %2367 = vst [vmem:[%s207 + $0x360] sm:$0xff] %v1855
        %2368 = vst [vmem:[%s207 + $0x368] sm:$0xff] %v1856
        %2369 = vst [vmem:[%s207 + $0x370] sm:$0xff] %v1857
        %2370 = vst [vmem:[%s207 + $0x378] sm:$0xff] %v1858
        %2371 = vst [vmem:[%s207 + $0x380] sm:$0xff] %v1859
        %2372 = vst [vmem:[%s207 + $0x388] sm:$0xff] %v1860
        %2373 = vst [vmem:[%s207 + $0x390] sm:$0xff] %v1861
        %2374 = vst [vmem:[%s207 + $0x398] sm:$0xff] %v1862
        %2375 = vst [vmem:[%s207 + $0x3a0] sm:$0xff] %v1863
        %2376 = vst [vmem:[%s207 + $0x3a8] sm:$0xff] %v1864
        %2377 = vst [vmem:[%s207 + $0x3b0] sm:$0xff] %v1865
        %2378 = vst [vmem:[%s207 + $0x3b8] sm:$0xff] %v1866
        %2379 = vst [vmem:[%s207 + $0x3c0] sm:$0xff] %v1867
        %2380 = vst [vmem:[%s207 + $0x3c8] sm:$0xff] %v1868
        %2381 = vst [vmem:[%s207 + $0x3d0] sm:$0xff] %v1869
        %2382 = vst [vmem:[%s207 + $0x3d8] sm:$0xff] %v1870
        %2383 = vst [vmem:[%s207 + $0x3e0] sm:$0xff] %v1871
        %2384 = vst [vmem:[%s207 + $0x3e8] sm:$0xff] %v1872
        %2385 = vst [vmem:[%s207 + $0x3f0] sm:$0xff] %v1873
        %2386 = vst [vmem:[%s207 + $0x3f8] sm:$0xff] %v1874
        %2387 = vst [vmem:[%s207 + $0x400] sm:$0xff] %v1875
        %2388 = vst [vmem:[%s207 + $0x408] sm:$0xff] %v1876
        %2389 = vst [vmem:[%s207 + $0x410] sm:$0xff] %v1877
        %2390 = vst [vmem:[%s207 + $0x418] sm:$0xff] %v1878
        %2391 = vst [vmem:[%s207 + $0x420] sm:$0xff] %v1879
        %2392 = vst [vmem:[%s207 + $0x428] sm:$0xff] %v1880
        %2393 = vst [vmem:[%s207 + $0x430] sm:$0xff] %v1881
        %2394 = vst [vmem:[%s207 + $0x438] sm:$0xff] %v1882
        %2395 = vst [vmem:[%s207 + $0x440] sm:$0xff] %v1883
        %2396 = vst [vmem:[%s207 + $0x448] sm:$0xff] %v1884
        %2397 = vst [vmem:[%s207 + $0x450] sm:$0xff] %v1885
        %2398 = vst [vmem:[%s207 + $0x458] sm:$0xff] %v1886
        %2399 = vst [vmem:[%s207 + $0x460] sm:$0xff] %v1887
        %2400 = vst [vmem:[%s207 + $0x468] sm:$0xff] %v1888
        %2401 = vst [vmem:[%s207 + $0x470] sm:$0xff] %v1889
        %2402 = vst [vmem:[%s207 + $0x478] sm:$0xff] %v1890
        %2403 = vst [vmem:[%s207 + $0x480] sm:$0xff] %v1891
        %2404 = vst [vmem:[%s207 + $0x488] sm:$0xff] %v1892
        %2405 = vst [vmem:[%s207 + $0x490] sm:$0xff] %v1893
        %2406 = vst [vmem:[%s207 + $0x498] sm:$0xff] %v1894
        %2407 = vst [vmem:[%s207 + $0x4a0] sm:$0xff] %v1895
        %2408 = vst [vmem:[%s207 + $0x4a8] sm:$0xff] %v1896
        %2409 = vst [vmem:[%s207 + $0x4b0] sm:$0xff] %v1897
        %2410 = vst [vmem:[%s207 + $0x4b8] sm:$0xff] %v1898
        %2411 = vst [vmem:[%s207 + $0x4c0] sm:$0xff] %v1899
        %2412 = vst [vmem:[%s207 + $0x4c8] sm:$0xff] %v1900
        %2413 = vst [vmem:[%s207 + $0x4d0] sm:$0xff] %v1901
        %2414 = vst [vmem:[%s207 + $0x4d8] sm:$0xff] %v1902
        %2415 = vst [vmem:[%s207 + $0x4e0] sm:$0xff] %v1903
        %2416 = vst [vmem:[%s207 + $0x4e8] sm:$0xff] %v1904
        %2417 = vst [vmem:[%s207 + $0x4f0] sm:$0xff] %v1905
        %2418 = vst [vmem:[%s207 + $0x4f8] sm:$0xff] %v1906
        %2419 = vst [vmem:[%s207 + $0x500] sm:$0xff] %v1907
        %2420 = vst [vmem:[%s207 + $0x508] sm:$0xff] %v1908
        %2421 = vst [vmem:[%s207 + $0x510] sm:$0xff] %v1909
        %2422 = vst [vmem:[%s207 + $0x518] sm:$0xff] %v1910
        %2423 = vst [vmem:[%s207 + $0x520] sm:$0xff] %v1911
        %2424 = vst [vmem:[%s207 + $0x528] sm:$0xff] %v1912
        %2425 = vst [vmem:[%s207 + $0x530] sm:$0xff] %v1913
        %2426 = vst [vmem:[%s207 + $0x538] sm:$0xff] %v1914
        %2427 = vst [vmem:[%s207 + $0x540] sm:$0xff] %v1915
        %2428 = vst [vmem:[%s207 + $0x548] sm:$0xff] %v1916
        %2429 = vst [vmem:[%s207 + $0x550] sm:$0xff] %v1917
        %2430 = vst [vmem:[%s207 + $0x558] sm:$0xff] %v1918
        %2431 = vst [vmem:[%s207 + $0x560] sm:$0xff] %v1919
        %2432 = vst [vmem:[%s207 + $0x568] sm:$0xff] %v1920
        %2433 = vst [vmem:[%s207 + $0x570] sm:$0xff] %v1921
        %2434 = vst [vmem:[%s207 + $0x578] sm:$0xff] %v1922
        %2435 = vst [vmem:[%s207 + $0x580] sm:$0xff] %v1923
        %2436 = vst [vmem:[%s207 + $0x588] sm:$0xff] %v1924
        %2437 = vst [vmem:[%s207 + $0x590] sm:$0xff] %v1925
        %2438 = vst [vmem:[%s207 + $0x598] sm:$0xff] %v1926
        %2439 = vst [vmem:[%s207 + $0x5a0] sm:$0xff] %v1927
        %2440 = vst [vmem:[%s207 + $0x5a8] sm:$0xff] %v1928
        %2441 = vst [vmem:[%s207 + $0x5b0] sm:$0xff] %v1929
        %2442 = vst [vmem:[%s207 + $0x5b8] sm:$0xff] %v1930
        %2443 = vst [vmem:[%s207 + $0x5c0] sm:$0xff] %v1931
        %2444 = vst [vmem:[%s207 + $0x5c8] sm:$0xff] %v1932
        %2445 = vst [vmem:[%s207 + $0x5d0] sm:$0xff] %v1933
        %2446 = vst [vmem:[%s207 + $0x5d8] sm:$0xff] %v1934
        %2447 = vst [vmem:[%s207 + $0x5e0] sm:$0xff] %v1935
        %2448 = vst [vmem:[%s207 + $0x5e8] sm:$0xff] %v1936
        %2449 = vst [vmem:[%s207 + $0x5f0] sm:$0xff] %v1937
        %2450 = vst [vmem:[%s207 + $0x5f8] sm:$0xff] %v1938
        %2451 = vst [vmem:[%s207 + $0x600] sm:$0xff] %v1939
        %2452 = vst [vmem:[%s207 + $0x608] sm:$0xff] %v1940
        %2453 = vst [vmem:[%s207 + $0x610] sm:$0xff] %v1941
        %2454 = vst [vmem:[%s207 + $0x618] sm:$0xff] %v1942
        %2455 = vst [vmem:[%s207 + $0x620] sm:$0xff] %v1943
        %2456 = vst [vmem:[%s207 + $0x628] sm:$0xff] %v1944
        %2457 = vst [vmem:[%s207 + $0x630] sm:$0xff] %v1945
        %2458 = vst [vmem:[%s207 + $0x638] sm:$0xff] %v1946
        %2459 = vst [vmem:[%s207 + $0x640] sm:$0xff] %v1947
        %2460 = vst [vmem:[%s207 + $0x648] sm:$0xff] %v1948
        %2461 = vst [vmem:[%s207 + $0x650] sm:$0xff] %v1949
        %2462 = vst [vmem:[%s207 + $0x658] sm:$0xff] %v1950
        %2463 = vst [vmem:[%s207 + $0x660] sm:$0xff] %v1951
        %2464 = vst [vmem:[%s207 + $0x668] sm:$0xff] %v1952
        %2465 = vst [vmem:[%s207 + $0x670] sm:$0xff] %v1953
        %2466 = vst [vmem:[%s207 + $0x678] sm:$0xff] %v1954
        %2467 = vst [vmem:[%s207 + $0x680] sm:$0xff] %v1955
        %2468 = vst [vmem:[%s207 + $0x688] sm:$0xff] %v1956
        %2469 = vst [vmem:[%s207 + $0x690] sm:$0xff] %v1957
        %2470 = vst [vmem:[%s207 + $0x698] sm:$0xff] %v1958
        %2471 = vst [vmem:[%s207 + $0x6a0] sm:$0xff] %v1959
        %2472 = vst [vmem:[%s207 + $0x6a8] sm:$0xff] %v1960
        %2473 = vst [vmem:[%s207 + $0x6b0] sm:$0xff] %v1961
        %2474 = vst [vmem:[%s207 + $0x6b8] sm:$0xff] %v1962
        %2475 = vst [vmem:[%s207 + $0x6c0] sm:$0xff] %v1963
        %2476 = vst [vmem:[%s207 + $0x6c8] sm:$0xff] %v1964
        %2477 = vst [vmem:[%s207 + $0x6d0] sm:$0xff] %v1965
        %2478 = vst [vmem:[%s207 + $0x6d8] sm:$0xff] %v1966
        %2479 = vst [vmem:[%s207 + $0x6e0] sm:$0xff] %v1967
        %2480 = vst [vmem:[%s207 + $0x6e8] sm:$0xff] %v1968
        %2481 = vst [vmem:[%s207 + $0x6f0] sm:$0xff] %v1969
        %2482 = vst [vmem:[%s207 + $0x6f8] sm:$0xff] %v1970
        %2483 = vst [vmem:[%s207 + $0x700] sm:$0xff] %v1971
        %2484 = vst [vmem:[%s207 + $0x708] sm:$0xff] %v1972
        %2485 = vst [vmem:[%s207 + $0x710] sm:$0xff] %v1973
        %2486 = vst [vmem:[%s207 + $0x718] sm:$0xff] %v1974
        %2487 = vst [vmem:[%s207 + $0x720] sm:$0xff] %v1975
        %2488 = vst [vmem:[%s207 + $0x728] sm:$0xff] %v1976
        %2489 = vst [vmem:[%s207 + $0x730] sm:$0xff] %v1977
        %2490 = vst [vmem:[%s207 + $0x738] sm:$0xff] %v1978
        %2491 = vst [vmem:[%s207 + $0x740] sm:$0xff] %v1979
        %2492 = vst [vmem:[%s207 + $0x748] sm:$0xff] %v1980
        %2493 = vst [vmem:[%s207 + $0x750] sm:$0xff] %v1981
        %2494 = vst [vmem:[%s207 + $0x758] sm:$0xff] %v1982
        %2495 = vst [vmem:[%s207 + $0x760] sm:$0xff] %v1983
        %2496 = vst [vmem:[%s207 + $0x768] sm:$0xff] %v1984
        %2497 = vst [vmem:[%s207 + $0x770] sm:$0xff] %v1985
        %2498 = vst [vmem:[%s207 + $0x778] sm:$0xff] %v1986
        %2499 = vst [vmem:[%s207 + $0x780] sm:$0xff] %v1987
        %2500 = vst [vmem:[%s207 + $0x788] sm:$0xff] %v1988
        %2501 = vst [vmem:[%s207 + $0x790] sm:$0xff] %v1989
        %2502 = vst [vmem:[%s207 + $0x798] sm:$0xff] %v1990
        %2503 = vst [vmem:[%s207 + $0x7a0] sm:$0xff] %v1991
        %2504 = vst [vmem:[%s207 + $0x7a8] sm:$0xff] %v1992
        %2505 = vst [vmem:[%s207 + $0x7b0] sm:$0xff] %v1993
        %2506 = vst [vmem:[%s207 + $0x7b8] sm:$0xff] %v1994
        %2507 = vst [vmem:[%s207 + $0x7c0] sm:$0xff] %v1995
        %2508 = vst [vmem:[%s207 + $0x7c8] sm:$0xff] %v1996
        %2509 = vst [vmem:[%s207 + $0x7d0] sm:$0xff] %v1997
        %2510 = vst [vmem:[%s207 + $0x7d8] sm:$0xff] %v1998
        %2511 = vst [vmem:[%s207 + $0x7e0] sm:$0xff] %v1999
        %2512 = vst [vmem:[%s207 + $0x7e8] sm:$0xff] %v2000
        %2513 = vst [vmem:[%s207 + $0x7f0] sm:$0xff] %v2001
        %2514 = vst [vmem:[%s207 + $0x7f8] sm:$0xff] %v2002
        %2515 = vst [vmem:[%s207 + $0x800] sm:$0xff] %v2003
        %2516 = vst [vmem:[%s207 + $0x808] sm:$0xff] %v2004
        %2517 = vst [vmem:[%s207 + $0x810] sm:$0xff] %v2005
        %2518 = vst [vmem:[%s207 + $0x818] sm:$0xff] %v2006
        %2519 = vst [vmem:[%s207 + $0x820] sm:$0xff] %v2007
        %2520 = vst [vmem:[%s207 + $0x828] sm:$0xff] %v2008
        %2521 = vst [vmem:[%s207 + $0x830] sm:$0xff] %v2009
        %2522 = vst [vmem:[%s207 + $0x838] sm:$0xff] %v2010
        %2523 = vst [vmem:[%s207 + $0x840] sm:$0xff] %v2011
        %2524 = vst [vmem:[%s207 + $0x848] sm:$0xff] %v2012
        %2525 = vst [vmem:[%s207 + $0x850] sm:$0xff] %v2013
        %2526 = vst [vmem:[%s207 + $0x858] sm:$0xff] %v2014
        %2527 = vst [vmem:[%s207 + $0x860] sm:$0xff] %v2015
        %2528 = vst [vmem:[%s207 + $0x868] sm:$0xff] %v2016
        %2529 = vst [vmem:[%s207 + $0x870] sm:$0xff] %v2017
        %2530 = vst [vmem:[%s207 + $0x878] sm:$0xff] %v2018
        %2531 = vst [vmem:[%s207 + $0x880] sm:$0xff] %v2019
        %2532 = vst [vmem:[%s207 + $0x888] sm:$0xff] %v2020
        %2533 = vst [vmem:[%s207 + $0x890] sm:$0xff] %v2021
        %2534 = vst [vmem:[%s207 + $0x898] sm:$0xff] %v2022
        %2535 = vst [vmem:[%s207 + $0x8a0] sm:$0xff] %v2023
        %2536 = vst [vmem:[%s207 + $0x8a8] sm:$0xff] %v2024
        %2537 = vst [vmem:[%s207 + $0x8b0] sm:$0xff] %v2025
        %2538 = vst [vmem:[%s207 + $0x8b8] sm:$0xff] %v2026
        %2539 = vst [vmem:[%s207 + $0x8c0] sm:$0xff] %v2027
        %2540 = vst [vmem:[%s207 + $0x8c8] sm:$0xff] %v2028
        %2541 = vst [vmem:[%s207 + $0x8d0] sm:$0xff] %v2029
        %2542 = vst [vmem:[%s207 + $0x8d8] sm:$0xff] %v2030
        %2543 = vst [vmem:[%s207 + $0x8e0] sm:$0xff] %v2031
        %2544 = vst [vmem:[%s207 + $0x8e8] sm:$0xff] %v2032
        %2545 = vst [vmem:[%s207 + $0x8f0] sm:$0xff] %v2033
        %2546 = vst [vmem:[%s207 + $0x8f8] sm:$0xff] %v2034
        %2547 = vst [vmem:[%s207 + $0x900] sm:$0xff] %v2035
        %2548 = vst [vmem:[%s207 + $0x908] sm:$0xff] %v2036
        %2549 = vst [vmem:[%s207 + $0x910] sm:$0xff] %v2037
        %2550 = vst [vmem:[%s207 + $0x918] sm:$0xff] %v2038
        %2551 = vst [vmem:[%s207 + $0x920] sm:$0xff] %v2039
        %2552 = vst [vmem:[%s207 + $0x928] sm:$0xff] %v2040
        %2553 = vst [vmem:[%s207 + $0x930] sm:$0xff] %v2041
        %2554 = vst [vmem:[%s207 + $0x938] sm:$0xff] %v2042
        %2555 = vst [vmem:[%s207 + $0x940] sm:$0xff] %v2043
        %2556 = vst [vmem:[%s207 + $0x948] sm:$0xff] %v2044
        %2557 = vst [vmem:[%s207 + $0x950] sm:$0xff] %v2045
        %2558 = vst [vmem:[%s207 + $0x958] sm:$0xff] %v2046
        %2559 = vst [vmem:[%s207 + $0x960] sm:$0xff] %v2047
        %2560 = vst [vmem:[%s207 + $0x968] sm:$0xff] %v2048
        %2561 = vst [vmem:[%s207 + $0x970] sm:$0xff] %v2049
        %2562 = vst [vmem:[%s207 + $0x978] sm:$0xff] %v2050
        %2563 = vst [vmem:[%s207 + $0x980] sm:$0xff] %v2051
        %2564 = vst [vmem:[%s207 + $0x988] sm:$0xff] %v2052
        %2565 = vst [vmem:[%s207 + $0x990] sm:$0xff] %v2053
        %2566 = vst [vmem:[%s207 + $0x998] sm:$0xff] %v2054
        %2567 = vst [vmem:[%s207 + $0x9a0] sm:$0xff] %v2055
        %2568 = vst [vmem:[%s207 + $0x9a8] sm:$0xff] %v2056
        %2569 = vst [vmem:[%s207 + $0x9b0] sm:$0xff] %v2057
        %2570 = vst [vmem:[%s207 + $0x9b8] sm:$0xff] %v2058
        %2571 = vst [vmem:[%s207 + $0x9c0] sm:$0xff] %v2059
        %2572 = vst [vmem:[%s207 + $0x9c8] sm:$0xff] %v2060
        %2573 = vst [vmem:[%s207 + $0x9d0] sm:$0xff] %v2061
        %2574 = vst [vmem:[%s207 + $0x9d8] sm:$0xff] %v2062
        %2575 = vst [vmem:[%s207 + $0x9e0] sm:$0xff] %v2063
        %2576 = vst [vmem:[%s207 + $0x9e8] sm:$0xff] %v2064
        %2577 = vst [vmem:[%s207 + $0x9f0] sm:$0xff] %v2065
        %2578 = vst [vmem:[%s207 + $0x9f8] sm:$0xff] %v2066
        %2579 = vst [vmem:[%s207 + $0xa00] sm:$0xff] %v2067
        %2580 = vst [vmem:[%s207 + $0xa08] sm:$0xff] %v2068
        %2581 = vst [vmem:[%s207 + $0xa10] sm:$0xff] %v2069
        %2582 = vst [vmem:[%s207 + $0xa18] sm:$0xff] %v2070
        %2583 = vst [vmem:[%s207 + $0xa20] sm:$0xff] %v2071
        %2584 = vst [vmem:[%s207 + $0xa28] sm:$0xff] %v2072
        %2585 = vst [vmem:[%s207 + $0xa30] sm:$0xff] %v2073
        %2586 = vst [vmem:[%s207 + $0xa38] sm:$0xff] %v2074
        %2587 = vst [vmem:[%s207 + $0xa40] sm:$0xff] %v2075
        %2588 = vst [vmem:[%s207 + $0xa48] sm:$0xff] %v2076
        %2589 = vst [vmem:[%s207 + $0xa50] sm:$0xff] %v2077
        %2590 = vst [vmem:[%s207 + $0xa58] sm:$0xff] %v2078
        %2591 = vst [vmem:[%s207 + $0xa60] sm:$0xff] %v2079
        %2592 = vst [vmem:[%s207 + $0xa68] sm:$0xff] %v2080
        %2593 = vst [vmem:[%s207 + $0xa70] sm:$0xff] %v2081
        %2594 = vst [vmem:[%s207 + $0xa78] sm:$0xff] %v2082
        %2595 = vst [vmem:[%s207 + $0xa80] sm:$0xff] %v2083
        %2596 = vst [vmem:[%s207 + $0xa88] sm:$0xff] %v2084
        %2597 = vst [vmem:[%s207 + $0xa90] sm:$0xff] %v2085
        %2598 = vst [vmem:[%s207 + $0xa98] sm:$0xff] %v2086
        %2599 = vst [vmem:[%s207 + $0xaa0] sm:$0xff] %v2087
        %2600 = vst [vmem:[%s207 + $0xaa8] sm:$0xff] %v2088
        %2601 = vst [vmem:[%s207 + $0xab0] sm:$0xff] %v2089
        %2602 = vst [vmem:[%s207 + $0xab8] sm:$0xff] %v2090
        %2603 = vst [vmem:[%s207 + $0xac0] sm:$0xff] %v2091
        %2604 = vst [vmem:[%s207 + $0xac8] sm:$0xff] %v2092
        %2605 = vst [vmem:[%s207 + $0xad0] sm:$0xff] %v2093
        %2606 = vst [vmem:[%s207 + $0xad8] sm:$0xff] %v2094
        %2607 = vst [vmem:[%s207 + $0xae0] sm:$0xff] %v2095
        %2608 = vst [vmem:[%s207 + $0xae8] sm:$0xff] %v2096
        %2609 = vst [vmem:[%s207 + $0xaf0] sm:$0xff] %v2097
        %2610 = vst [vmem:[%s207 + $0xaf8] sm:$0xff] %v2098
        %2611 = vst [vmem:[%s207 + $0xb00] sm:$0xff] %v2099
        %2612 = vst [vmem:[%s207 + $0xb08] sm:$0xff] %v2100
        %2613 = vst [vmem:[%s207 + $0xb10] sm:$0xff] %v2101
        %2614 = vst [vmem:[%s207 + $0xb18] sm:$0xff] %v2102
        %2615 = vst [vmem:[%s207 + $0xb20] sm:$0xff] %v2103
        %2616 = vst [vmem:[%s207 + $0xb28] sm:$0xff] %v2104
        %2617 = vst [vmem:[%s207 + $0xb30] sm:$0xff] %v2105
        %2618 = vst [vmem:[%s207 + $0xb38] sm:$0xff] %v2106
        %2619 = vst [vmem:[%s207 + $0xb40] sm:$0xff] %v2107
        %2620 = vst [vmem:[%s207 + $0xb48] sm:$0xff] %v2108
        %2621 = vst [vmem:[%s207 + $0xb50] sm:$0xff] %v2109
        %2622 = vst [vmem:[%s207 + $0xb58] sm:$0xff] %v2110
        %2623 = vst [vmem:[%s207 + $0xb60] sm:$0xff] %v2111
        %2624 = vst [vmem:[%s207 + $0xb68] sm:$0xff] %v2112
        %2625 = vst [vmem:[%s207 + $0xb70] sm:$0xff] %v2113
        %2626 = vst [vmem:[%s207 + $0xb78] sm:$0xff] %v2114
        %2627 = vst [vmem:[%s207 + $0xb80] sm:$0xff] %v2115
        %2628 = vst [vmem:[%s207 + $0xb88] sm:$0xff] %v2116
        %2629 = vst [vmem:[%s207 + $0xb90] sm:$0xff] %v2117
        %2630 = vst [vmem:[%s207 + $0xb98] sm:$0xff] %v2118
        %2631 = vst [vmem:[%s207 + $0xba0] sm:$0xff] %v2119
        %2632 = vst [vmem:[%s207 + $0xba8] sm:$0xff] %v2120
        %2633 = vst [vmem:[%s207 + $0xbb0] sm:$0xff] %v2121
        %2634 = vst [vmem:[%s207 + $0xbb8] sm:$0xff] %v2122
        %2635 = vst [vmem:[%s207 + $0xbc0] sm:$0xff] %v2123
        %2636 = vst [vmem:[%s207 + $0xbc8] sm:$0xff] %v2124
        %2637 = vst [vmem:[%s207 + $0xbd0] sm:$0xff] %v2125
        %2638 = vst [vmem:[%s207 + $0xbd8] sm:$0xff] %v2126
        %2639 = vst [vmem:[%s207 + $0xbe0] sm:$0xff] %v2127
        %2640 = vst [vmem:[%s207 + $0xbe8] sm:$0xff] %v2128
        %2641 = vst [vmem:[%s207 + $0xbf0] sm:$0xff] %v2129
        %2642 = vst [vmem:[%s207 + $0xbf8] sm:$0xff] %v2130
        %2643 = vst [vmem:[%s207 + $0xc00] sm:$0xff] %v2131
        %2644 = vst [vmem:[%s207 + $0xc08] sm:$0xff] %v2132
        %2645 = vst [vmem:[%s207 + $0xc10] sm:$0xff] %v2133
        %2646 = vst [vmem:[%s207 + $0xc18] sm:$0xff] %v2134
        %2647 = vst [vmem:[%s207 + $0xc20] sm:$0xff] %v2135
        %2648 = vst [vmem:[%s207 + $0xc28] sm:$0xff] %v2136
        %2649 = vst [vmem:[%s207 + $0xc30] sm:$0xff] %v2137
        %2650 = vst [vmem:[%s207 + $0xc38] sm:$0xff] %v2138
        %2651 = vst [vmem:[%s207 + $0xc40] sm:$0xff] %v2139
        %2652 = vst [vmem:[%s207 + $0xc48] sm:$0xff] %v2140
        %2653 = vst [vmem:[%s207 + $0xc50] sm:$0xff] %v2141
        %2654 = vst [vmem:[%s207 + $0xc58] sm:$0xff] %v2142
        %2655 = vst [vmem:[%s207 + $0xc60] sm:$0xff] %v2143
        %2656 = vst [vmem:[%s207 + $0xc68] sm:$0xff] %v2144
        %2657 = vst [vmem:[%s207 + $0xc70] sm:$0xff] %v2145
        %2658 = vst [vmem:[%s207 + $0xc78] sm:$0xff] %v2146
        %2659 = vst [vmem:[%s207 + $0xc80] sm:$0xff] %v2147
        %2660 = vst [vmem:[%s207 + $0xc88] sm:$0xff] %v2148
        %2661 = vst [vmem:[%s207 + $0xc90] sm:$0xff] %v2149
        %2662 = vst [vmem:[%s207 + $0xc98] sm:$0xff] %v2150
        %2663 = vst [vmem:[%s207 + $0xca0] sm:$0xff] %v2151
        %2664 = vst [vmem:[%s207 + $0xca8] sm:$0xff] %v2152
        %2665 = vst [vmem:[%s207 + $0xcb0] sm:$0xff] %v2153
        %2666 = vst [vmem:[%s207 + $0xcb8] sm:$0xff] %v2154
        %2667 = vst [vmem:[%s207 + $0xcc0] sm:$0xff] %v2155
        %2668 = vst [vmem:[%s207 + $0xcc8] sm:$0xff] %v2156
        %2669 = vst [vmem:[%s207 + $0xcd0] sm:$0xff] %v2157
        %2670 = vst [vmem:[%s207 + $0xcd8] sm:$0xff] %v2158
        %2671 = vst [vmem:[%s207 + $0xce0] sm:$0xff] %v2159
        %2672 = vst [vmem:[%s207 + $0xce8] sm:$0xff] %v2160
        %2673 = vst [vmem:[%s207 + $0xcf0] sm:$0xff] %v2161
        %2674 = vst [vmem:[%s207 + $0xcf8] sm:$0xff] %v2162
        %2675 = vst [vmem:[%s207 + $0xd00] sm:$0xff] %v2163
        %2676 = vst [vmem:[%s207 + $0xd08] sm:$0xff] %v2164
        %2677 = vst [vmem:[%s207 + $0xd10] sm:$0xff] %v2165
        %2678 = vst [vmem:[%s207 + $0xd18] sm:$0xff] %v2166
        %2679 = vst [vmem:[%s207 + $0xd20] sm:$0xff] %v2167
        %2680 = vst [vmem:[%s207 + $0xd28] sm:$0xff] %v2168
        %2681 = vst [vmem:[%s207 + $0xd30] sm:$0xff] %v2169
        %2682 = vst [vmem:[%s207 + $0xd38] sm:$0xff] %v2170
        %2683 = vst [vmem:[%s207 + $0xd40] sm:$0xff] %v2171
        %2684 = vst [vmem:[%s207 + $0xd48] sm:$0xff] %v2172
        %2685 = vst [vmem:[%s207 + $0xd50] sm:$0xff] %v2173
        %2686 = vst [vmem:[%s207 + $0xd58] sm:$0xff] %v2174
        %2687 = vst [vmem:[%s207 + $0xd60] sm:$0xff] %v2175
        %2688 = vst [vmem:[%s207 + $0xd68] sm:$0xff] %v2176
        %2689 = vst [vmem:[%s207 + $0xd70] sm:$0xff] %v2177
        %2690 = vst [vmem:[%s207 + $0xd78] sm:$0xff] %v2178
        %2691 = vst [vmem:[%s207 + $0xd80] sm:$0xff] %v2179
        %2692 = vst [vmem:[%s207 + $0xd88] sm:$0xff] %v2180
        %2693 = vst [vmem:[%s207 + $0xd90] sm:$0xff] %v2181
        %2694 = vst [vmem:[%s207 + $0xd98] sm:$0xff] %v2182
        %2695 = vst [vmem:[%s207 + $0xda0] sm:$0xff] %v2183
        %2696 = vst [vmem:[%s207 + $0xda8] sm:$0xff] %v2184
        %2697 = vst [vmem:[%s207 + $0xdb0] sm:$0xff] %v2185
        %2698 = vst [vmem:[%s207 + $0xdb8] sm:$0xff] %v2186
        %2699 = vst [vmem:[%s207 + $0xdc0] sm:$0xff] %v2187
        %2700 = vst [vmem:[%s207 + $0xdc8] sm:$0xff] %v2188
        %2701 = vst [vmem:[%s207 + $0xdd0] sm:$0xff] %v2189
        %2702 = vst [vmem:[%s207 + $0xdd8] sm:$0xff] %v2190
        %2703 = vst [vmem:[%s207 + $0xde0] sm:$0xff] %v2191
        %2704 = vst [vmem:[%s207 + $0xde8] sm:$0xff] %v2192
        %2705 = vst [vmem:[%s207 + $0xdf0] sm:$0xff] %v2193
        %2706 = vst [vmem:[%s207 + $0xdf8] sm:$0xff] %v2194
        %2707 = vst [vmem:[%s207 + $0xe00] sm:$0xff] %v2195
        %2708 = vst [vmem:[%s207 + $0xe08] sm:$0xff] %v2196
        %2709 = vst [vmem:[%s207 + $0xe10] sm:$0xff] %v2197
        %2710 = vst [vmem:[%s207 + $0xe18] sm:$0xff] %v2198
        %2711 = vst [vmem:[%s207 + $0xe20] sm:$0xff] %v2199
        %2712 = vst [vmem:[%s207 + $0xe28] sm:$0xff] %v2200
        %2713 = vst [vmem:[%s207 + $0xe30] sm:$0xff] %v2201
        %2714 = vst [vmem:[%s207 + $0xe38] sm:$0xff] %v2202
        %2715 = vst [vmem:[%s207 + $0xe40] sm:$0xff] %v2203
        %2716 = vst [vmem:[%s207 + $0xe48] sm:$0xff] %v2204
        %2717 = vst [vmem:[%s207 + $0xe50] sm:$0xff] %v2205
        %2718 = vst [vmem:[%s207 + $0xe58] sm:$0xff] %v2206
        %2719 = vst [vmem:[%s207 + $0xe60] sm:$0xff] %v2207
        %2720 = vst [vmem:[%s207 + $0xe68] sm:$0xff] %v2208
        %2721 = vst [vmem:[%s207 + $0xe70] sm:$0xff] %v2209
        %2722 = vst [vmem:[%s207 + $0xe78] sm:$0xff] %v2210
        %2723 = vst [vmem:[%s207 + $0xe80] sm:$0xff] %v2211
        %2724 = vst [vmem:[%s207 + $0xe88] sm:$0xff] %v2212
        %2725 = vst [vmem:[%s207 + $0xe90] sm:$0xff] %v2213
        %2726 = vst [vmem:[%s207 + $0xe98] sm:$0xff] %v2214
        %2727 = vst [vmem:[%s207 + $0xea0] sm:$0xff] %v2215
        %2728 = vst [vmem:[%s207 + $0xea8] sm:$0xff] %v2216
        %2729 = vst [vmem:[%s207 + $0xeb0] sm:$0xff] %v2217
        %2730 = vst [vmem:[%s207 + $0xeb8] sm:$0xff] %v2218
        %2731 = vst [vmem:[%s207 + $0xec0] sm:$0xff] %v2219
        %2732 = vst [vmem:[%s207 + $0xec8] sm:$0xff] %v2220
        %2733 = vst [vmem:[%s207 + $0xed0] sm:$0xff] %v2221
        %2734 = vst [vmem:[%s207 + $0xed8] sm:$0xff] %v2222
        %2735 = vst [vmem:[%s207 + $0xee0] sm:$0xff] %v2223
        %2736 = vst [vmem:[%s207 + $0xee8] sm:$0xff] %v2224
        %2737 = vst [vmem:[%s207 + $0xef0] sm:$0xff] %v2225
        %2738 = vst [vmem:[%s207 + $0xef8] sm:$0xff] %v2226
        %2739 = vst [vmem:[%s207 + $0xf00] sm:$0xff] %v2227
        %2740 = vst [vmem:[%s207 + $0xf08] sm:$0xff] %v2228
        %2741 = vst [vmem:[%s207 + $0xf10] sm:$0xff] %v2229
        %2742 = vst [vmem:[%s207 + $0xf18] sm:$0xff] %v2230
        %2743 = vst [vmem:[%s207 + $0xf20] sm:$0xff] %v2231
        %2744 = vst [vmem:[%s207 + $0xf28] sm:$0xff] %v2232
        %2745 = vst [vmem:[%s207 + $0xf30] sm:$0xff] %v2233
        %2746 = vst [vmem:[%s207 + $0xf38] sm:$0xff] %v2234
        %2747 = vst [vmem:[%s207 + $0xf40] sm:$0xff] %v2235
        %2748 = vst [vmem:[%s207 + $0xf48] sm:$0xff] %v2236
        %2749 = vst [vmem:[%s207 + $0xf50] sm:$0xff] %v2237
        %2750 = vst [vmem:[%s207 + $0xf58] sm:$0xff] %v2238
        %2751 = vst [vmem:[%s207 + $0xf60] sm:$0xff] %v2239
        %2752 = vst [vmem:[%s207 + $0xf68] sm:$0xff] %v2240
        %2753 = vst [vmem:[%s207 + $0xf70] sm:$0xff] %v2241
        %2754 = vst [vmem:[%s207 + $0xf78] sm:$0xff] %v2242
        %2755 = vst [vmem:[%s207 + $0xf80] sm:$0xff] %v2243
        %2756 = vst [vmem:[%s207 + $0xf88] sm:$0xff] %v2244
        %2757 = vst [vmem:[%s207 + $0xf90] sm:$0xff] %v2245
        %2758 = vst [vmem:[%s207 + $0xf98] sm:$0xff] %v2246
        %2759 = vst [vmem:[%s207 + $0xfa0] sm:$0xff] %v2247
        %2760 = vst [vmem:[%s207 + $0xfa8] sm:$0xff] %v2248
        %2761 = vst [vmem:[%s207 + $0xfb0] sm:$0xff] %v2249
        %2762 = vst [vmem:[%s207 + $0xfb8] sm:$0xff] %v2250
        %2763 = vst [vmem:[%s207 + $0xfc0] sm:$0xff] %v2251
        %2764 = vst [vmem:[%s207 + $0xfc8] sm:$0xff] %v2252
        %2765 = vst [vmem:[%s207 + $0xfd0] sm:$0xff] %v2253
        %2766 = vst [vmem:[%s207 + $0xfd8] sm:$0xff] %v2254
        %2767 = vst [vmem:[%s207 + $0xfe0] sm:$0xff] %v2255
        %2768 = vst [vmem:[%s207 + $0xfe8] sm:$0xff] %v2256
        %2769 = vst [vmem:[%s207 + $0xff0] sm:$0xff] %v2257
        %2770 = vst [vmem:[%s207 + $0xff8] sm:$0xff] %v2258
        %s2771 = sand.u32 %s82, 1
        %s2772 = scalar_lea.sflag [#allocation4], %s2771
        %s2773 = sand.u32 %s82, 1
        %s2774 = smul.addr %s2773, 4096
        %s2775 = scalar_lea.vmem [#allocation7], %s2774
        // Predicated region
        $region37: #{tpu_custom_call.1} parent=27 // pred_check
          %p2776 = pneg %p92
        $region38: #{tpu_custom_call.1} parent=27 // pred_check_branch
          %2778 = sbr.rel (%p2776) target = $region40
        $region39: #{tpu_custom_call.1} parent=27 // pred_region
          %s2779 = smul.u32 128, %s22
          %2781 = vsyncadd %s2772, 0
          %s2782 = smul.addr %s2779, 4
          %s2783 = smul.addr %s2782, 8
          %s2784 = scalar_lea.hbm %s2, %s2783
          %s2785 = sshll.u32 %s2775, 4
          %s2786 = int_to_ptr.vmem [resolvable:$true] %s2785
          %s2787 = sshll.u32 %s2784, 4
          %s2788 = int_to_ptr.hbm [resolvable:$true] %s2787
          %2793 = dma.vmem_to_hbm [thread:$0]  %s2786, 65536, %s2788, %s2772, 512, 512, 32
        $region40: #{tpu_custom_call.1} parent=27 // pred_fallthru
          _
      $region28: #{tpu_custom_call.1} parent=5 // pred_fallthru
        _
      %p2794 = scmp.le.s32.totalorder 2, %s17
      // Predicated region
      $region41: #{tpu_custom_call.1} parent=5 // pred_check
        %p2795 = pneg %p2794
      $region42: #{tpu_custom_call.1} parent=5 // pred_check_branch
        %2797 = sbr.rel (%p2795) target = $region44
      $region43: #{tpu_custom_call.1} parent=5 // pred_region
        %s2798 = ssub.s32 %s17, 2
        // Predicated region
        $region45: #{tpu_custom_call.1} parent=43 // pred_check
          %p2799 = pneg %p98
        $region46: #{tpu_custom_call.1} parent=43 // pred_check_branch
          %2801 = sbr.rel (%p2799) target = $region48
        $region47: #{tpu_custom_call.1} parent=43 // pred_region
          %s2802 = sand.u32 %s83, 1
          %s2803 = scalar_lea.sflag [#allocation4], %s2802
          %s2804 = sand.u32 %s83, 1
          %s2805 = smul.addr %s2804, 4096
          %s2806 = scalar_lea.vmem [#allocation7], %s2805
          %2808 = dma.done %s2803, 65536
        $region48: #{tpu_custom_call.1} parent=43 // pred_fallthru
          _
      $region44: #{tpu_custom_call.1} parent=5 // pred_fallthru
        _
    $region6: #{tpu_custom_call.1} parent=1 // loop_footer
      %s21 = sadd.s32 1, %s17
    $region7: #{tpu_custom_call.1} parent=1 // loop_footer_branch
      %16 = sbr.rel target = $region3
    $region8: #{tpu_custom_call.1} parent=1 // loop_exit
      _
    %2809 = vsyncpa [#allocation3], 1
    %s2810 = scalar_lea.sflag [#allocation3], 1
    %2811 = vsyncpa %s2810, 1
    %2812 = vsyncpa [#allocation6], 1
    %s2813 = scalar_lea.sflag [#allocation6], 1
    %2814 = vsyncpa %s2813, 1
    %2815 = vsyncpa [#allocation4], 1
    %s2816 = scalar_lea.sflag [#allocation4], 1
    %2817 = vsyncpa %s2816, 1

</llo_original>
